<compile_context>
chip_gen: v5e
topology: v5e:2x2
jax: 0.10.0
libtpu: 0.0.40
codegen_flags: <defaults>
</compile_context>

<pallas_src>
import functools

import jax
import jax.numpy as jnp
from jax.experimental import pallas as pl
from jax.experimental.pallas import tpu as pltpu

LN_EPS = 1e-5          # PyTorch nn.LayerNorm default
LANE = 128
NEG_BIG = -1e30


def _round_up(v, m):
    return ((v + m - 1) // m) * m


# ----------------------------------- fused kernel -----------------------------------

def fused_kernel(c_true, scale, depth,
                 x_ref, bdm_ref, rep_ref, seg_ref, bm_ref,
                 gvec_ref, m1w_ref, m2w_ref,
                 qkvw_ref, pw_ref, f1w_ref, f2w_ref, vec_ref,
                 o_ref, act_ref):
    """One grid step = one encoder block d; batch is folded into the M rows."""
    d = pl.program_id(0)
    M, Cp = act_ref.shape

    lane = jax.lax.broadcasted_iota(jnp.int32, (1, Cp), 1)
    in_c = lane < c_true                       # valid-channel mask (padded lanes False)
    inv_c = 1.0 / c_true

    def ln(x, w, b):
        # LayerNorm over the true C channels; padded lanes come out 0 (gamma/beta = 0).
        s = jnp.sum(jnp.where(in_c, x, 0.0), axis=-1, keepdims=True)
        mu = s * inv_c
        xc = jnp.where(in_c, x - mu, 0.0)
        var = jnp.sum(xc * xc, axis=-1, keepdims=True) * inv_c
        return xc * jax.lax.rsqrt(var + LN_EPS) * w + b

    def gelu(x):
        # exact (erf) GELU, matching torch.nn.GELU default
        return 0.5 * x * (1.0 + jax.lax.erf(x * 0.7071067811865476))

    gvec = gvec_ref[...]                       # packed global vectors (8, Cp)
    nw, nb = gvec[0:1, :], gvec[1:2, :]
    m1b, m2b = gvec[2:3, :], gvec[3:4, :]
    fw, fb = gvec[4:5, :], gvec[5:6, :]

    # ---------- depth step 0: prefix head  mlp_s(norm(x)) ----------
    @pl.when(d == 0)
    def _():
        h = ln(x_ref[...].astype(jnp.float32), nw, nb)
        h = jnp.dot(h, m1w_ref[...], preferred_element_type=jnp.float32) + m1b
        h = gelu(h)
        h = jnp.dot(h, m2w_ref[...], preferred_element_type=jnp.float32) + m2b
        act_ref[...] = h

    vec = vec_ref[...]                         # packed per-block vectors (8, Hp)
    ln1w, ln1b = vec[0:1, :Cp], vec[1:2, :Cp]
    pb = vec[2:3, :Cp]
    ln2w, ln2b = vec[3:4, :Cp], vec[4:5, :Cp]
    f2b = vec[5:6, :Cp]
    f1b = vec[6:7, :]                          # (1, Hp)

    x = act_ref[...]

    # ---------- attention branch (pre-LN) ----------
    h = ln(x, ln1w, ln1b)
    qkv = jnp.dot(h, qkvw_ref[...], preferred_element_type=jnp.float32)   # (M, 3Cp)
    q = qkv[:, 0:Cp]
    k = qkv[:, Cp:2 * Cp]
    v = qkv[:, 2 * Cp:3 * Cp]

    # (batch, head) block-diagonal layout: row r = b*hn + head*N + token.
    # k_big / v_big built on the MXU from the host-precomputed replication matrix,
    # then masked so each row only keeps its own head's channels.
    bdm = bdm_ref[...]
    k_big = jnp.dot(rep_ref[...], k, preferred_element_type=jnp.float32) * bdm
    v_big = jnp.dot(rep_ref[...], v, preferred_element_type=jnp.float32) * bdm

    scores = jax.lax.dot_general(q, k_big, (((1,), (1,)), ((), ())),
                                 preferred_element_type=jnp.float32) * scale  # (M, B*hn)
    # mask cross-batch columns before the row max / exp
    scores = jnp.where(bm_ref[...] > 0.0, scores, NEG_BIG)
    # TODO(synk): per-row (all-heads) max shift; per-head segmented max would be
    # more robust if one head's logits sit ~85+ below another head's.
    rmax = jnp.max(scores, axis=-1, keepdims=True)
    e = jnp.exp(scores - rmax)                 # masked columns exp -> exactly 0
    # segmented softmax denominator via one MXU matmul against the segment matrix
    denom = jnp.dot(e, seg_ref[...], preferred_element_type=jnp.float32)
    probs = e / jnp.where(denom > 0.0, denom, 1.0)     # guard: 0/0 -> 0, no NaN
    ctx = jnp.dot(probs, v_big, preferred_element_type=jnp.float32)        # (M, Cp)
    x = x + jnp.dot(ctx, pw_ref[...], preferred_element_type=jnp.float32) + pb

    # ---------- MLP branch (pre-LN) ----------
    h2 = ln(x, ln2w, ln2b)
    h2 = jnp.dot(h2, f1w_ref[...], preferred_element_type=jnp.float32) + f1b
    h2 = gelu(h2)
    h2 = jnp.dot(h2, f2w_ref[...], preferred_element_type=jnp.float32) + f2b
    x = x + h2
    act_ref[...] = x

    # ---------- last depth step: final encoder LayerNorm -> output ----------
    @pl.when(d == depth - 1)
    def _():
        o_ref[...] = ln(x, fw, fb).astype(o_ref.dtype)


# --------------------------------- host-side glue ---------------------------------

def token_transformer_forward(x, params, *, num_heads):
    B, N, C = x.shape
    H = params["blocks"][0]["fc1_w"].shape[1]
    depth = len(params["blocks"])
    hd = C // num_heads
    Cp = _round_up(max(C, LANE), LANE)
    Hp = _round_up(max(H, LANE), LANE)
    M = B * N
    hn = num_heads * N
    BHN = B * hn
    scale = hd ** (-0.5)
    f32 = jnp.float32

    # flattened + channel-padded input (batch folded into rows)
    xf = jnp.pad(x.reshape(M, C), ((0, 0), (0, Cp - C))).astype(f32)

    # ---- structural constants (precomputed once, VMEM-resident) ----
    r = jnp.arange(BHN)
    b_of_r = r // hn
    h_of_r = (r % hn) // N
    m_of_r = r % N
    cols = jnp.arange(Cp)
    bd_mask = (((cols[None, :] // hd) == h_of_r[:, None]) &
               (cols[None, :] < C)).astype(f32)                     # (BHN, Cp)
    rep = jax.nn.one_hot(b_of_r * N + m_of_r, M, dtype=f32)         # (BHN, M)
    seg = ((r[:, None] // N) == (r[None, :] // N)).astype(f32)      # (BHN, BHN)
    rq = jnp.arange(M)
    bm = ((rq[:, None] // N) == b_of_r[None, :]).astype(f32)        # (M, BHN)

    def padw(a, shp):
        return jnp.pad(a, [(0, t - s) for s, t in zip(a.shape, shp)]).astype(f32)

    # ---- global (non per-block) weights ----
    gvec = jnp.zeros((8, Cp), f32)
    gvec = gvec.at[0, :C].set(params["norm_w"].reshape(-1))
    gvec = gvec.at[1, :C].set(params["norm_b"].reshape(-1))
    gvec = gvec.at[2, :C].set(params["mlps_b1"].reshape(-1))
    gvec = gvec.at[3, :C].set(params["mlps_b2"].reshape(-1))
    gvec = gvec.at[4, :C].set(params["final_w"].reshape(-1))
    gvec = gvec.at[5, :C].set(params["final_b"].reshape(-1))
    m1w = padw(params["mlps_w1"], (Cp, Cp))
    m2w = padw(params["mlps_w2"], (Cp, Cp))

    # ---- per-block weights, stacked over depth ----
    def pack_block(blk):
        w = blk["qkv_w"]
        qkv = jnp.zeros((Cp, 3 * Cp), f32)
        qkv = qkv.at[:C, 0:C].set(w[:, 0 * C:1 * C])
        qkv = qkv.at[:C, Cp:Cp + C].set(w[:, 1 * C:2 * C])
        qkv = qkv.at[:C, 2 * Cp:2 * Cp + C].set(w[:, 2 * C:3 * C])
        pw = padw(blk["proj_w"], (Cp, Cp))
        f1w = padw(blk["fc1_w"], (Cp, Hp))
        f2w = padw(blk["fc2_w"], (Hp, Cp))
        vec = jnp.zeros((8, Hp), f32)
        vec = vec.at[0, :C].set(blk["ln1_w"].reshape(-1))
        vec = vec.at[1, :C].set(blk["ln1_b"].reshape(-1))
        vec = vec.at[2, :C].set(blk["proj_b"].reshape(-1))
        vec = vec.at[3, :C].set(blk["ln2_w"].reshape(-1))
        vec = vec.at[4, :C].set(blk["ln2_b"].reshape(-1))
        vec = vec.at[5, :C].set(blk["fc2_b"].reshape(-1))
        vec = vec.at[6, :H].set(blk["fc1_b"].reshape(-1))
        return qkv, pw, f1w, f2w, vec

    packed = [pack_block(b) for b in params["blocks"]]
    qkvw = jnp.stack([p[0] for p in packed])
    pw = jnp.stack([p[1] for p in packed])
    f1w = jnp.stack([p[2] for p in packed])
    f2w = jnp.stack([p[3] for p in packed])
    vec = jnp.stack([p[4] for p in packed])

    def const(shape):        # constant-resident input (fetched once)
        return pl.BlockSpec(shape, lambda d: tuple(0 for _ in shape))

    def blk(shape):          # per-block weight stacked over depth, streamed along d
        return pl.BlockSpec((None,) + shape, lambda d: (d,) + tuple(0 for _ in shape))

    in_specs = [
        const((M, Cp)),                       # x (flattened, padded)
        const((BHN, Cp)),                     # head block-diagonal channel mask
        const((BHN, M)),                      # token replication matrix
        const((BHN, BHN)),                    # softmax segment-sum matrix
        const((M, BHN)),                      # batch mask
        const((8, Cp)),                       # packed global vectors
        const((Cp, Cp)), const((Cp, Cp)),     # mlp_s fc1 / fc2 weights
        blk((Cp, 3 * Cp)),                    # fused qkv weight
        blk((Cp, Cp)),                        # proj weight
        blk((Cp, Hp)),                        # fc1 weight
        blk((Hp, Cp)),                        # fc2 weight
        blk((8, Hp)),                         # packed per-block vectors
    ]

    kern = functools.partial(fused_kernel, C, scale, depth)

    out = pl.pallas_call(
        kern,
        out_shape=jax.ShapeDtypeStruct((M, Cp), x.dtype),
        grid=(depth,),
        in_specs=in_specs,
        out_specs=pl.BlockSpec((M, Cp), lambda d: (0, 0)),
        scratch_shapes=[pltpu.VMEM((M, Cp), jnp.float32)],
        compiler_params=pltpu.CompilerParams(
            dimension_semantics=("arbitrary",)),
    )(xf, bd_mask, rep, seg, bm, gvec, m1w, m2w, qkvw, pw, f1w, f2w, vec)

    return out.reshape(B, N, Cp)[:, :, :C]


# ------------------------------ deterministic parameters ------------------------------

def make_params(key, embed_dim, depth, num_heads, mlp_ratio):
    C = embed_dim
    H = int(C * mlp_ratio)

    def nxt():
        nonlocal key
        key, sub = jax.random.split(key)
        return sub

    def w(shape):
        return (0.02 * jax.random.normal(nxt(), shape)).astype(jnp.float32)

    def zeros(shape):
        return jnp.zeros(shape, jnp.float32)

    def ones(shape):
        return jnp.ones(shape, jnp.float32)

    params = {
        "norm_w": ones((1, C)), "norm_b": zeros((1, C)),
        "mlps_w1": w((C, C)), "mlps_b1": w((1, C)),
        "mlps_w2": w((C, C)), "mlps_b2": w((1, C)),
        "final_w": ones((1, C)), "final_b": zeros((1, C)),
        "blocks": [],
    }
    for _ in range(depth):
        params["blocks"].append({
            "ln1_w": ones((1, C)), "ln1_b": zeros((1, C)),
            "qkv_w": w((C, 3 * C)),                  # qkv_bias=False
            "proj_w": w((C, C)), "proj_b": w((1, C)),
            "ln2_w": ones((1, C)), "ln2_b": zeros((1, C)),
            "fc1_w": w((C, H)), "fc1_b": w((1, H)),
            "fc2_w": w((H, C)), "fc2_b": w((1, C)),
        })
    return params


# ----------------------------------- pure-JAX reference -----------------------------------

def ref_forward(x, params, *, num_heads):
    def ln(x, w, b):
        mu = jnp.mean(x, -1, keepdims=True)
        xc = x - mu
        var = jnp.mean(xc * xc, -1, keepdims=True)
        return xc * jax.lax.rsqrt(var + LN_EPS) * w + b

    def gelu(x):
        return 0.5 * x * (1.0 + jax.lax.erf(x / jnp.sqrt(2.0)))

    B, N, C = x.shape
    hd = C // num_heads
    scale = hd ** (-0.5)

    h = ln(x, params["norm_w"], params["norm_b"])
    h = gelu(h @ params["mlps_w1"] + params["mlps_b1"]) @ params["mlps_w2"] + params["mlps_b2"]

    for blk in params["blocks"]:
        y = ln(h, blk["ln1_w"], blk["ln1_b"])
        qkv = y @ blk["qkv_w"]                                    # (B, N, 3C)
        qkv = qkv.reshape(B, N, 3, num_heads, hd).transpose(2, 0, 3, 1, 4)
        q, k, v = qkv[0], qkv[1], qkv[2]                          # (B, H, N, hd)
        attn = jnp.einsum("bhnd,bhmd->bhnm", q, k) * scale
        attn = jax.nn.softmax(attn, axis=-1)
        o = jnp.einsum("bhnm,bhmd->bhnd", attn, v)
        o = o.transpose(0, 2, 1, 3).reshape(B, N, C)
        h = h + (o @ blk["proj_w"] + blk["proj_b"])
        y = ln(h, blk["ln2_w"], blk["ln2_b"])
        y = gelu(y @ blk["fc1_w"] + blk["fc1_b"]) @ blk["fc2_w"] + blk["fc2_b"]
        h = h + y

    return ln(h, params["final_w"], params["final_b"])


# ----------------------------------------- main -----------------------------------------

if __name__ == "__main__":
    # Small shapes consistent with the module's forward: rgb_fea is (B, N, C),
    # C divisible by num_heads.
    B, N, C = 2, 16, 48
    depth, num_heads, mlp_ratio = 2, 6, 3.0

    key = jax.random.PRNGKey(0)
    kx, kp = jax.random.split(key)
    rgb_fea = jax.random.normal(kx, (B, N, C), dtype=jnp.float32)
    params = make_params(kp, C, depth, num_heads, mlp_ratio)

    out = token_transformer_forward(rgb_fea, params, num_heads=num_heads)
    out = jax.block_until_ready(out)

    ref = ref_forward(rgb_fea, params, num_heads=num_heads)
    assert out.shape == (B, N, C)
    assert jnp.allclose(out, ref, atol=1e-4, rtol=1e-4), float(jnp.max(jnp.abs(out - ref)))

    print("KERNEL_OK")
</pallas_src>

<mosaic_0001>
module attributes {stable_mosaic.version = 11 : i64} {
  func.func @fused_kernel(%arg0: i32, %arg1: memref<32x128xf32, #tpu.memory_space<vmem>>, %arg2: memref<192x128xf32, #tpu.memory_space<vmem>>, %arg3: memref<192x32xf32, #tpu.memory_space<vmem>>, %arg4: memref<192x192xf32, #tpu.memory_space<vmem>>, %arg5: memref<32x192xf32, #tpu.memory_space<vmem>>, %arg6: memref<8x128xf32, #tpu.memory_space<vmem>>, %arg7: memref<128x128xf32, #tpu.memory_space<vmem>>, %arg8: memref<128x128xf32, #tpu.memory_space<vmem>>, %arg9: memref<1x128x384xf32, #tpu.memory_space<vmem>>, %arg10: memref<1x128x128xf32, #tpu.memory_space<vmem>>, %arg11: memref<1x128x256xf32, #tpu.memory_space<vmem>>, %arg12: memref<1x256x128xf32, #tpu.memory_space<vmem>>, %arg13: memref<1x8x256xf32, #tpu.memory_space<vmem>>, %arg14: memref<32x128xf32, #tpu.memory_space<vmem>>, %arg15: memref<32x128xf32, #tpu.memory_space<vmem>>) attributes {dimension_semantics = [#tpu.dimension_semantics<arbitrary>], iteration_bounds = array<i64: 2>, scalar_prefetch = 0 : i64, scratch_operands = 1 : i64, tpu.core_type = #tpu.core_type<tc>, window_params = [{pipeline_mode = #tpu.pipeline_mode<synchronous>, transform_indices = @transform_0, window_bounds = array<i64: 32, 128>}, {pipeline_mode = #tpu.pipeline_mode<synchronous>, transform_indices = @transform_1, window_bounds = array<i64: 192, 128>}, {pipeline_mode = #tpu.pipeline_mode<synchronous>, transform_indices = @transform_2, window_bounds = array<i64: 192, 32>}, {pipeline_mode = #tpu.pipeline_mode<synchronous>, transform_indices = @transform_3, window_bounds = array<i64: 192, 192>}, {pipeline_mode = #tpu.pipeline_mode<synchronous>, transform_indices = @transform_4, window_bounds = array<i64: 32, 192>}, {pipeline_mode = #tpu.pipeline_mode<synchronous>, transform_indices = @transform_5, window_bounds = array<i64: 8, 128>}, {pipeline_mode = #tpu.pipeline_mode<synchronous>, transform_indices = @transform_6, window_bounds = array<i64: 128, 128>}, {pipeline_mode = #tpu.pipeline_mode<synchronous>, transform_indices = @transform_7, window_bounds = array<i64: 128, 128>}, {transform_indices = @transform_8, window_bounds = array<i64: 1, 128, 384>}, {transform_indices = @transform_9, window_bounds = array<i64: 1, 128, 128>}, {transform_indices = @transform_10, window_bounds = array<i64: 1, 128, 256>}, {transform_indices = @transform_11, window_bounds = array<i64: 1, 256, 128>}, {transform_indices = @transform_12, window_bounds = array<i64: 1, 8, 256>}, {pipeline_mode = #tpu.pipeline_mode<synchronous>, transform_indices = @transform_13, window_bounds = array<i64: 32, 128>}]} {
    %0 = tpu.iota {dimensions = array<i32: 1>} : vector<1x128xi32>
    %c48_i32 = arith.constant 48 : i32
    %1 = vector.broadcast %c48_i32 : i32 to vector<1x128xi32>
    %2 = arith.cmpi slt, %0, %1 : vector<1x128xi32>
    %c0 = arith.constant 0 : index
    %c0_0 = arith.constant 0 : index
    %3 = vector.load %arg6[%c0, %c0_0] : memref<8x128xf32, #tpu.memory_space<vmem>>, vector<8x128xf32>
    %4 = vector.extract_strided_slice %3 {offsets = [0, 0], sizes = [1, 128], strides = [1, 1]} : vector<8x128xf32> to vector<1x128xf32>
    %5 = vector.extract_strided_slice %3 {offsets = [1, 0], sizes = [1, 128], strides = [1, 1]} : vector<8x128xf32> to vector<1x128xf32>
    %6 = vector.extract_strided_slice %3 {offsets = [2, 0], sizes = [1, 128], strides = [1, 1]} : vector<8x128xf32> to vector<1x128xf32>
    %7 = vector.extract_strided_slice %3 {offsets = [3, 0], sizes = [1, 128], strides = [1, 1]} : vector<8x128xf32> to vector<1x128xf32>
    %8 = vector.extract_strided_slice %3 {offsets = [4, 0], sizes = [1, 128], strides = [1, 1]} : vector<8x128xf32> to vector<1x128xf32>
    %9 = vector.extract_strided_slice %3 {offsets = [5, 0], sizes = [1, 128], strides = [1, 1]} : vector<8x128xf32> to vector<1x128xf32>
    %c0_i32 = arith.constant 0 : i32
    %10 = arith.cmpi eq, %arg0, %c0_i32 : i32
    %11 = arith.extui %10 : i1 to i32
    %c0_i32_1 = arith.constant 0 : i32
    %12 = arith.cmpi ne, %11, %c0_i32_1 : i32
    scf.if %12 {
      %c0_63 = arith.constant 0 : index
      %c0_64 = arith.constant 0 : index
      %142 = vector.load %arg1[%c0_63, %c0_64] : memref<32x128xf32, #tpu.memory_space<vmem>>, vector<32x128xf32>
      %cst_65 = arith.constant 0.000000e+00 : f32
      %143 = vector.shape_cast %2 : vector<1x128xi1> to vector<1x128xi1>
      %144 = vector.broadcast %143 : vector<1x128xi1> to vector<32x128xi1>
      %145 = vector.broadcast %cst_65 : f32 to vector<32x128xf32>
      %146 = arith.select %144, %142, %145 : vector<32x128xi1>, vector<32x128xf32>
      %cst_66 = arith.constant dense<0.000000e+00> : vector<32xf32>
      %147 = vector.multi_reduction <add>, %146, %cst_66 [1] : vector<32x128xf32> to vector<32xf32>
      %148 = vector.shape_cast %147 : vector<32xf32> to vector<32x1xf32>
      %cst_67 = arith.constant 0.020833334 : f32
      %149 = vector.broadcast %cst_67 : f32 to vector<32x1xf32>
      %150 = arith.mulf %148, %149 : vector<32x1xf32>
      %151 = vector.broadcast %150 : vector<32x1xf32> to vector<32x128xf32>
      %152 = arith.subf %142, %151 : vector<32x128xf32>
      %cst_68 = arith.constant 0.000000e+00 : f32
      %153 = vector.shape_cast %2 : vector<1x128xi1> to vector<1x128xi1>
      %154 = vector.broadcast %153 : vector<1x128xi1> to vector<32x128xi1>
      %155 = vector.broadcast %cst_68 : f32 to vector<32x128xf32>
      %156 = arith.select %154, %152, %155 : vector<32x128xi1>, vector<32x128xf32>
      %157 = arith.mulf %156, %156 : vector<32x128xf32>
      %cst_69 = arith.constant dense<0.000000e+00> : vector<32xf32>
      %158 = vector.multi_reduction <add>, %157, %cst_69 [1] : vector<32x128xf32> to vector<32xf32>
      %159 = vector.shape_cast %158 : vector<32xf32> to vector<32x1xf32>
      %cst_70 = arith.constant 0.020833334 : f32
      %160 = vector.broadcast %cst_70 : f32 to vector<32x1xf32>
      %161 = arith.mulf %159, %160 : vector<32x1xf32>
      %cst_71 = arith.constant 9.99999974E-6 : f32
      %162 = vector.broadcast %cst_71 : f32 to vector<32x1xf32>
      %163 = arith.addf %161, %162 : vector<32x1xf32>
      %164 = math.rsqrt %163 : vector<32x1xf32>
      %165 = vector.broadcast %164 : vector<32x1xf32> to vector<32x128xf32>
      %166 = arith.mulf %156, %165 : vector<32x128xf32>
      %167 = vector.broadcast %4 : vector<1x128xf32> to vector<32x128xf32>
      %168 = arith.mulf %166, %167 : vector<32x128xf32>
      %169 = vector.broadcast %5 : vector<1x128xf32> to vector<32x128xf32>
      %170 = arith.addf %168, %169 : vector<32x128xf32>
      %c0_72 = arith.constant 0 : index
      %c0_73 = arith.constant 0 : index
      %171 = vector.load %arg7[%c0_72, %c0_73] : memref<128x128xf32, #tpu.memory_space<vmem>>, vector<128x128xf32>
      %cst_74 = arith.constant dense<0.000000e+00> : vector<32x128xf32>
      %172 = tpu.matmul %170, %171, %cst_74 {dimension_numbers = #tpu.dot_dimension_numbers<[1], [0], [0], [1], [0, 0, 1, 1], [], []>} : vector<32x128xf32>, vector<128x128xf32>, vector<32x128xf32> -> vector<32x128xf32>
      %173 = vector.broadcast %6 : vector<1x128xf32> to vector<32x128xf32>
      %174 = arith.addf %172, %173 : vector<32x128xf32>
      %cst_75 = arith.constant 5.000000e-01 : f32
      %175 = vector.broadcast %cst_75 : f32 to vector<32x128xf32>
      %176 = arith.mulf %175, %174 : vector<32x128xf32>
      %cst_76 = arith.constant 0.707106769 : f32
      %177 = vector.broadcast %cst_76 : f32 to vector<32x128xf32>
      %178 = arith.mulf %174, %177 : vector<32x128xf32>
      %179 = math.erf %178 : vector<32x128xf32>
      %cst_77 = arith.constant 1.000000e+00 : f32
      %180 = vector.broadcast %cst_77 : f32 to vector<32x128xf32>
      %181 = arith.addf %180, %179 : vector<32x128xf32>
      %182 = arith.mulf %176, %181 : vector<32x128xf32>
      %c0_78 = arith.constant 0 : index
      %c0_79 = arith.constant 0 : index
      %183 = vector.load %arg8[%c0_78, %c0_79] : memref<128x128xf32, #tpu.memory_space<vmem>>, vector<128x128xf32>
      %cst_80 = arith.constant dense<0.000000e+00> : vector<32x128xf32>
      %184 = tpu.matmul %182, %183, %cst_80 {dimension_numbers = #tpu.dot_dimension_numbers<[1], [0], [0], [1], [0, 0, 1, 1], [], []>} : vector<32x128xf32>, vector<128x128xf32>, vector<32x128xf32> -> vector<32x128xf32>
      %185 = vector.broadcast %7 : vector<1x128xf32> to vector<32x128xf32>
      %186 = arith.addf %184, %185 : vector<32x128xf32>
      %c0_81 = arith.constant 0 : index
      %c0_82 = arith.constant 0 : index
      %187 = vector.load %arg15[%c0_81, %c0_82] : memref<32x128xf32, #tpu.memory_space<vmem>>, vector<32x128xf32>
      tpu.vector_store %arg15[%c0_81, %c0_82], %186 {strides = array<i32>} : memref<32x128xf32, #tpu.memory_space<vmem>>, vector<32x128xf32>,
    } else {
    }
    %c0_2 = arith.constant 0 : index
    %c0_3 = arith.constant 0 : index
    %c0_4 = arith.constant 0 : index
    %13 = vector.load %arg13[%c0_2, %c0_3, %c0_4] : memref<1x8x256xf32, #tpu.memory_space<vmem>>, vector<1x8x256xf32>
    %14 = vector.shape_cast %13 : vector<1x8x256xf32> to vector<8x256xf32>
    %15 = vector.extract_strided_slice %14 {offsets = [0, 0], sizes = [1, 128], strides = [1, 1]} : vector<8x256xf32> to vector<1x128xf32>
    %16 = vector.extract_strided_slice %14 {offsets = [1, 0], sizes = [1, 128], strides = [1, 1]} : vector<8x256xf32> to vector<1x128xf32>
    %17 = vector.extract_strided_slice %14 {offsets = [2, 0], sizes = [1, 128], strides = [1, 1]} : vector<8x256xf32> to vector<1x128xf32>
    %18 = vector.extract_strided_slice %14 {offsets = [3, 0], sizes = [1, 128], strides = [1, 1]} : vector<8x256xf32> to vector<1x128xf32>
    %19 = vector.extract_strided_slice %14 {offsets = [4, 0], sizes = [1, 128], strides = [1, 1]} : vector<8x256xf32> to vector<1x128xf32>
    %20 = vector.extract_strided_slice %14 {offsets = [5, 0], sizes = [1, 128], strides = [1, 1]} : vector<8x256xf32> to vector<1x128xf32>
    %21 = vector.extract_strided_slice %14 {offsets = [6, 0], sizes = [1, 256], strides = [1, 1]} : vector<8x256xf32> to vector<1x256xf32>
    %c0_5 = arith.constant 0 : index
    %c0_6 = arith.constant 0 : index
    %22 = vector.load %arg15[%c0_5, %c0_6] : memref<32x128xf32, #tpu.memory_space<vmem>>, vector<32x128xf32>
    %cst = arith.constant 0.000000e+00 : f32
    %23 = vector.shape_cast %2 : vector<1x128xi1> to vector<1x128xi1>
    %24 = vector.broadcast %23 : vector<1x128xi1> to vector<32x128xi1>
    %25 = vector.broadcast %cst : f32 to vector<32x128xf32>
    %26 = arith.select %24, %22, %25 : vector<32x128xi1>, vector<32x128xf32>
    %cst_7 = arith.constant dense<0.000000e+00> : vector<32xf32>
    %27 = vector.multi_reduction <add>, %26, %cst_7 [1] : vector<32x128xf32> to vector<32xf32>
    %28 = vector.shape_cast %27 : vector<32xf32> to vector<32x1xf32>
    %cst_8 = arith.constant 0.020833334 : f32
    %29 = vector.broadcast %cst_8 : f32 to vector<32x1xf32>
    %30 = arith.mulf %28, %29 : vector<32x1xf32>
    %31 = vector.broadcast %30 : vector<32x1xf32> to vector<32x128xf32>
    %32 = arith.subf %22, %31 : vector<32x128xf32>
    %cst_9 = arith.constant 0.000000e+00 : f32
    %33 = vector.shape_cast %2 : vector<1x128xi1> to vector<1x128xi1>
    %34 = vector.broadcast %33 : vector<1x128xi1> to vector<32x128xi1>
    %35 = vector.broadcast %cst_9 : f32 to vector<32x128xf32>
    %36 = arith.select %34, %32, %35 : vector<32x128xi1>, vector<32x128xf32>
    %37 = arith.mulf %36, %36 : vector<32x128xf32>
    %cst_10 = arith.constant dense<0.000000e+00> : vector<32xf32>
    %38 = vector.multi_reduction <add>, %37, %cst_10 [1] : vector<32x128xf32> to vector<32xf32>
    %39 = vector.shape_cast %38 : vector<32xf32> to vector<32x1xf32>
    %cst_11 = arith.constant 0.020833334 : f32
    %40 = vector.broadcast %cst_11 : f32 to vector<32x1xf32>
    %41 = arith.mulf %39, %40 : vector<32x1xf32>
    %cst_12 = arith.constant 9.99999974E-6 : f32
    %42 = vector.broadcast %cst_12 : f32 to vector<32x1xf32>
    %43 = arith.addf %41, %42 : vector<32x1xf32>
    %44 = math.rsqrt %43 : vector<32x1xf32>
    %45 = vector.broadcast %44 : vector<32x1xf32> to vector<32x128xf32>
    %46 = arith.mulf %36, %45 : vector<32x128xf32>
    %47 = vector.broadcast %15 : vector<1x128xf32> to vector<32x128xf32>
    %48 = arith.mulf %46, %47 : vector<32x128xf32>
    %49 = vector.broadcast %16 : vector<1x128xf32> to vector<32x128xf32>
    %50 = arith.addf %48, %49 : vector<32x128xf32>
    %c0_13 = arith.constant 0 : index
    %c0_14 = arith.constant 0 : index
    %c0_15 = arith.constant 0 : index
    %51 = vector.load %arg9[%c0_13, %c0_14, %c0_15] : memref<1x128x384xf32, #tpu.memory_space<vmem>>, vector<1x128x384xf32>
    %52 = vector.shape_cast %51 : vector<1x128x384xf32> to vector<128x384xf32>
    %cst_16 = arith.constant dense<0.000000e+00> : vector<32x384xf32>
    %53 = tpu.matmul %50, %52, %cst_16 {dimension_numbers = #tpu.dot_dimension_numbers<[1], [0], [0], [1], [0, 0, 1, 1], [], []>} : vector<32x128xf32>, vector<128x384xf32>, vector<32x384xf32> -> vector<32x384xf32>
    %54 = vector.extract_strided_slice %53 {offsets = [0, 0], sizes = [32, 128], strides = [1, 1]} : vector<32x384xf32> to vector<32x128xf32>
    %55 = vector.extract_strided_slice %53 {offsets = [0, 128], sizes = [32, 128], strides = [1, 1]} : vector<32x384xf32> to vector<32x128xf32>
    %56 = vector.extract_strided_slice %53 {offsets = [0, 256], sizes = [32, 128], strides = [1, 1]} : vector<32x384xf32> to vector<32x128xf32>
    %c0_17 = arith.constant 0 : index
    %c0_18 = arith.constant 0 : index
    %57 = vector.load %arg2[%c0_17, %c0_18] : memref<192x128xf32, #tpu.memory_space<vmem>>, vector<192x128xf32>
    %c0_19 = arith.constant 0 : index
    %c0_20 = arith.constant 0 : index
    %58 = vector.load %arg3[%c0_19, %c0_20] : memref<192x32xf32, #tpu.memory_space<vmem>>, vector<192x32xf32>
    %cst_21 = arith.constant dense<0.000000e+00> : vector<192x128xf32>
    %59 = tpu.matmul %58, %55, %cst_21 {dimension_numbers = #tpu.dot_dimension_numbers<[1], [0], [0], [1], [0, 0, 1, 1], [], []>} : vector<192x32xf32>, vector<32x128xf32>, vector<192x128xf32> -> vector<192x128xf32>
    %60 = arith.mulf %59, %57 : vector<192x128xf32>
    %c0_22 = arith.constant 0 : index
    %c0_23 = arith.constant 0 : index
    %61 = vector.load %arg3[%c0_22, %c0_23] : memref<192x32xf32, #tpu.memory_space<vmem>>, vector<192x32xf32>
    %cst_24 = arith.constant dense<0.000000e+00> : vector<192x128xf32>
    %62 = tpu.matmul %61, %56, %cst_24 {dimension_numbers = #tpu.dot_dimension_numbers<[1], [0], [0], [1], [0, 0, 1, 1], [], []>} : vector<192x32xf32>, vector<32x128xf32>, vector<192x128xf32> -> vector<192x128xf32>
    %63 = arith.mulf %62, %57 : vector<192x128xf32>
    %cst_25 = arith.constant dense<0.000000e+00> : vector<32x192xf32>
    %64 = tpu.matmul %54, %60, %cst_25 {dimension_numbers = #tpu.dot_dimension_numbers<[1], [1], [0], [0], [0, 0, 1, 0], [], []>} : vector<32x128xf32>, vector<192x128xf32>, vector<32x192xf32> -> vector<32x192xf32>
    %cst_26 = arith.constant 0.353553385 : f32
    %65 = vector.broadcast %cst_26 : f32 to vector<32x192xf32>
    %66 = arith.mulf %64, %65 : vector<32x192xf32>
    %c0_27 = arith.constant 0 : index
    %c0_28 = arith.constant 0 : index
    %67 = vector.load %arg5[%c0_27, %c0_28] : memref<32x192xf32, #tpu.memory_space<vmem>>, vector<32x192xf32>
    %cst_29 = arith.constant 0.000000e+00 : f32
    %68 = vector.broadcast %cst_29 : f32 to vector<32x192xf32>
    %69 = arith.cmpf ogt, %67, %68 : vector<32x192xf32>
    %cst_30 = arith.constant -1.000000e+30 : f32
    %70 = vector.broadcast %cst_30 : f32 to vector<32x192xf32>
    %71 = arith.select %69, %66, %70 : vector<32x192xi1>, vector<32x192xf32>
    %cst_31 = arith.constant dense<0xFF800000> : vector<32xf32>
    %72 = vector.multi_reduction <maximumf>, %71, %cst_31 [1] : vector<32x192xf32> to vector<32xf32>
    %73 = vector.shape_cast %72 : vector<32xf32> to vector<32x1xf32>
    %74 = vector.broadcast %73 : vector<32x1xf32> to vector<32x192xf32>
    %75 = arith.subf %71, %74 : vector<32x192xf32>
    %76 = math.exp %75 : vector<32x192xf32>
    %c0_32 = arith.constant 0 : index
    %c0_33 = arith.constant 0 : index
    %77 = vector.load %arg4[%c0_32, %c0_33] : memref<192x192xf32, #tpu.memory_space<vmem>>, vector<192x192xf32>
    %cst_34 = arith.constant dense<0.000000e+00> : vector<32x192xf32>
    %78 = tpu.matmul %76, %77, %cst_34 {dimension_numbers = #tpu.dot_dimension_numbers<[1], [0], [0], [1], [0, 0, 1, 1], [], []>} : vector<32x192xf32>, vector<192x192xf32>, vector<32x192xf32> -> vector<32x192xf32>
    %cst_35 = arith.constant 0.000000e+00 : f32
    %79 = vector.broadcast %cst_35 : f32 to vector<32x192xf32>
    %80 = arith.cmpf ogt, %78, %79 : vector<32x192xf32>
    %cst_36 = arith.constant 1.000000e+00 : f32
    %81 = vector.broadcast %cst_36 : f32 to vector<32x192xf32>
    %82 = arith.select %80, %78, %81 : vector<32x192xi1>, vector<32x192xf32>
    %83 = arith.divf %76, %82 : vector<32x192xf32>
    %cst_37 = arith.constant dense<0.000000e+00> : vector<32x128xf32>
    %84 = tpu.matmul %83, %63, %cst_37 {dimension_numbers = #tpu.dot_dimension_numbers<[1], [0], [0], [1], [0, 0, 1, 1], [], []>} : vector<32x192xf32>, vector<192x128xf32>, vector<32x128xf32> -> vector<32x128xf32>
    %c0_38 = arith.constant 0 : index
    %c0_39 = arith.constant 0 : index
    %c0_40 = arith.constant 0 : index
    %85 = vector.load %arg10[%c0_38, %c0_39, %c0_40] : memref<1x128x128xf32, #tpu.memory_space<vmem>>, vector<1x128x128xf32>
    %86 = vector.shape_cast %85 : vector<1x128x128xf32> to vector<128x128xf32>
    %cst_41 = arith.constant dense<0.000000e+00> : vector<32x128xf32>
    %87 = tpu.matmul %84, %86, %cst_41 {dimension_numbers = #tpu.dot_dimension_numbers<[1], [0], [0], [1], [0, 0, 1, 1], [], []>} : vector<32x128xf32>, vector<128x128xf32>, vector<32x128xf32> -> vector<32x128xf32>
    %88 = arith.addf %22, %87 : vector<32x128xf32>
    %89 = vector.broadcast %17 : vector<1x128xf32> to vector<32x128xf32>
    %90 = arith.addf %88, %89 : vector<32x128xf32>
    %cst_42 = arith.constant 0.000000e+00 : f32
    %91 = vector.shape_cast %2 : vector<1x128xi1> to vector<1x128xi1>
    %92 = vector.broadcast %91 : vector<1x128xi1> to vector<32x128xi1>
    %93 = vector.broadcast %cst_42 : f32 to vector<32x128xf32>
    %94 = arith.select %92, %90, %93 : vector<32x128xi1>, vector<32x128xf32>
    %cst_43 = arith.constant dense<0.000000e+00> : vector<32xf32>
    %95 = vector.multi_reduction <add>, %94, %cst_43 [1] : vector<32x128xf32> to vector<32xf32>
    %96 = vector.shape_cast %95 : vector<32xf32> to vector<32x1xf32>
    %cst_44 = arith.constant 0.020833334 : f32
    %97 = vector.broadcast %cst_44 : f32 to vector<32x1xf32>
    %98 = arith.mulf %96, %97 : vector<32x1xf32>
    %99 = vector.broadcast %98 : vector<32x1xf32> to vector<32x128xf32>
    %100 = arith.subf %90, %99 : vector<32x128xf32>
    %cst_45 = arith.constant 0.000000e+00 : f32
    %101 = vector.shape_cast %2 : vector<1x128xi1> to vector<1x128xi1>
    %102 = vector.broadcast %101 : vector<1x128xi1> to vector<32x128xi1>
    %103 = vector.broadcast %cst_45 : f32 to vector<32x128xf32>
    %104 = arith.select %102, %100, %103 : vector<32x128xi1>, vector<32x128xf32>
    %105 = arith.mulf %104, %104 : vector<32x128xf32>
    %cst_46 = arith.constant dense<0.000000e+00> : vector<32xf32>
    %106 = vector.multi_reduction <add>, %105, %cst_46 [1] : vector<32x128xf32> to vector<32xf32>
    %107 = vector.shape_cast %106 : vector<32xf32> to vector<32x1xf32>
    %cst_47 = arith.constant 0.020833334 : f32
    %108 = vector.broadcast %cst_47 : f32 to vector<32x1xf32>
    %109 = arith.mulf %107, %108 : vector<32x1xf32>
    %cst_48 = arith.constant 9.99999974E-6 : f32
    %110 = vector.broadcast %cst_48 : f32 to vector<32x1xf32>
    %111 = arith.addf %109, %110 : vector<32x1xf32>
    %112 = math.rsqrt %111 : vector<32x1xf32>
    %113 = vector.broadcast %112 : vector<32x1xf32> to vector<32x128xf32>
    %114 = arith.mulf %104, %113 : vector<32x128xf32>
    %115 = vector.broadcast %18 : vector<1x128xf32> to vector<32x128xf32>
    %116 = arith.mulf %114, %115 : vector<32x128xf32>
    %117 = vector.broadcast %19 : vector<1x128xf32> to vector<32x128xf32>
    %118 = arith.addf %116, %117 : vector<32x128xf32>
    %c0_49 = arith.constant 0 : index
    %c0_50 = arith.constant 0 : index
    %c0_51 = arith.constant 0 : index
    %119 = vector.load %arg11[%c0_49, %c0_50, %c0_51] : memref<1x128x256xf32, #tpu.memory_space<vmem>>, vector<1x128x256xf32>
    %120 = vector.shape_cast %119 : vector<1x128x256xf32> to vector<128x256xf32>
    %cst_52 = arith.constant dense<0.000000e+00> : vector<32x256xf32>
    %121 = tpu.matmul %118, %120, %cst_52 {dimension_numbers = #tpu.dot_dimension_numbers<[1], [0], [0], [1], [0, 0, 1, 1], [], []>} : vector<32x128xf32>, vector<128x256xf32>, vector<32x256xf32> -> vector<32x256xf32>
    %122 = vector.broadcast %21 : vector<1x256xf32> to vector<32x256xf32>
    %123 = arith.addf %121, %122 : vector<32x256xf32>
    %cst_53 = arith.constant 5.000000e-01 : f32
    %124 = vector.broadcast %cst_53 : f32 to vector<32x256xf32>
    %125 = arith.mulf %124, %123 : vector<32x256xf32>
    %cst_54 = arith.constant 0.707106769 : f32
    %126 = vector.broadcast %cst_54 : f32 to vector<32x256xf32>
    %127 = arith.mulf %123, %126 : vector<32x256xf32>
    %128 = math.erf %127 : vector<32x256xf32>
    %cst_55 = arith.constant 1.000000e+00 : f32
    %129 = vector.broadcast %cst_55 : f32 to vector<32x256xf32>
    %130 = arith.addf %129, %128 : vector<32x256xf32>
    %131 = arith.mulf %125, %130 : vector<32x256xf32>
    %c0_56 = arith.constant 0 : index
    %c0_57 = arith.constant 0 : index
    %c0_58 = arith.constant 0 : index
    %132 = vector.load %arg12[%c0_56, %c0_57, %c0_58] : memref<1x256x128xf32, #tpu.memory_space<vmem>>, vector<1x256x128xf32>
    %133 = vector.shape_cast %132 : vector<1x256x128xf32> to vector<256x128xf32>
    %cst_59 = arith.constant dense<0.000000e+00> : vector<32x128xf32>
    %134 = tpu.matmul %131, %133, %cst_59 {dimension_numbers = #tpu.dot_dimension_numbers<[1], [0], [0], [1], [0, 0, 1, 1], [], []>} : vector<32x256xf32>, vector<256x128xf32>, vector<32x128xf32> -> vector<32x128xf32>
    %135 = vector.broadcast %20 : vector<1x128xf32> to vector<32x128xf32>
    %136 = arith.addf %134, %135 : vector<32x128xf32>
    %137 = arith.addf %90, %136 : vector<32x128xf32>
    %c0_60 = arith.constant 0 : index
    %c0_61 = arith.constant 0 : index
    %138 = vector.load %arg15[%c0_60, %c0_61] : memref<32x128xf32, #tpu.memory_space<vmem>>, vector<32x128xf32>
    tpu.vector_store %arg15[%c0_60, %c0_61], %137 {strides = array<i32>} : memref<32x128xf32, #tpu.memory_space<vmem>>, vector<32x128xf32>,
    %c1_i32 = arith.constant 1 : i32
    %139 = arith.cmpi eq, %arg0, %c1_i32 : i32
    %140 = arith.extui %139 : i1 to i32
    %c0_i32_62 = arith.constant 0 : i32
    %141 = arith.cmpi ne, %140, %c0_i32_62 : i32
    scf.if %141 {
      %cst_63 = arith.constant 0.000000e+00 : f32
      %142 = vector.shape_cast %2 : vector<1x128xi1> to vector<1x128xi1>
      %143 = vector.broadcast %142 : vector<1x128xi1> to vector<32x128xi1>
      %144 = vector.broadcast %cst_63 : f32 to vector<32x128xf32>
      %145 = arith.select %143, %137, %144 : vector<32x128xi1>, vector<32x128xf32>
      %cst_64 = arith.constant dense<0.000000e+00> : vector<32xf32>
      %146 = vector.multi_reduction <add>, %145, %cst_64 [1] : vector<32x128xf32> to vector<32xf32>
      %147 = vector.shape_cast %146 : vector<32xf32> to vector<32x1xf32>
      %cst_65 = arith.constant 0.020833334 : f32
      %148 = vector.broadcast %cst_65 : f32 to vector<32x1xf32>
      %149 = arith.mulf %147, %148 : vector<32x1xf32>
      %150 = vector.broadcast %149 : vector<32x1xf32> to vector<32x128xf32>
      %151 = arith.subf %137, %150 : vector<32x128xf32>
      %cst_66 = arith.constant 0.000000e+00 : f32
      %152 = vector.shape_cast %2 : vector<1x128xi1> to vector<1x128xi1>
      %153 = vector.broadcast %152 : vector<1x128xi1> to vector<32x128xi1>
      %154 = vector.broadcast %cst_66 : f32 to vector<32x128xf32>
      %155 = arith.select %153, %151, %154 : vector<32x128xi1>, vector<32x128xf32>
      %156 = arith.mulf %155, %155 : vector<32x128xf32>
      %cst_67 = arith.constant dense<0.000000e+00> : vector<32xf32>
      %157 = vector.multi_reduction <add>, %156, %cst_67 [1] : vector<32x128xf32> to vector<32xf32>
      %158 = vector.shape_cast %157 : vector<32xf32> to vector<32x1xf32>
      %cst_68 = arith.constant 0.020833334 : f32
      %159 = vector.broadcast %cst_68 : f32 to vector<32x1xf32>
      %160 = arith.mulf %158, %159 : vector<32x1xf32>
      %cst_69 = arith.constant 9.99999974E-6 : f32
      %161 = vector.broadcast %cst_69 : f32 to vector<32x1xf32>
      %162 = arith.addf %160, %161 : vector<32x1xf32>
      %163 = math.rsqrt %162 : vector<32x1xf32>
      %164 = vector.broadcast %163 : vector<32x1xf32> to vector<32x128xf32>
      %165 = arith.mulf %155, %164 : vector<32x128xf32>
      %166 = vector.broadcast %8 : vector<1x128xf32> to vector<32x128xf32>
      %167 = arith.mulf %165, %166 : vector<32x128xf32>
      %168 = vector.broadcast %9 : vector<1x128xf32> to vector<32x128xf32>
      %169 = arith.addf %167, %168 : vector<32x128xf32>
      %c0_70 = arith.constant 0 : index
      %c0_71 = arith.constant 0 : index
      %170 = vector.load %arg14[%c0_70, %c0_71] : memref<32x128xf32, #tpu.memory_space<vmem>>, vector<32x128xf32>
      tpu.vector_store %arg14[%c0_70, %c0_71], %169 {strides = array<i32>} : memref<32x128xf32, #tpu.memory_space<vmem>>, vector<32x128xf32>,
    } else {
    }
    return
  }
  func.func @transform_0(%arg0: i32) -> (i32, i32) {
    %c0_i32 = arith.constant 0 : i32
    %c0_i32_0 = arith.constant 0 : i32
    %c0_i32_1 = arith.constant 0 : i32
    return %c0_i32, %c0_i32_0 : i32, i32
  }
  func.func @transform_1(%arg0: i32) -> (i32, i32) {
    %c0_i32 = arith.constant 0 : i32
    %c0_i32_0 = arith.constant 0 : i32
    %c0_i32_1 = arith.constant 0 : i32
    return %c0_i32, %c0_i32_0 : i32, i32
  }
  func.func @transform_2(%arg0: i32) -> (i32, i32) {
    %c0_i32 = arith.constant 0 : i32
    %c0_i32_0 = arith.constant 0 : i32
    %c0_i32_1 = arith.constant 0 : i32
    return %c0_i32, %c0_i32_0 : i32, i32
  }
  func.func @transform_3(%arg0: i32) -> (i32, i32) {
    %c0_i32 = arith.constant 0 : i32
    %c0_i32_0 = arith.constant 0 : i32
    %c0_i32_1 = arith.constant 0 : i32
    return %c0_i32, %c0_i32_0 : i32, i32
  }
  func.func @transform_4(%arg0: i32) -> (i32, i32) {
    %c0_i32 = arith.constant 0 : i32
    %c0_i32_0 = arith.constant 0 : i32
    %c0_i32_1 = arith.constant 0 : i32
    return %c0_i32, %c0_i32_0 : i32, i32
  }
  func.func @transform_5(%arg0: i32) -> (i32, i32) {
    %c0_i32 = arith.constant 0 : i32
    %c0_i32_0 = arith.constant 0 : i32
    %c0_i32_1 = arith.constant 0 : i32
    return %c0_i32, %c0_i32_0 : i32, i32
  }
  func.func @transform_6(%arg0: i32) -> (i32, i32) {
    %c0_i32 = arith.constant 0 : i32
    %c0_i32_0 = arith.constant 0 : i32
    %c0_i32_1 = arith.constant 0 : i32
    return %c0_i32, %c0_i32_0 : i32, i32
  }
  func.func @transform_7(%arg0: i32) -> (i32, i32) {
    %c0_i32 = arith.constant 0 : i32
    %c0_i32_0 = arith.constant 0 : i32
    %c0_i32_1 = arith.constant 0 : i32
    return %c0_i32, %c0_i32_0 : i32, i32
  }
  func.func @transform_8(%arg0: i32) -> (i32, i32, i32) {
    %c0_i32 = arith.constant 0 : i32
    %c0_i32_0 = arith.constant 0 : i32
    %c0_i32_1 = arith.constant 0 : i32
    return %arg0, %c0_i32, %c0_i32_0 : i32, i32, i32
  }
  func.func @transform_9(%arg0: i32) -> (i32, i32, i32) {
    %c0_i32 = arith.constant 0 : i32
    %c0_i32_0 = arith.constant 0 : i32
    %c0_i32_1 = arith.constant 0 : i32
    return %arg0, %c0_i32, %c0_i32_0 : i32, i32, i32
  }
  func.func @transform_10(%arg0: i32) -> (i32, i32, i32) {
    %c0_i32 = arith.constant 0 : i32
    %c0_i32_0 = arith.constant 0 : i32
    %c0_i32_1 = arith.constant 0 : i32
    return %arg0, %c0_i32, %c0_i32_0 : i32, i32, i32
  }
  func.func @transform_11(%arg0: i32) -> (i32, i32, i32) {
    %c0_i32 = arith.constant 0 : i32
    %c0_i32_0 = arith.constant 0 : i32
    %c0_i32_1 = arith.constant 0 : i32
    return %arg0, %c0_i32, %c0_i32_0 : i32, i32, i32
  }
  func.func @transform_12(%arg0: i32) -> (i32, i32, i32) {
    %c0_i32 = arith.constant 0 : i32
    %c0_i32_0 = arith.constant 0 : i32
    %c0_i32_1 = arith.constant 0 : i32
    return %arg0, %c0_i32, %c0_i32_0 : i32, i32, i32
  }
  func.func @transform_13(%arg0: i32) -> (i32, i32) {
    %c0_i32 = arith.constant 0 : i32
    %c0_i32_0 = arith.constant 0 : i32
    %c0_i32_1 = arith.constant 0 : i32
    return %c0_i32, %c0_i32_0 : i32, i32
  }
}

</mosaic_0001>

<llo_original>
// kernel: tpu_custom_call.1
$region0: #{tpu_custom_call.1}
  #allocation0 [shape = 'u32[]', space=smem, size = 0x4, offset = 0x4, fixed_abs, tag = 'smem constant byte address 0x4 - core index']
  #allocation1 [shape = 'u32[72,128]{1,0:T(1,128)}', space=vmem, size = 0x9000, scoped, tag = 'internal scratch']
  #allocation2 [shape = 'f32[32,128]{1,0:T(8,128)}', space=vmem, size = 0x4000, scoped, tag = 'scratch operand']
  %s0 = inlined_call_operand.hbm [shape: f32[32,128], index: 0, kind: input, shape index: {}]
  %s1 = inlined_call_operand.hbm [shape: f32[192,128], index: 1, kind: input, shape index: {}]
  %s2 = inlined_call_operand.vmem [shape: f32[192,32], index: 2, kind: input, shape index: {}]
  %s3 = inlined_call_operand.hbm [shape: f32[192,192], index: 3, kind: input, shape index: {}]
  %s4 = inlined_call_operand.hbm [shape: f32[32,192], index: 4, kind: input, shape index: {}]
  %s5 = inlined_call_operand.vmem [shape: f32[8,128], index: 5, kind: input, shape index: {}]
  %s6 = inlined_call_operand.hbm [shape: f32[128,128], index: 6, kind: input, shape index: {}]
  %s7 = inlined_call_operand.hbm [shape: f32[128,128], index: 7, kind: input, shape index: {}]
  %s8 = inlined_call_operand.hbm [shape: f32[2,128,384], index: 8, kind: input, shape index: {}]
  %s9 = inlined_call_operand.vmem [shape: f32[2,128,128], index: 9, kind: input, shape index: {}]
  %s10 = inlined_call_operand.hbm [shape: f32[2,128,256], index: 10, kind: input, shape index: {}]
  %s11 = inlined_call_operand.hbm [shape: f32[2,256,128], index: 11, kind: input, shape index: {}]
  %s12 = inlined_call_operand.hbm [shape: f32[2,8,256], index: 12, kind: input, shape index: {}]
  %s13 = inlined_call_operand.hbm [shape: f32[32,128], index: 13, kind: output, shape index: {}]
  %s14 = sld [smem:[#allocation0]]
  $region133: #{tpu_custom_call.1} parent=0
    _
  %s16 = ssub.s32 1, %s14
  %s17 = scalar_select 0, %s16, %s14
  $region1: #{tpu_custom_call.1} parent=0
    #allocation3 [shape = 'u8[16384]{0}', space=vmem, size = 0x4000, scoped, tag = 'input window, operand 0, single buffered']
    #allocation4 [shape = 's32[2]{0}', space=sflag, size = 0x8, scoped, tag = 'scoped memory for tpu_custom_call.1']
    #allocation5 [shape = 's32[2]{0}', space=sflag, size = 0x8, scoped, tag = 'scoped memory for tpu_custom_call.1']
    #allocation6 [shape = 'u8[98304]{0}', space=vmem, size = 0x18000, scoped, tag = 'input window, operand 1, single buffered']
    #allocation7 [shape = 's32[1]{0}', space=sflag, size = 0x4, scoped, tag = 'scoped memory for tpu_custom_call.1']
    #allocation8 [shape = 'u8[196608]{0}', space=vmem, size = 0x30000, scoped, tag = 'input window, operand 3, single buffered']
    #allocation9 [shape = 'u8[32768]{0}', space=vmem, size = 0x8000, scoped, tag = 'input window, operand 4, single buffered']
    #allocation10 [shape = 's32[1]{0}', space=sflag, size = 0x4, scoped, tag = 'scoped memory for tpu_custom_call.1']
    #allocation11 [shape = 'u8[65536]{0}', space=vmem, size = 0x10000, scoped, tag = 'input window, operand 6, single buffered']
    #allocation12 [shape = 'u8[65536]{0}', space=vmem, size = 0x10000, scoped, tag = 'input window, operand 7, single buffered']
    #allocation13 [shape = 's32[1]{0}', space=sflag, size = 0x4, scoped, tag = 'scoped memory for tpu_custom_call.1']
    #allocation14 [shape = 'u8[393216]{0}', space=vmem, size = 0x60000, scoped, tag = 'input window, operand 8']
    #allocation15 [shape = 'u8[262144]{0}', space=vmem, size = 0x40000, scoped, tag = 'input window, operand 10']
    #allocation16 [shape = 'u8[262144]{0}', space=vmem, size = 0x40000, scoped, tag = 'input window, operand 11']
    #allocation17 [shape = 'u8[16384]{0}', space=vmem, size = 0x4000, scoped, tag = 'input window, operand 12']
    #allocation18 [shape = 'u8[16384]{0}', space=vmem, size = 0x4000, scoped, tag = 'output window, operand 0, single buffered']
    %18 = vsyncpa [#allocation4], 0
    %19 = vsyncpa [#allocation7], 0
    %20 = vsyncpa [#allocation10], 0
    %21 = vsyncpa [#allocation13], 0
    %22 = vsyncpa [#allocation5], 0
    loop: start=0, step=1, limit=4
    $region2: #{tpu_custom_call.1} parent=1 // loop_pre_header
      _
    $region3: #{tpu_custom_call.1} parent=1 // loop_header
      %s24 = sphi 0, %s28
      %p25 = scmp.ge.s32.totalorder %s24, 4
      %s32 = sphi 0, %s32
      %s34 = sphi 0, %s32
      %s35 = sphi 0, %s34
      %s49 = sphi 0, %s35
      %s53 = sphi 0, %s53
      %s55 = sphi 0, %s53
      %s56 = sphi 0, %s55
      %s70 = sphi 0, %s56
      %s74 = sphi 0, %s74
      %s76 = sphi 0, %s74
      %s77 = sphi 0, %s76
      %s91 = sphi 0, %s77
      %s95 = sphi 0, %s95
      %s97 = sphi 0, %s95
      %s98 = sphi 0, %s97
      %s112 = sphi 0, %s98
      %s116 = sphi 0, %s116
      %s118 = sphi 0, %s116
      %s119 = sphi 0, %s118
      %s133 = sphi 0, %s119
      %s137 = sphi 0, %s137
      %s139 = sphi 0, %s137
      %s140 = sphi 0, %s139
      %s154 = sphi 0, %s140
      %s158 = sphi 0, %s158
      %s160 = sphi 0, %s158
      %s161 = sphi 0, %s160
      %s175 = sphi 0, %s161
      %s179 = sphi 0, %s179
      %s181 = sphi 0, %s179
      %s182 = sphi 0, %s181
      %s196 = sphi 0, %s182
      %s202 = sphi 0, %s204
      %s205 = sphi 0, %s202
      %s206 = sphi 0, %s205
      %s222 = sphi 0, %s206
      %s228 = sphi 0, %s230
      %s231 = sphi 0, %s228
      %s232 = sphi 0, %s231
      %s248 = sphi 0, %s232
      %s254 = sphi 0, %s256
      %s257 = sphi 0, %s254
      %s258 = sphi 0, %s257
      %s274 = sphi 0, %s258
      %s280 = sphi 0, %s282
      %s283 = sphi 0, %s280
      %s284 = sphi 0, %s283
      %s300 = sphi 0, %s284
      %s306 = sphi 0, %s308
      %s309 = sphi 0, %s306
      %s310 = sphi 0, %s309
      %s326 = sphi 0, %s310
      %s330 = sphi 0, %s330
      %s332 = sphi 0, %s330
      %s333 = sphi 0, %s332
      %s347 = sphi 0, %s333
    $region4: #{tpu_custom_call.1} parent=1 // loop_header_branch
      %27 = sbr.rel (%p25) target = $region8
    $region5: #{tpu_custom_call.1} parent=1 // loop_body
      %s29 = ssub.s32 %s24, 1
      %s30 = ssub.s32 %s24, 2
      %s31 = sadd.s32 %s24, 1
      %s33 = sadd.s32 %s32, 1
      %p36 = scmp.eq.s32.totalorder %s24, 1
      %p37 = scmp.ne.s32.totalorder %s32, %s34
      %p38 = scmp.eq.s32.totalorder %s24, 0
      %p39 = por %p37, %p38
      %p40 = scmp.ne.s32.totalorder %s32, %s34
      %p41 = scmp.eq.s32.totalorder %s29, 1
      %p42 = por %p40, %p41
      %p43 = scmp.ne.s32.totalorder %s34, %s35
      %p44 = scmp.eq.s32.totalorder %s29, 0
      %p45 = por %p43, %p44
      %p46 = scmp.ne.s32.totalorder %s34, %s35
      %p47 = scmp.eq.s32.totalorder %s30, 1
      %p48 = por %p46, %p47
      %p50 = scmp.ne.s32.totalorder %s35, %s49
      %p51 = scmp.eq.s32.totalorder %s30, 0
      %p52 = por %p50, %p51
      %s54 = sadd.s32 %s53, 1
      %p57 = scmp.eq.s32.totalorder %s24, 1
      %p58 = scmp.ne.s32.totalorder %s53, %s55
      %p59 = scmp.eq.s32.totalorder %s24, 0
      %p60 = por %p58, %p59
      %p61 = scmp.ne.s32.totalorder %s53, %s55
      %p62 = scmp.eq.s32.totalorder %s29, 1
      %p63 = por %p61, %p62
      %p64 = scmp.ne.s32.totalorder %s55, %s56
      %p65 = scmp.eq.s32.totalorder %s29, 0
      %p66 = por %p64, %p65
      %p67 = scmp.ne.s32.totalorder %s55, %s56
      %p68 = scmp.eq.s32.totalorder %s30, 1
      %p69 = por %p67, %p68
      %p71 = scmp.ne.s32.totalorder %s56, %s70
      %p72 = scmp.eq.s32.totalorder %s30, 0
      %p73 = por %p71, %p72
      %s75 = sadd.s32 %s74, 1
      %p78 = scmp.eq.s32.totalorder %s24, 1
      %p79 = scmp.ne.s32.totalorder %s74, %s76
      %p80 = scmp.eq.s32.totalorder %s24, 0
      %p81 = por %p79, %p80
      %p82 = scmp.ne.s32.totalorder %s74, %s76
      %p83 = scmp.eq.s32.totalorder %s29, 1
      %p84 = por %p82, %p83
      %p85 = scmp.ne.s32.totalorder %s76, %s77
      %p86 = scmp.eq.s32.totalorder %s29, 0
      %p87 = por %p85, %p86
      %p88 = scmp.ne.s32.totalorder %s76, %s77
      %p89 = scmp.eq.s32.totalorder %s30, 1
      %p90 = por %p88, %p89
      %p92 = scmp.ne.s32.totalorder %s77, %s91
      %p93 = scmp.eq.s32.totalorder %s30, 0
      %p94 = por %p92, %p93
      %s96 = sadd.s32 %s95, 1
      %p99 = scmp.eq.s32.totalorder %s24, 1
      %p100 = scmp.ne.s32.totalorder %s95, %s97
      %p101 = scmp.eq.s32.totalorder %s24, 0
      %p102 = por %p100, %p101
      %p103 = scmp.ne.s32.totalorder %s95, %s97
      %p104 = scmp.eq.s32.totalorder %s29, 1
      %p105 = por %p103, %p104
      %p106 = scmp.ne.s32.totalorder %s97, %s98
      %p107 = scmp.eq.s32.totalorder %s29, 0
      %p108 = por %p106, %p107
      %p109 = scmp.ne.s32.totalorder %s97, %s98
      %p110 = scmp.eq.s32.totalorder %s30, 1
      %p111 = por %p109, %p110
      %p113 = scmp.ne.s32.totalorder %s98, %s112
      %p114 = scmp.eq.s32.totalorder %s30, 0
      %p115 = por %p113, %p114
      %s117 = sadd.s32 %s116, 1
      %p120 = scmp.eq.s32.totalorder %s24, 1
      %p121 = scmp.ne.s32.totalorder %s116, %s118
      %p122 = scmp.eq.s32.totalorder %s24, 0
      %p123 = por %p121, %p122
      %p124 = scmp.ne.s32.totalorder %s116, %s118
      %p125 = scmp.eq.s32.totalorder %s29, 1
      %p126 = por %p124, %p125
      %p127 = scmp.ne.s32.totalorder %s118, %s119
      %p128 = scmp.eq.s32.totalorder %s29, 0
      %p129 = por %p127, %p128
      %p130 = scmp.ne.s32.totalorder %s118, %s119
      %p131 = scmp.eq.s32.totalorder %s30, 1
      %p132 = por %p130, %p131
      %p134 = scmp.ne.s32.totalorder %s119, %s133
      %p135 = scmp.eq.s32.totalorder %s30, 0
      %p136 = por %p134, %p135
      %s138 = sadd.s32 %s137, 1
      %p141 = scmp.eq.s32.totalorder %s24, 1
      %p142 = scmp.ne.s32.totalorder %s137, %s139
      %p143 = scmp.eq.s32.totalorder %s24, 0
      %p144 = por %p142, %p143
      %p145 = scmp.ne.s32.totalorder %s137, %s139
      %p146 = scmp.eq.s32.totalorder %s29, 1
      %p147 = por %p145, %p146
      %p148 = scmp.ne.s32.totalorder %s139, %s140
      %p149 = scmp.eq.s32.totalorder %s29, 0
      %p150 = por %p148, %p149
      %p151 = scmp.ne.s32.totalorder %s139, %s140
      %p152 = scmp.eq.s32.totalorder %s30, 1
      %p153 = por %p151, %p152
      %p155 = scmp.ne.s32.totalorder %s140, %s154
      %p156 = scmp.eq.s32.totalorder %s30, 0
      %p157 = por %p155, %p156
      %s159 = sadd.s32 %s158, 1
      %p162 = scmp.eq.s32.totalorder %s24, 1
      %p163 = scmp.ne.s32.totalorder %s158, %s160
      %p164 = scmp.eq.s32.totalorder %s24, 0
      %p165 = por %p163, %p164
      %p166 = scmp.ne.s32.totalorder %s158, %s160
      %p167 = scmp.eq.s32.totalorder %s29, 1
      %p168 = por %p166, %p167
      %p169 = scmp.ne.s32.totalorder %s160, %s161
      %p170 = scmp.eq.s32.totalorder %s29, 0
      %p171 = por %p169, %p170
      %p172 = scmp.ne.s32.totalorder %s160, %s161
      %p173 = scmp.eq.s32.totalorder %s30, 1
      %p174 = por %p172, %p173
      %p176 = scmp.ne.s32.totalorder %s161, %s175
      %p177 = scmp.eq.s32.totalorder %s30, 0
      %p178 = por %p176, %p177
      %s180 = sadd.s32 %s179, 1
      %p183 = scmp.eq.s32.totalorder %s24, 1
      %p184 = scmp.ne.s32.totalorder %s179, %s181
      %p185 = scmp.eq.s32.totalorder %s24, 0
      %p186 = por %p184, %p185
      %p187 = scmp.ne.s32.totalorder %s179, %s181
      %p188 = scmp.eq.s32.totalorder %s29, 1
      %p189 = por %p187, %p188
      %p190 = scmp.ne.s32.totalorder %s181, %s182
      %p191 = scmp.eq.s32.totalorder %s29, 0
      %p192 = por %p190, %p191
      %p193 = scmp.ne.s32.totalorder %s181, %s182
      %p194 = scmp.eq.s32.totalorder %s30, 1
      %p195 = por %p193, %p194
      %p197 = scmp.ne.s32.totalorder %s182, %s196
      %p198 = scmp.eq.s32.totalorder %s30, 0
      %p199 = por %p197, %p198
      %s200 = ssub.s32 %s24, %s31
      %p201 = scmp.eq.s32.totalorder %s200, 0
      %s203 = sadd.s32 %s202, 1
      %s204 = scalar_select %p201, %s202, %s203
      %p207 = pneg %p201
      %p208 = scmp.eq.s32.totalorder %s24, 1
      %p209 = por %p207, %p208
      %p210 = scmp.ne.s32.totalorder %s202, %s205
      %p211 = scmp.eq.s32.totalorder %s24, 0
      %p212 = por %p210, %p211
      %p213 = scmp.ne.s32.totalorder %s202, %s205
      %p214 = scmp.eq.s32.totalorder %s29, 1
      %p215 = por %p213, %p214
      %p216 = scmp.ne.s32.totalorder %s205, %s206
      %p217 = scmp.eq.s32.totalorder %s29, 0
      %p218 = por %p216, %p217
      %p219 = scmp.ne.s32.totalorder %s205, %s206
      %p220 = scmp.eq.s32.totalorder %s30, 1
      %p221 = por %p219, %p220
      %p223 = scmp.ne.s32.totalorder %s206, %s222
      %p224 = scmp.eq.s32.totalorder %s30, 0
      %p225 = por %p223, %p224
      %s226 = ssub.s32 %s24, %s31
      %p227 = scmp.eq.s32.totalorder %s226, 0
      %s229 = sadd.s32 %s228, 1
      %s230 = scalar_select %p227, %s228, %s229
      %p233 = pneg %p227
      %p234 = scmp.eq.s32.totalorder %s24, 1
      %p235 = por %p233, %p234
      %p236 = scmp.ne.s32.totalorder %s228, %s231
      %p237 = scmp.eq.s32.totalorder %s24, 0
      %p238 = por %p236, %p237
      %p239 = scmp.ne.s32.totalorder %s228, %s231
      %p240 = scmp.eq.s32.totalorder %s29, 1
      %p241 = por %p239, %p240
      %p242 = scmp.ne.s32.totalorder %s231, %s232
      %p243 = scmp.eq.s32.totalorder %s29, 0
      %p244 = por %p242, %p243
      %p245 = scmp.ne.s32.totalorder %s231, %s232
      %p246 = scmp.eq.s32.totalorder %s30, 1
      %p247 = por %p245, %p246
      %p249 = scmp.ne.s32.totalorder %s232, %s248
      %p250 = scmp.eq.s32.totalorder %s30, 0
      %p251 = por %p249, %p250
      %s252 = ssub.s32 %s24, %s31
      %p253 = scmp.eq.s32.totalorder %s252, 0
      %s255 = sadd.s32 %s254, 1
      %s256 = scalar_select %p253, %s254, %s255
      %p259 = pneg %p253
      %p260 = scmp.eq.s32.totalorder %s24, 1
      %p261 = por %p259, %p260
      %p262 = scmp.ne.s32.totalorder %s254, %s257
      %p263 = scmp.eq.s32.totalorder %s24, 0
      %p264 = por %p262, %p263
      %p265 = scmp.ne.s32.totalorder %s254, %s257
      %p266 = scmp.eq.s32.totalorder %s29, 1
      %p267 = por %p265, %p266
      %p268 = scmp.ne.s32.totalorder %s257, %s258
      %p269 = scmp.eq.s32.totalorder %s29, 0
      %p270 = por %p268, %p269
      %p271 = scmp.ne.s32.totalorder %s257, %s258
      %p272 = scmp.eq.s32.totalorder %s30, 1
      %p273 = por %p271, %p272
      %p275 = scmp.ne.s32.totalorder %s258, %s274
      %p276 = scmp.eq.s32.totalorder %s30, 0
      %p277 = por %p275, %p276
      %s278 = ssub.s32 %s24, %s31
      %p279 = scmp.eq.s32.totalorder %s278, 0
      %s281 = sadd.s32 %s280, 1
      %s282 = scalar_select %p279, %s280, %s281
      %p285 = pneg %p279
      %p286 = scmp.eq.s32.totalorder %s24, 1
      %p287 = por %p285, %p286
      %p288 = scmp.ne.s32.totalorder %s280, %s283
      %p289 = scmp.eq.s32.totalorder %s24, 0
      %p290 = por %p288, %p289
      %p291 = scmp.ne.s32.totalorder %s280, %s283
      %p292 = scmp.eq.s32.totalorder %s29, 1
      %p293 = por %p291, %p292
      %p294 = scmp.ne.s32.totalorder %s283, %s284
      %p295 = scmp.eq.s32.totalorder %s29, 0
      %p296 = por %p294, %p295
      %p297 = scmp.ne.s32.totalorder %s283, %s284
      %p298 = scmp.eq.s32.totalorder %s30, 1
      %p299 = por %p297, %p298
      %p301 = scmp.ne.s32.totalorder %s284, %s300
      %p302 = scmp.eq.s32.totalorder %s30, 0
      %p303 = por %p301, %p302
      %s304 = ssub.s32 %s24, %s31
      %p305 = scmp.eq.s32.totalorder %s304, 0
      %s307 = sadd.s32 %s306, 1
      %s308 = scalar_select %p305, %s306, %s307
      %p311 = pneg %p305
      %p312 = scmp.eq.s32.totalorder %s24, 1
      %p313 = por %p311, %p312
      %p314 = scmp.ne.s32.totalorder %s306, %s309
      %p315 = scmp.eq.s32.totalorder %s24, 0
      %p316 = por %p314, %p315
      %p317 = scmp.ne.s32.totalorder %s306, %s309
      %p318 = scmp.eq.s32.totalorder %s29, 1
      %p319 = por %p317, %p318
      %p320 = scmp.ne.s32.totalorder %s309, %s310
      %p321 = scmp.eq.s32.totalorder %s29, 0
      %p322 = por %p320, %p321
      %p323 = scmp.ne.s32.totalorder %s309, %s310
      %p324 = scmp.eq.s32.totalorder %s30, 1
      %p325 = por %p323, %p324
      %p327 = scmp.ne.s32.totalorder %s310, %s326
      %p328 = scmp.eq.s32.totalorder %s30, 0
      %p329 = por %p327, %p328
      %s331 = sadd.s32 %s330, 1
      %p334 = scmp.eq.s32.totalorder %s24, 1
      %p335 = scmp.ne.s32.totalorder %s330, %s332
      %p336 = scmp.eq.s32.totalorder %s24, 0
      %p337 = por %p335, %p336
      %p338 = scmp.ne.s32.totalorder %s330, %s332
      %p339 = scmp.eq.s32.totalorder %s29, 1
      %p340 = por %p338, %p339
      %p341 = scmp.ne.s32.totalorder %s332, %s333
      %p342 = scmp.eq.s32.totalorder %s29, 0
      %p343 = por %p341, %p342
      %p344 = scmp.ne.s32.totalorder %s332, %s333
      %p345 = scmp.eq.s32.totalorder %s30, 1
      %p346 = por %p344, %p345
      %p348 = scmp.ne.s32.totalorder %s333, %s347
      %p349 = scmp.eq.s32.totalorder %s30, 0
      %p350 = por %p348, %p349
      %p351 = scmp.le.s32.totalorder 1, %s24
      %p352 = scmp.lt.s32.totalorder %s24, 3
      %p353 = pnand %p351, %p352
      %p354 = pneg %p353
      // Predicated region
      $region9: #{tpu_custom_call.1} parent=5 // pred_check
        _
      $region10: #{tpu_custom_call.1} parent=5 // pred_check_branch
        %356 = sbr.rel (%p353) target = $region12
      $region11: #{tpu_custom_call.1} parent=5 // pred_region
        %s357 = ssub.s32 %s24, 1
        // Predicated region
        $region13: #{tpu_custom_call.1} parent=11 // pred_check
          %p358 = pneg %p45
        $region14: #{tpu_custom_call.1} parent=11 // pred_check_branch
          %360 = sbr.rel (%p358) target = $region16
        $region15: #{tpu_custom_call.1} parent=11 // pred_region
          %362 = vsyncadd [#allocation4], 0
          %s363 = sshll.u32 %s0, 4
          %s364 = int_to_ptr.hbm [resolvable:$true] %s363
          %s365 = sshll.u32 [#allocation3], 4
          %s366 = int_to_ptr.vmem [resolvable:$true] %s365
          %371 = dma.hbm_to_vmem [thread:$0]  %s364, 512, %s366, [#allocation4], 128, 128, 8
        $region16: #{tpu_custom_call.1} parent=11 // pred_fallthru
          _
        // Predicated region
        $region17: #{tpu_custom_call.1} parent=11 // pred_check
          %p372 = pneg %p66
        $region18: #{tpu_custom_call.1} parent=11 // pred_check_branch
          %374 = sbr.rel (%p372) target = $region20
        $region19: #{tpu_custom_call.1} parent=11 // pred_region
          %376 = vsyncadd [#allocation7], 0
          %s377 = sshll.u32 %s1, 4
          %s378 = int_to_ptr.hbm [resolvable:$true] %s377
          %s379 = sshll.u32 [#allocation6], 4
          %s380 = int_to_ptr.vmem [resolvable:$true] %s379
          %385 = dma.hbm_to_vmem [thread:$0]  %s378, 3072, %s380, [#allocation7], 128, 128, 8
        $region20: #{tpu_custom_call.1} parent=11 // pred_fallthru
          _
        // Predicated region
        $region21: #{tpu_custom_call.1} parent=11 // pred_check
          %p386 = pneg %p87
        $region22: #{tpu_custom_call.1} parent=11 // pred_check_branch
          %388 = sbr.rel (%p386) target = $region24
        $region23: #{tpu_custom_call.1} parent=11 // pred_region
          _
        $region24: #{tpu_custom_call.1} parent=11 // pred_fallthru
          _
        // Predicated region
        $region25: #{tpu_custom_call.1} parent=11 // pred_check
          %p389 = pneg %p108
        $region26: #{tpu_custom_call.1} parent=11 // pred_check_branch
          %391 = sbr.rel (%p389) target = $region28
        $region27: #{tpu_custom_call.1} parent=11 // pred_region
          %393 = vsyncadd [#allocation7], 0
          %s394 = sshll.u32 %s3, 4
          %s395 = int_to_ptr.hbm [resolvable:$true] %s394
          %s396 = sshll.u32 [#allocation8], 4
          %s397 = int_to_ptr.vmem [resolvable:$true] %s396
          %402 = dma.hbm_to_vmem [thread:$0]  %s395, 6144, %s397, [#allocation7], 256, 256, 16
        $region28: #{tpu_custom_call.1} parent=11 // pred_fallthru
          _
        // Predicated region
        $region29: #{tpu_custom_call.1} parent=11 // pred_check
          %p403 = pneg %p129
        $region30: #{tpu_custom_call.1} parent=11 // pred_check_branch
          %405 = sbr.rel (%p403) target = $region32
        $region31: #{tpu_custom_call.1} parent=11 // pred_region
          %407 = vsyncadd [#allocation10], 0
          %s408 = sshll.u32 %s4, 4
          %s409 = int_to_ptr.hbm [resolvable:$true] %s408
          %s410 = sshll.u32 [#allocation9], 4
          %s411 = int_to_ptr.vmem [resolvable:$true] %s410
          %416 = dma.hbm_to_vmem [thread:$0]  %s409, 1024, %s411, [#allocation10], 256, 256, 16
        $region32: #{tpu_custom_call.1} parent=11 // pred_fallthru
          _
        // Predicated region
        $region33: #{tpu_custom_call.1} parent=11 // pred_check
          %p417 = pneg %p150
        $region34: #{tpu_custom_call.1} parent=11 // pred_check_branch
          %419 = sbr.rel (%p417) target = $region36
        $region35: #{tpu_custom_call.1} parent=11 // pred_region
          _
        $region36: #{tpu_custom_call.1} parent=11 // pred_fallthru
          _
        // Predicated region
        $region37: #{tpu_custom_call.1} parent=11 // pred_check
          %p420 = pneg %p171
        $region38: #{tpu_custom_call.1} parent=11 // pred_check_branch
          %422 = sbr.rel (%p420) target = $region40
        $region39: #{tpu_custom_call.1} parent=11 // pred_region
          %424 = vsyncadd [#allocation10], 0
          %s425 = sshll.u32 %s6, 4
          %s426 = int_to_ptr.hbm [resolvable:$true] %s425
          %s427 = sshll.u32 [#allocation11], 4
          %s428 = int_to_ptr.vmem [resolvable:$true] %s427
          %433 = dma.hbm_to_vmem [thread:$0]  %s426, 2048, %s428, [#allocation10], 128, 128, 8
        $region40: #{tpu_custom_call.1} parent=11 // pred_fallthru
          _
        // Predicated region
        $region41: #{tpu_custom_call.1} parent=11 // pred_check
          %p434 = pneg %p192
        $region42: #{tpu_custom_call.1} parent=11 // pred_check_branch
          %436 = sbr.rel (%p434) target = $region44
        $region43: #{tpu_custom_call.1} parent=11 // pred_region
          %438 = vsyncadd [#allocation13], 0
          %s439 = sshll.u32 %s7, 4
          %s440 = int_to_ptr.hbm [resolvable:$true] %s439
          %s441 = sshll.u32 [#allocation12], 4
          %s442 = int_to_ptr.vmem [resolvable:$true] %s441
          %447 = dma.hbm_to_vmem [thread:$0]  %s440, 2048, %s442, [#allocation13], 128, 128, 8
        $region44: #{tpu_custom_call.1} parent=11 // pred_fallthru
          _
      $region12: #{tpu_custom_call.1} parent=5 // pred_fallthru
        _
      %p448 = scmp.lt.s32.totalorder %s24, 2
      // Predicated region
      $region45: #{tpu_custom_call.1} parent=5 // pred_check
        %p449 = pneg %p448
      $region46: #{tpu_custom_call.1} parent=5 // pred_check_branch
        %451 = sbr.rel (%p449) target = $region48
      $region47: #{tpu_custom_call.1} parent=5 // pred_region
        // Predicated region
        $region49: #{tpu_custom_call.1} parent=47 // pred_check
          %p452 = pneg %p212
        $region50: #{tpu_custom_call.1} parent=47 // pred_check_branch
          %454 = sbr.rel (%p452) target = $region52
        $region51: #{tpu_custom_call.1} parent=47 // pred_region
          %s455 = sand.u32 %s24, 1
          %s456 = scalar_lea.sflag [#allocation4], %s455
          %s457 = sand.u32 %s202, 1
          %s458 = smul.addr %s457, 384
          %s459 = scalar_lea.vmem [#allocation14], %s458
          %461 = vsyncadd %s456, 0
          %s462 = smul.addr %s24, 48
          %s463 = smul.addr %s462, 8
          %s464 = scalar_lea.hbm %s8, %s463
          %s465 = sshll.u32 %s464, 4
          %s466 = int_to_ptr.hbm [resolvable:$true] %s465
          %s467 = sshll.u32 %s459, 4
          %s468 = int_to_ptr.vmem [resolvable:$true] %s467
          %473 = dma.hbm_to_vmem [thread:$0]  %s466, 6144, %s468, %s456, 384, 384, 24
        $region52: #{tpu_custom_call.1} parent=47 // pred_fallthru
          _
        // Predicated region
        $region53: #{tpu_custom_call.1} parent=47 // pred_check
          %p474 = pneg %p238
        $region54: #{tpu_custom_call.1} parent=47 // pred_check_branch
          %476 = sbr.rel (%p474) target = $region56
        $region55: #{tpu_custom_call.1} parent=47 // pred_region
          %p477 = scmp.lt.s32.totalorder %s24, 1
          %s478 = scalar_select %p477, %s24, 1
          %s479 = smul.addr %s478, 16
          %s480 = smul.addr %s479, 8
          %s481 = scalar_lea.vmem %s9, %s480
        $region56: #{tpu_custom_call.1} parent=47 // pred_fallthru
          _
        // Predicated region
        $region57: #{tpu_custom_call.1} parent=47 // pred_check
          %p482 = pneg %p264
        $region58: #{tpu_custom_call.1} parent=47 // pred_check_branch
          %484 = sbr.rel (%p482) target = $region60
        $region59: #{tpu_custom_call.1} parent=47 // pred_region
          %s485 = sand.u32 %s24, 1
          %s486 = scalar_lea.sflag [#allocation4], %s485
          %s487 = sand.u32 %s254, 1
          %s488 = smul.addr %s487, 256
          %s489 = scalar_lea.vmem [#allocation15], %s488
          %491 = vsyncadd %s486, 0
          %s492 = smul.addr %s24, 32
          %s493 = smul.addr %s492, 8
          %s494 = scalar_lea.hbm %s10, %s493
          %s495 = sshll.u32 %s494, 4
          %s496 = int_to_ptr.hbm [resolvable:$true] %s495
          %s497 = sshll.u32 %s489, 4
          %s498 = int_to_ptr.vmem [resolvable:$true] %s497
          %503 = dma.hbm_to_vmem [thread:$0]  %s496, 4096, %s498, %s486, 256, 256, 16
        $region60: #{tpu_custom_call.1} parent=47 // pred_fallthru
          _
        // Predicated region
        $region61: #{tpu_custom_call.1} parent=47 // pred_check
          %p504 = pneg %p290
        $region62: #{tpu_custom_call.1} parent=47 // pred_check_branch
          %506 = sbr.rel (%p504) target = $region64
        $region63: #{tpu_custom_call.1} parent=47 // pred_region
          %s507 = sand.u32 %s24, 1
          %s508 = scalar_lea.sflag [#allocation4], %s507
          %s509 = sand.u32 %s280, 1
          %s510 = smul.addr %s509, 256
          %s511 = scalar_lea.vmem [#allocation16], %s510
          %513 = vsyncadd %s508, 0
          %s514 = smul.addr %s24, 32
          %s515 = smul.addr %s514, 8
          %s516 = scalar_lea.hbm %s11, %s515
          %s517 = sshll.u32 %s516, 4
          %s518 = int_to_ptr.hbm [resolvable:$true] %s517
          %s519 = sshll.u32 %s511, 4
          %s520 = int_to_ptr.vmem [resolvable:$true] %s519
          %525 = dma.hbm_to_vmem [thread:$0]  %s518, 4096, %s520, %s508, 128, 128, 8
        $region64: #{tpu_custom_call.1} parent=47 // pred_fallthru
          _
        // Predicated region
        $region65: #{tpu_custom_call.1} parent=47 // pred_check
          %p526 = pneg %p316
        $region66: #{tpu_custom_call.1} parent=47 // pred_check_branch
          %528 = sbr.rel (%p526) target = $region68
        $region67: #{tpu_custom_call.1} parent=47 // pred_region
          %s529 = sand.u32 %s24, 1
          %s530 = scalar_lea.sflag [#allocation4], %s529
          %s531 = sand.u32 %s306, 1
          %s532 = smul.addr %s531, 16
          %s533 = scalar_lea.vmem [#allocation17], %s532
          %535 = vsyncadd %s530, 0
          %s536 = smul.addr %s24, 2
          %s537 = smul.addr %s536, 8
          %s538 = scalar_lea.hbm %s12, %s537
          %s540 = sshll.u32 %s538, 4
          %s541 = int_to_ptr.hbm [resolvable:$true] %s540
          %s542 = sshll.u32 %s533, 4
          %s543 = int_to_ptr.vmem [resolvable:$true] %s542
          %545 = dma.hbm_to_vmem [thread:$0]  %s541, 256, %s543, %s530
        $region68: #{tpu_custom_call.1} parent=47 // pred_fallthru
          _
      $region48: #{tpu_custom_call.1} parent=5 // pred_fallthru
        _
      %p546 = scmp.le.s32.totalorder 1, %s24
      %p547 = scmp.lt.s32.totalorder %s24, 3
      %p548 = pnand %p546, %p547
      %p549 = pneg %p548
      // Predicated region
      $region69: #{tpu_custom_call.1} parent=5 // pred_check
        _
      $region70: #{tpu_custom_call.1} parent=5 // pred_check_branch
        %551 = sbr.rel (%p548) target = $region72
      $region71: #{tpu_custom_call.1} parent=5 // pred_region
        %s552 = ssub.s32 %s24, 1
        // Predicated region
        $region73: #{tpu_custom_call.1} parent=71 // pred_check
          %p553 = pneg %p45
        $region74: #{tpu_custom_call.1} parent=71 // pred_check_branch
          %555 = sbr.rel (%p553) target = $region76
        $region75: #{tpu_custom_call.1} parent=71 // pred_region
          %557 = dma.done [#allocation4], 512
        $region76: #{tpu_custom_call.1} parent=71 // pred_fallthru
          _
        // Predicated region
        $region77: #{tpu_custom_call.1} parent=71 // pred_check
          %p558 = pneg %p66
        $region78: #{tpu_custom_call.1} parent=71 // pred_check_branch
          %560 = sbr.rel (%p558) target = $region80
        $region79: #{tpu_custom_call.1} parent=71 // pred_region
          %562 = dma.done [#allocation7], 3072
        $region80: #{tpu_custom_call.1} parent=71 // pred_fallthru
          _
        // Predicated region
        $region81: #{tpu_custom_call.1} parent=71 // pred_check
          %p563 = pneg %p108
        $region82: #{tpu_custom_call.1} parent=71 // pred_check_branch
          %565 = sbr.rel (%p563) target = $region84
        $region83: #{tpu_custom_call.1} parent=71 // pred_region
          %567 = dma.done [#allocation7], 6144
        $region84: #{tpu_custom_call.1} parent=71 // pred_fallthru
          _
        // Predicated region
        $region85: #{tpu_custom_call.1} parent=71 // pred_check
          %p568 = pneg %p129
        $region86: #{tpu_custom_call.1} parent=71 // pred_check_branch
          %570 = sbr.rel (%p568) target = $region88
        $region87: #{tpu_custom_call.1} parent=71 // pred_region
          %572 = dma.done [#allocation10], 1024
        $region88: #{tpu_custom_call.1} parent=71 // pred_fallthru
          _
        // Predicated region
        $region89: #{tpu_custom_call.1} parent=71 // pred_check
          %p573 = pneg %p171
        $region90: #{tpu_custom_call.1} parent=71 // pred_check_branch
          %575 = sbr.rel (%p573) target = $region92
        $region91: #{tpu_custom_call.1} parent=71 // pred_region
          %577 = dma.done [#allocation10], 2048
        $region92: #{tpu_custom_call.1} parent=71 // pred_fallthru
          _
        // Predicated region
        $region93: #{tpu_custom_call.1} parent=71 // pred_check
          %p578 = pneg %p192
        $region94: #{tpu_custom_call.1} parent=71 // pred_check_branch
          %580 = sbr.rel (%p578) target = $region96
        $region95: #{tpu_custom_call.1} parent=71 // pred_region
          %582 = dma.done [#allocation13], 2048
        $region96: #{tpu_custom_call.1} parent=71 // pred_fallthru
          _
        %s583 = sand.u32 %s29, 1
        %s584 = scalar_lea.sflag [#allocation4], %s583
        %s585 = sand.u32 %s205, 1
        %s586 = smul.addr %s585, 384
        %s587 = scalar_lea.vmem [#allocation14], %s586
        // Predicated region
        $region97: #{tpu_custom_call.1} parent=71 // pred_check
          %p588 = pneg %p218
        $region98: #{tpu_custom_call.1} parent=71 // pred_check_branch
          %590 = sbr.rel (%p588) target = $region100
        $region99: #{tpu_custom_call.1} parent=71 // pred_region
          %592 = dma.done %s584, 6144
        $region100: #{tpu_custom_call.1} parent=71 // pred_fallthru
          _
        %s593 = sand.u32 %s29, 1
        %s594 = scalar_lea.sflag [#allocation4], %s593
        %s595 = sand.u32 %s257, 1
        %s596 = smul.addr %s595, 256
        %s597 = scalar_lea.vmem [#allocation15], %s596
        // Predicated region
        $region101: #{tpu_custom_call.1} parent=71 // pred_check
          %p598 = pneg %p270
        $region102: #{tpu_custom_call.1} parent=71 // pred_check_branch
          %600 = sbr.rel (%p598) target = $region104
        $region103: #{tpu_custom_call.1} parent=71 // pred_region
          %602 = dma.done %s594, 4096
        $region104: #{tpu_custom_call.1} parent=71 // pred_fallthru
          _
        %s603 = sand.u32 %s29, 1
        %s604 = scalar_lea.sflag [#allocation4], %s603
        %s605 = sand.u32 %s283, 1
        %s606 = smul.addr %s605, 256
        %s607 = scalar_lea.vmem [#allocation16], %s606
        // Predicated region
        $region105: #{tpu_custom_call.1} parent=71 // pred_check
          %p608 = pneg %p296
        $region106: #{tpu_custom_call.1} parent=71 // pred_check_branch
          %610 = sbr.rel (%p608) target = $region108
        $region107: #{tpu_custom_call.1} parent=71 // pred_region
          %612 = dma.done %s604, 4096
        $region108: #{tpu_custom_call.1} parent=71 // pred_fallthru
          _
        %s613 = sand.u32 %s29, 1
        %s614 = scalar_lea.sflag [#allocation4], %s613
        %s615 = sand.u32 %s309, 1
        %s616 = smul.addr %s615, 16
        %s617 = scalar_lea.vmem [#allocation17], %s616
        // Predicated region
        $region109: #{tpu_custom_call.1} parent=71 // pred_check
          %p618 = pneg %p322
        $region110: #{tpu_custom_call.1} parent=71 // pred_check_branch
          %620 = sbr.rel (%p618) target = $region112
        $region111: #{tpu_custom_call.1} parent=71 // pred_region
          %622 = dma.done %s614, 256
        $region112: #{tpu_custom_call.1} parent=71 // pred_fallthru
          _
        %p623 = pneg %p45
        %p624 = pneg %p42
        %p625 = pneg %p66
        %p626 = pneg %p63
        %p627 = pneg %p87
        %p628 = pneg %p84
        %p629 = pneg %p108
        %p630 = pneg %p105
        %p631 = pneg %p129
        %p632 = pneg %p126
        %p633 = pneg %p150
        %p634 = pneg %p147
        %p635 = pneg %p171
        %p636 = pneg %p168
        %p637 = pneg %p192
        %p638 = pneg %p189
        %s639 = sand.u32 %s29, 1
        %s640 = scalar_lea.sflag [#allocation4], %s639
        %s641 = sand.u32 %s205, 1
        %s642 = smul.addr %s641, 384
        %s643 = scalar_lea.vmem [#allocation14], %s642
        %p644 = pneg %p218
        %p645 = pneg %p215
        %p646 = scmp.lt.s32.totalorder %s29, 1
        %s647 = scalar_select %p646, %s29, 1
        %s648 = smul.addr %s647, 16
        %s649 = smul.addr %s648, 8
        %s650 = scalar_lea.vmem %s9, %s649
        %p651 = pneg %p244
        %p652 = pneg %p241
        %s653 = sand.u32 %s29, 1
        %s654 = scalar_lea.sflag [#allocation4], %s653
        %s655 = sand.u32 %s257, 1
        %s656 = smul.addr %s655, 256
        %s657 = scalar_lea.vmem [#allocation15], %s656
        %p658 = pneg %p270
        %p659 = pneg %p267
        %s660 = sand.u32 %s29, 1
        %s661 = scalar_lea.sflag [#allocation4], %s660
        %s662 = sand.u32 %s283, 1
        %s663 = smul.addr %s662, 256
        %s664 = scalar_lea.vmem [#allocation16], %s663
        %p665 = pneg %p296
        %p666 = pneg %p293
        %s667 = sand.u32 %s29, 1
        %s668 = scalar_lea.sflag [#allocation4], %s667
        %s669 = sand.u32 %s309, 1
        %s670 = smul.addr %s669, 16
        %s671 = scalar_lea.vmem [#allocation17], %s670
        %p672 = pneg %p322
        %p673 = pneg %p319
        %p674 = pneg %p343
        %p675 = pneg %p340
        %p676 = scmp.lt.s32.totalorder %s29, 1
        %s677 = scalar_select %p676, %s29, 1
        %s678 = smul.addr %s677, 16
        %s679 = smul.addr %s678, 8
        %s680 = scalar_lea.vmem %s9, %s679
        %v681 = vlaneseq
        %v682 = vand.u32 %v681, 127
        %vm683 = vcmp.lt.s32.totalorder %v682, 48
        %v684 = vld [vmem:[%s5] sm:$0xff]
        %p685 = scmp.eq.s32.totalorder %s29, 0
        // Predicated region
        $region113: #{tpu_custom_call.1} parent=71 // pred_check
          %p686 = pneg %p685
        $region114: #{tpu_custom_call.1} parent=71 // pred_check_branch
          %688 = sbr.rel (%p686) target = $region116
        $region115: #{tpu_custom_call.1} parent=71 // pred_region
          %v689 = vld [vmem:[#allocation3] sm:$0xff]
          %v690 = vld [vmem:[#allocation3 + $0x8] sm:$0xff]
          %v691 = vld [vmem:[#allocation3 + $0x10] sm:$0xff]
          %v692 = vld [vmem:[#allocation3 + $0x18] sm:$0xff]
          %v693 = vsel %vm683, 1, 0
          %vm694 = vcmp.eq.s32.totalorder %v693, 1
          %v695 = vsel %vm694, %v689, 0.0
          %v696 = vsel %vm694, %v690, 0.0
          %v697 = vsel %vm694, %v691, 0.0
          %v698 = vsel %vm694, %v692, 0.0
          %699 = vadd.xlane.f32.xlu0 %v695
          %v700 = vpop.xlane.xlu0 %699
          %701 = vadd.xlane.f32.xlu0 %v696
          %v702 = vpop.xlane.xlu0 %701
          %703 = vadd.xlane.f32.xlu0 %v697
          %v704 = vpop.xlane.xlu0 %703
          %705 = vadd.xlane.f32.xlu0 %v698
          %v706 = vpop.xlane.xlu0 %705
          %v707 = vmul.f32 %v700, 0.020833334
          %v708 = vmul.f32 %v702, 0.020833334
          %v709 = vmul.f32 %v704, 0.020833334
          %v710 = vmul.f32 %v706, 0.020833334
          %v711 = vsub.f32 %v689, %v707
          %v712 = vsub.f32 %v690, %v708
          %v713 = vsub.f32 %v691, %v709
          %v714 = vsub.f32 %v692, %v710
          %v715 = vsel %vm694, %v711, 0.0
          %v716 = vsel %vm694, %v712, 0.0
          %v717 = vsel %vm694, %v713, 0.0
          %v718 = vsel %vm694, %v714, 0.0
          %v719 = vmul.f32 %v715, %v715
          %v720 = vmul.f32 %v716, %v716
          %v721 = vmul.f32 %v717, %v717
          %v722 = vmul.f32 %v718, %v718
          %723 = vadd.xlane.f32.xlu0 %v719
          %v724 = vpop.xlane.xlu0 %723
          %725 = vadd.xlane.f32.xlu0 %v720
          %v726 = vpop.xlane.xlu0 %725
          %727 = vadd.xlane.f32.xlu0 %v721
          %v728 = vpop.xlane.xlu0 %727
          %729 = vadd.xlane.f32.xlu0 %v722
          %v730 = vpop.xlane.xlu0 %729
          %v731 = vmul.f32 %v724, 0.020833334
          %v732 = vmul.f32 %v726, 0.020833334
          %v733 = vmul.f32 %v728, 0.020833334
          %v734 = vmul.f32 %v730, 0.020833334
          %v735 = vadd.f32 %v731, 1e-05
          %v736 = vadd.f32 %v732, 1e-05
          %v737 = vadd.f32 %v733, 1e-05
          %v738 = vadd.f32 %v734, 1e-05
          %v739 = vrsqrt.pop %v735
          %v740 = vmul.f32 %v739, %v735
          %v741 = vmul.f32 %v740, %v739
          %v742 = vmul.f32 0.5, %v741
          %v743 = vsub.f32 1.5, %v742
          %v744 = vmul.f32 %v739, %v743
          %vm745 = vweird.f32 %v735
          %vm746 = vweird.f32 %v739
          %vm747 = vmor %vm745, %vm746
          %v748 = vsel %vm747, %v739, %v744
          %v749 = vrsqrt.pop %v736
          %v750 = vmul.f32 %v749, %v736
          %v751 = vmul.f32 %v750, %v749
          %v752 = vmul.f32 0.5, %v751
          %v753 = vsub.f32 1.5, %v752
          %v754 = vmul.f32 %v749, %v753
          %vm755 = vweird.f32 %v736
          %vm756 = vweird.f32 %v749
          %vm757 = vmor %vm755, %vm756
          %v758 = vsel %vm757, %v749, %v754
          %v759 = vrsqrt.pop %v737
          %v760 = vmul.f32 %v759, %v737
          %v761 = vmul.f32 %v760, %v759
          %v762 = vmul.f32 0.5, %v761
          %v763 = vsub.f32 1.5, %v762
          %v764 = vmul.f32 %v759, %v763
          %vm765 = vweird.f32 %v737
          %vm766 = vweird.f32 %v759
          %vm767 = vmor %vm765, %vm766
          %v768 = vsel %vm767, %v759, %v764
          %v769 = vrsqrt.pop %v738
          %v770 = vmul.f32 %v769, %v738
          %v771 = vmul.f32 %v770, %v769
          %v772 = vmul.f32 0.5, %v771
          %v773 = vsub.f32 1.5, %v772
          %v774 = vmul.f32 %v769, %v773
          %vm775 = vweird.f32 %v738
          %vm776 = vweird.f32 %v769
          %vm777 = vmor %vm775, %vm776
          %v778 = vsel %vm777, %v769, %v774
          %v779 = vmul.f32 %v715, %v748
          %v780 = vmul.f32 %v716, %v758
          %v781 = vmul.f32 %v717, %v768
          %v782 = vmul.f32 %v718, %v778
          %v783 = vperm.slane %v684, 0
          %v784 = vmul.f32 %v779, %v783
          %v785 = vmul.f32 %v780, %v783
          %v786 = vmul.f32 %v781, %v783
          %v787 = vmul.f32 %v782, %v783
          %v788 = vperm.slane %v684, 1
          %v789 = vadd.f32 %v784, %v788
          %v790 = vadd.f32 %v785, %v788
          %v791 = vadd.f32 %v786, %v788
          %v792 = vadd.f32 %v787, %v788
          %v793 = vld [vmem:[#allocation11] sm:$0xff]
          %v794 = vld [vmem:[#allocation11 + $0x8] sm:$0xff]
          %v795 = vld [vmem:[#allocation11 + $0x10] sm:$0xff]
          %v796 = vld [vmem:[#allocation11 + $0x18] sm:$0xff]
          %v797 = vld [vmem:[#allocation11 + $0x20] sm:$0xff]
          %v798 = vld [vmem:[#allocation11 + $0x28] sm:$0xff]
          %v799 = vld [vmem:[#allocation11 + $0x30] sm:$0xff]
          %v800 = vld [vmem:[#allocation11 + $0x38] sm:$0xff]
          %v801 = vld [vmem:[#allocation11 + $0x40] sm:$0xff]
          %v802 = vld [vmem:[#allocation11 + $0x48] sm:$0xff]
          %v803 = vld [vmem:[#allocation11 + $0x50] sm:$0xff]
          %v804 = vld [vmem:[#allocation11 + $0x58] sm:$0xff]
          %v805 = vld [vmem:[#allocation11 + $0x60] sm:$0xff]
          %v806 = vld [vmem:[#allocation11 + $0x68] sm:$0xff]
          %v807 = vld [vmem:[#allocation11 + $0x70] sm:$0xff]
          %v808 = vld [vmem:[#allocation11 + $0x78] sm:$0xff]
          %v809 = vperm.slane %v684, 2
          %810 = vmatpush.msra.mxu0 %v808
          %811 = vmatpush.msra.mxu0 %v807
          %812 = vmatpush.msra.mxu0 %v806
          %813 = vmatpush.msra.mxu0 %v805
          %814 = vmatpush.msra.mxu0 %v804
          %815 = vmatpush.msra.mxu0 %v803
          %816 = vmatpush.msra.mxu0 %v802
          %817 = vmatpush.msra.mxu0 %v801
          %818 = vmatpush.msra.mxu0 %v800
          %819 = vmatpush.msra.mxu0 %v799
          %820 = vmatpush.msra.mxu0 %v798
          %821 = vmatpush.msra.mxu0 %v797
          %822 = vmatpush.msra.mxu0 %v796
          %823 = vmatpush.msra.mxu0 %v795
          %824 = vmatpush.msra.mxu0 %v794
          %825 = vmatpush.msra.mxu0 %v793
          %826 = vmatmul.f32.gmra.mxu0 %v789
          %v827 = vpop.f32.mrf.mxu0
          %v828 = vadd.f32 %v809, %v827
          %829 = vmatmul.f32.gmra.mxu0 %v790
          %v830 = vpop.f32.mrf.mxu0
          %v831 = vadd.f32 %v809, %v830
          %832 = vmatmul.f32.gmra.mxu0 %v791
          %v833 = vpop.f32.mrf.mxu0
          %v834 = vadd.f32 %v809, %v833
          %835 = vmatmul.f32.gmra.mxu0 %v792
          %v836 = vpop.f32.mrf.mxu0
          %v837 = vadd.f32 %v809, %v836
          %838 = vdwg.mxu0
          %v839 = vmul.f32 %v828, 0.5
          %v840 = vmul.f32 %v831, 0.5
          %v841 = vmul.f32 %v834, 0.5
          %v842 = vmul.f32 %v837, 0.5
          %v843 = vmul.f32 %v828, 0.70710677
          %v844 = vmul.f32 %v831, 0.70710677
          %v845 = vmul.f32 %v834, 0.70710677
          %v846 = vmul.f32 %v837, 0.70710677
          %v847 = vmul.f32 %v843, %v843
          %v848 = vmin.f32 16.0, %v847
          %v849 = vmul.f32 %v848, 2.1237322e-06
          %v850 = vadd.f32 %v849, 0.00028619796
          %v851 = vmul.f32 %v848, %v850
          %v852 = vadd.f32 %v851, 0.0036580483
          %v853 = vmul.f32 %v848, %v852
          %v854 = vadd.f32 %v853, 0.05243302
          %v855 = vmul.f32 %v848, %v854
          %v856 = vadd.f32 %v855, 0.18741608
          %v857 = vmul.f32 %v848, %v856
          %v858 = vadd.f32 %v857, 1.1283791
          %v859 = vmul.f32 %v843, %v858
          %v860 = vmul.f32 %v848, 3.8918573e-05
          %v861 = vadd.f32 %v860, 0.001143296
          %v862 = vmul.f32 %v848, %v861
          %v863 = vadd.f32 %v862, 0.014752088
          %v864 = vmul.f32 %v848, %v863
          %v865 = vadd.f32 %v864, 0.112945676
          %v866 = vmul.f32 %v848, %v865
          %v867 = vadd.f32 %v866, 0.4994258
          %v868 = vmul.f32 %v848, %v867
          %v869 = vadd.f32 %v868, 1.0
          %v870 = vrcp.pop %v869
          %v871 = vmul.f32 %v869, %v870
          %v872 = vsub.f32 1.0, %v871
          %v873 = vmul.f32 %v870, %v872
          %v874 = vadd.f32 %v870, %v873
          %vm875 = vweird.f32 %v869
          %vm876 = vweird.f32 %v870
          %vm877 = vmor %vm875, %vm876
          %v878 = vsel %vm877, %v870, %v874
          %v879 = vand.u32 2147483647, %v869
          %vm880 = vcmp.eq.f32.partialorder %v879, 8.507059e+37
          %v881 = vand.u32 %v869, 2147483648
          %v882 = vor.u32 1.1754944e-38, %v881
          %v883 = vsel %vm880, %v882, %v878
          %v884 = vmul.f32 %v859, %v883
          %v885 = vmin.f32 %v884, 1.0
          %v886 = vmax.f32 %v885, -1.0
          %v887 = vmul.f32 %v844, %v844
          %v888 = vmin.f32 16.0, %v887
          %v889 = vmul.f32 %v888, 2.1237322e-06
          %v890 = vadd.f32 %v889, 0.00028619796
          %v891 = vmul.f32 %v888, %v890
          %v892 = vadd.f32 %v891, 0.0036580483
          %v893 = vmul.f32 %v888, %v892
          %v894 = vadd.f32 %v893, 0.05243302
          %v895 = vmul.f32 %v888, %v894
          %v896 = vadd.f32 %v895, 0.18741608
          %v897 = vmul.f32 %v888, %v896
          %v898 = vadd.f32 %v897, 1.1283791
          %v899 = vmul.f32 %v844, %v898
          %v900 = vmul.f32 %v888, 3.8918573e-05
          %v901 = vadd.f32 %v900, 0.001143296
          %v902 = vmul.f32 %v888, %v901
          %v903 = vadd.f32 %v902, 0.014752088
          %v904 = vmul.f32 %v888, %v903
          %v905 = vadd.f32 %v904, 0.112945676
          %v906 = vmul.f32 %v888, %v905
          %v907 = vadd.f32 %v906, 0.4994258
          %v908 = vmul.f32 %v888, %v907
          %v909 = vadd.f32 %v908, 1.0
          %v910 = vrcp.pop %v909
          %v911 = vmul.f32 %v909, %v910
          %v912 = vsub.f32 1.0, %v911
          %v913 = vmul.f32 %v910, %v912
          %v914 = vadd.f32 %v910, %v913
          %vm915 = vweird.f32 %v909
          %vm916 = vweird.f32 %v910
          %vm917 = vmor %vm915, %vm916
          %v918 = vsel %vm917, %v910, %v914
          %v919 = vand.u32 2147483647, %v909
          %vm920 = vcmp.eq.f32.partialorder %v919, 8.507059e+37
          %v921 = vand.u32 %v909, 2147483648
          %v922 = vor.u32 1.1754944e-38, %v921
          %v923 = vsel %vm920, %v922, %v918
          %v924 = vmul.f32 %v899, %v923
          %v925 = vmin.f32 %v924, 1.0
          %v926 = vmax.f32 %v925, -1.0
          %v927 = vmul.f32 %v845, %v845
          %v928 = vmin.f32 16.0, %v927
          %v929 = vmul.f32 %v928, 2.1237322e-06
          %v930 = vadd.f32 %v929, 0.00028619796
          %v931 = vmul.f32 %v928, %v930
          %v932 = vadd.f32 %v931, 0.0036580483
          %v933 = vmul.f32 %v928, %v932
          %v934 = vadd.f32 %v933, 0.05243302
          %v935 = vmul.f32 %v928, %v934
          %v936 = vadd.f32 %v935, 0.18741608
          %v937 = vmul.f32 %v928, %v936
          %v938 = vadd.f32 %v937, 1.1283791
          %v939 = vmul.f32 %v845, %v938
          %v940 = vmul.f32 %v928, 3.8918573e-05
          %v941 = vadd.f32 %v940, 0.001143296
          %v942 = vmul.f32 %v928, %v941
          %v943 = vadd.f32 %v942, 0.014752088
          %v944 = vmul.f32 %v928, %v943
          %v945 = vadd.f32 %v944, 0.112945676
          %v946 = vmul.f32 %v928, %v945
          %v947 = vadd.f32 %v946, 0.4994258
          %v948 = vmul.f32 %v928, %v947
          %v949 = vadd.f32 %v948, 1.0
          %v950 = vrcp.pop %v949
          %v951 = vmul.f32 %v949, %v950
          %v952 = vsub.f32 1.0, %v951
          %v953 = vmul.f32 %v950, %v952
          %v954 = vadd.f32 %v950, %v953
          %vm955 = vweird.f32 %v949
          %vm956 = vweird.f32 %v950
          %vm957 = vmor %vm955, %vm956
          %v958 = vsel %vm957, %v950, %v954
          %v959 = vand.u32 2147483647, %v949
          %vm960 = vcmp.eq.f32.partialorder %v959, 8.507059e+37
          %v961 = vand.u32 %v949, 2147483648
          %v962 = vor.u32 1.1754944e-38, %v961
          %v963 = vsel %vm960, %v962, %v958
          %v964 = vmul.f32 %v939, %v963
          %v965 = vmin.f32 %v964, 1.0
          %v966 = vmax.f32 %v965, -1.0
          %v967 = vmul.f32 %v846, %v846
          %v968 = vmin.f32 16.0, %v967
          %v969 = vmul.f32 %v968, 2.1237322e-06
          %v970 = vadd.f32 %v969, 0.00028619796
          %v971 = vmul.f32 %v968, %v970
          %v972 = vadd.f32 %v971, 0.0036580483
          %v973 = vmul.f32 %v968, %v972
          %v974 = vadd.f32 %v973, 0.05243302
          %v975 = vmul.f32 %v968, %v974
          %v976 = vadd.f32 %v975, 0.18741608
          %v977 = vmul.f32 %v968, %v976
          %v978 = vadd.f32 %v977, 1.1283791
          %v979 = vmul.f32 %v846, %v978
          %v980 = vmul.f32 %v968, 3.8918573e-05
          %v981 = vadd.f32 %v980, 0.001143296
          %v982 = vmul.f32 %v968, %v981
          %v983 = vadd.f32 %v982, 0.014752088
          %v984 = vmul.f32 %v968, %v983
          %v985 = vadd.f32 %v984, 0.112945676
          %v986 = vmul.f32 %v968, %v985
          %v987 = vadd.f32 %v986, 0.4994258
          %v988 = vmul.f32 %v968, %v987
          %v989 = vadd.f32 %v988, 1.0
          %v990 = vrcp.pop %v989
          %v991 = vmul.f32 %v989, %v990
          %v992 = vsub.f32 1.0, %v991
          %v993 = vmul.f32 %v990, %v992
          %v994 = vadd.f32 %v990, %v993
          %vm995 = vweird.f32 %v989
          %vm996 = vweird.f32 %v990
          %vm997 = vmor %vm995, %vm996
          %v998 = vsel %vm997, %v990, %v994
          %v999 = vand.u32 2147483647, %v989
          %vm1000 = vcmp.eq.f32.partialorder %v999, 8.507059e+37
          %v1001 = vand.u32 %v989, 2147483648
          %v1002 = vor.u32 1.1754944e-38, %v1001
          %v1003 = vsel %vm1000, %v1002, %v998
          %v1004 = vmul.f32 %v979, %v1003
          %v1005 = vmin.f32 %v1004, 1.0
          %v1006 = vmax.f32 %v1005, -1.0
          %v1007 = vadd.f32 %v886, 1.0
          %v1008 = vadd.f32 %v926, 1.0
          %v1009 = vadd.f32 %v966, 1.0
          %v1010 = vadd.f32 %v1006, 1.0
          %v1011 = vmul.f32 %v839, %v1007
          %v1012 = vmul.f32 %v840, %v1008
          %v1013 = vmul.f32 %v841, %v1009
          %v1014 = vmul.f32 %v842, %v1010
          %v1015 = vld [vmem:[#allocation12] sm:$0xff]
          %v1016 = vld [vmem:[#allocation12 + $0x8] sm:$0xff]
          %v1017 = vld [vmem:[#allocation12 + $0x10] sm:$0xff]
          %v1018 = vld [vmem:[#allocation12 + $0x18] sm:$0xff]
          %v1019 = vld [vmem:[#allocation12 + $0x20] sm:$0xff]
          %v1020 = vld [vmem:[#allocation12 + $0x28] sm:$0xff]
          %v1021 = vld [vmem:[#allocation12 + $0x30] sm:$0xff]
          %v1022 = vld [vmem:[#allocation12 + $0x38] sm:$0xff]
          %v1023 = vld [vmem:[#allocation12 + $0x40] sm:$0xff]
          %v1024 = vld [vmem:[#allocation12 + $0x48] sm:$0xff]
          %v1025 = vld [vmem:[#allocation12 + $0x50] sm:$0xff]
          %v1026 = vld [vmem:[#allocation12 + $0x58] sm:$0xff]
          %v1027 = vld [vmem:[#allocation12 + $0x60] sm:$0xff]
          %v1028 = vld [vmem:[#allocation12 + $0x68] sm:$0xff]
          %v1029 = vld [vmem:[#allocation12 + $0x70] sm:$0xff]
          %v1030 = vld [vmem:[#allocation12 + $0x78] sm:$0xff]
          %v1031 = vperm.slane %v684, 3
          %1032 = vmatpush.msra.mxu0 %v1030
          %1033 = vmatpush.msra.mxu0 %v1029
          %1034 = vmatpush.msra.mxu0 %v1028
          %1035 = vmatpush.msra.mxu0 %v1027
          %1036 = vmatpush.msra.mxu0 %v1026
          %1037 = vmatpush.msra.mxu0 %v1025
          %1038 = vmatpush.msra.mxu0 %v1024
          %1039 = vmatpush.msra.mxu0 %v1023
          %1040 = vmatpush.msra.mxu0 %v1022
          %1041 = vmatpush.msra.mxu0 %v1021
          %1042 = vmatpush.msra.mxu0 %v1020
          %1043 = vmatpush.msra.mxu0 %v1019
          %1044 = vmatpush.msra.mxu0 %v1018
          %1045 = vmatpush.msra.mxu0 %v1017
          %1046 = vmatpush.msra.mxu0 %v1016
          %1047 = vmatpush.msra.mxu0 %v1015
          %1048 = vmatmul.f32.gmra.mxu0 %v1011
          %v1049 = vpop.f32.mrf.mxu0
          %v1050 = vadd.f32 %v1031, %v1049
          %1051 = vmatmul.f32.gmra.mxu0 %v1012
          %v1052 = vpop.f32.mrf.mxu0
          %v1053 = vadd.f32 %v1031, %v1052
          %1054 = vmatmul.f32.gmra.mxu0 %v1013
          %v1055 = vpop.f32.mrf.mxu0
          %v1056 = vadd.f32 %v1031, %v1055
          %1057 = vmatmul.f32.gmra.mxu0 %v1014
          %v1058 = vpop.f32.mrf.mxu0
          %v1059 = vadd.f32 %v1031, %v1058
          %1060 = vdwg.mxu0
          %1061 = vst [vmem:[#allocation2] sm:$0xff] %v1050
          %1062 = vst [vmem:[#allocation2 + $0x8] sm:$0xff] %v1053
          %1063 = vst [vmem:[#allocation2 + $0x10] sm:$0xff] %v1056
          %1064 = vst [vmem:[#allocation2 + $0x18] sm:$0xff] %v1059
        $region116: #{tpu_custom_call.1} parent=71 // pred_fallthru
          _
        %v1065 = vld [vmem:[%s617] sm:$0xff]
        %v1066 = vld [vmem:[%s617 + $0x8] sm:$0xff]
        %v1067 = vld [vmem:[#allocation2] sm:$0xff]
        %v1068 = vld [vmem:[#allocation2 + $0x8] sm:$0xff]
        %v1069 = vld [vmem:[#allocation2 + $0x10] sm:$0xff]
        %v1070 = vld [vmem:[#allocation2 + $0x18] sm:$0xff]
        %v1071 = vsel %vm683, 1, 0
        %vm1072 = vcmp.eq.s32.totalorder %v1071, 1
        %v1073 = vsel %vm1072, %v1067, 0.0
        %v1074 = vsel %vm1072, %v1068, 0.0
        %v1075 = vsel %vm1072, %v1069, 0.0
        %v1076 = vsel %vm1072, %v1070, 0.0
        %1077 = vadd.xlane.f32.xlu0 %v1073
        %v1078 = vpop.xlane.xlu0 %1077
        %1079 = vadd.xlane.f32.xlu0 %v1074
        %v1080 = vpop.xlane.xlu0 %1079
        %1081 = vadd.xlane.f32.xlu0 %v1075
        %v1082 = vpop.xlane.xlu0 %1081
        %1083 = vadd.xlane.f32.xlu0 %v1076
        %v1084 = vpop.xlane.xlu0 %1083
        %v1085 = vmul.f32 %v1078, 0.020833334
        %v1086 = vmul.f32 %v1080, 0.020833334
        %v1087 = vmul.f32 %v1082, 0.020833334
        %v1088 = vmul.f32 %v1084, 0.020833334
        %v1089 = vsub.f32 %v1067, %v1085
        %v1090 = vsub.f32 %v1068, %v1086
        %v1091 = vsub.f32 %v1069, %v1087
        %v1092 = vsub.f32 %v1070, %v1088
        %v1093 = vsel %vm1072, %v1089, 0.0
        %v1094 = vsel %vm1072, %v1090, 0.0
        %v1095 = vsel %vm1072, %v1091, 0.0
        %v1096 = vsel %vm1072, %v1092, 0.0
        %v1097 = vmul.f32 %v1093, %v1093
        %v1098 = vmul.f32 %v1094, %v1094
        %v1099 = vmul.f32 %v1095, %v1095
        %v1100 = vmul.f32 %v1096, %v1096
        %1101 = vadd.xlane.f32.xlu0 %v1097
        %v1102 = vpop.xlane.xlu0 %1101
        %1103 = vadd.xlane.f32.xlu0 %v1098
        %v1104 = vpop.xlane.xlu0 %1103
        %1105 = vadd.xlane.f32.xlu0 %v1099
        %v1106 = vpop.xlane.xlu0 %1105
        %1107 = vadd.xlane.f32.xlu0 %v1100
        %v1108 = vpop.xlane.xlu0 %1107
        %v1109 = vmul.f32 %v1102, 0.020833334
        %v1110 = vmul.f32 %v1104, 0.020833334
        %v1111 = vmul.f32 %v1106, 0.020833334
        %v1112 = vmul.f32 %v1108, 0.020833334
        %v1113 = vadd.f32 %v1109, 1e-05
        %v1114 = vadd.f32 %v1110, 1e-05
        %v1115 = vadd.f32 %v1111, 1e-05
        %v1116 = vadd.f32 %v1112, 1e-05
        %v1117 = vrsqrt.pop %v1113
        %v1118 = vmul.f32 %v1117, %v1113
        %v1119 = vmul.f32 %v1118, %v1117
        %v1120 = vmul.f32 0.5, %v1119
        %v1121 = vsub.f32 1.5, %v1120
        %v1122 = vmul.f32 %v1117, %v1121
        %vm1123 = vweird.f32 %v1113
        %vm1124 = vweird.f32 %v1117
        %vm1125 = vmor %vm1123, %vm1124
        %v1126 = vsel %vm1125, %v1117, %v1122
        %v1127 = vrsqrt.pop %v1114
        %v1128 = vmul.f32 %v1127, %v1114
        %v1129 = vmul.f32 %v1128, %v1127
        %v1130 = vmul.f32 0.5, %v1129
        %v1131 = vsub.f32 1.5, %v1130
        %v1132 = vmul.f32 %v1127, %v1131
        %vm1133 = vweird.f32 %v1114
        %vm1134 = vweird.f32 %v1127
        %vm1135 = vmor %vm1133, %vm1134
        %v1136 = vsel %vm1135, %v1127, %v1132
        %v1137 = vrsqrt.pop %v1115
        %v1138 = vmul.f32 %v1137, %v1115
        %v1139 = vmul.f32 %v1138, %v1137
        %v1140 = vmul.f32 0.5, %v1139
        %v1141 = vsub.f32 1.5, %v1140
        %v1142 = vmul.f32 %v1137, %v1141
        %vm1143 = vweird.f32 %v1115
        %vm1144 = vweird.f32 %v1137
        %vm1145 = vmor %vm1143, %vm1144
        %v1146 = vsel %vm1145, %v1137, %v1142
        %v1147 = vrsqrt.pop %v1116
        %v1148 = vmul.f32 %v1147, %v1116
        %v1149 = vmul.f32 %v1148, %v1147
        %v1150 = vmul.f32 0.5, %v1149
        %v1151 = vsub.f32 1.5, %v1150
        %v1152 = vmul.f32 %v1147, %v1151
        %vm1153 = vweird.f32 %v1116
        %vm1154 = vweird.f32 %v1147
        %vm1155 = vmor %vm1153, %vm1154
        %v1156 = vsel %vm1155, %v1147, %v1152
        %v1157 = vmul.f32 %v1093, %v1126
        %v1158 = vmul.f32 %v1094, %v1136
        %v1159 = vmul.f32 %v1095, %v1146
        %v1160 = vmul.f32 %v1096, %v1156
        %v1161 = vperm.slane %v1065, 0
        %v1162 = vmul.f32 %v1157, %v1161
        %v1163 = vmul.f32 %v1158, %v1161
        %v1164 = vmul.f32 %v1159, %v1161
        %v1165 = vmul.f32 %v1160, %v1161
        %v1166 = vperm.slane %v1065, 1
        %v1167 = vadd.f32 %v1162, %v1166
        %v1168 = vadd.f32 %v1163, %v1166
        %v1169 = vadd.f32 %v1164, %v1166
        %v1170 = vadd.f32 %v1165, %v1166
        %v1171 = vld [vmem:[%s587] sm:$0xff]
        %v1172 = vld [vmem:[%s587 + $0x8] sm:$0xff]
        %v1173 = vld [vmem:[%s587 + $0x10] sm:$0xff]
        %v1174 = vld [vmem:[%s587 + $0x18] sm:$0xff]
        %v1175 = vld [vmem:[%s587 + $0x20] sm:$0xff]
        %v1176 = vld [vmem:[%s587 + $0x28] sm:$0xff]
        %v1177 = vld [vmem:[%s587 + $0x30] sm:$0xff]
        %v1178 = vld [vmem:[%s587 + $0x38] sm:$0xff]
        %v1179 = vld [vmem:[%s587 + $0x40] sm:$0xff]
        %v1180 = vld [vmem:[%s587 + $0x48] sm:$0xff]
        %v1181 = vld [vmem:[%s587 + $0x50] sm:$0xff]
        %v1182 = vld [vmem:[%s587 + $0x58] sm:$0xff]
        %v1183 = vld [vmem:[%s587 + $0x60] sm:$0xff]
        %v1184 = vld [vmem:[%s587 + $0x68] sm:$0xff]
        %v1185 = vld [vmem:[%s587 + $0x70] sm:$0xff]
        %v1186 = vld [vmem:[%s587 + $0x78] sm:$0xff]
        %v1187 = vld [vmem:[%s587 + $0x80] sm:$0xff]
        %v1188 = vld [vmem:[%s587 + $0x88] sm:$0xff]
        %v1189 = vld [vmem:[%s587 + $0x90] sm:$0xff]
        %v1190 = vld [vmem:[%s587 + $0x98] sm:$0xff]
        %v1191 = vld [vmem:[%s587 + $0xa0] sm:$0xff]
        %v1192 = vld [vmem:[%s587 + $0xa8] sm:$0xff]
        %v1193 = vld [vmem:[%s587 + $0xb0] sm:$0xff]
        %v1194 = vld [vmem:[%s587 + $0xb8] sm:$0xff]
        %v1195 = vld [vmem:[%s587 + $0xc0] sm:$0xff]
        %v1196 = vld [vmem:[%s587 + $0xc8] sm:$0xff]
        %v1197 = vld [vmem:[%s587 + $0xd0] sm:$0xff]
        %v1198 = vld [vmem:[%s587 + $0xd8] sm:$0xff]
        %v1199 = vld [vmem:[%s587 + $0xe0] sm:$0xff]
        %v1200 = vld [vmem:[%s587 + $0xe8] sm:$0xff]
        %v1201 = vld [vmem:[%s587 + $0xf0] sm:$0xff]
        %v1202 = vld [vmem:[%s587 + $0xf8] sm:$0xff]
        %v1203 = vld [vmem:[%s587 + $0x100] sm:$0xff]
        %v1204 = vld [vmem:[%s587 + $0x108] sm:$0xff]
        %v1205 = vld [vmem:[%s587 + $0x110] sm:$0xff]
        %v1206 = vld [vmem:[%s587 + $0x118] sm:$0xff]
        %v1207 = vld [vmem:[%s587 + $0x120] sm:$0xff]
        %v1208 = vld [vmem:[%s587 + $0x128] sm:$0xff]
        %v1209 = vld [vmem:[%s587 + $0x130] sm:$0xff]
        %v1210 = vld [vmem:[%s587 + $0x138] sm:$0xff]
        %v1211 = vld [vmem:[%s587 + $0x140] sm:$0xff]
        %v1212 = vld [vmem:[%s587 + $0x148] sm:$0xff]
        %v1213 = vld [vmem:[%s587 + $0x150] sm:$0xff]
        %v1214 = vld [vmem:[%s587 + $0x158] sm:$0xff]
        %v1215 = vld [vmem:[%s587 + $0x160] sm:$0xff]
        %v1216 = vld [vmem:[%s587 + $0x168] sm:$0xff]
        %v1217 = vld [vmem:[%s587 + $0x170] sm:$0xff]
        %v1218 = vld [vmem:[%s587 + $0x178] sm:$0xff]
        %1219 = vmatpush.msra.mxu0 %v1216
        %1220 = vmatpush.msra.mxu0 %v1213
        %1221 = vmatpush.msra.mxu0 %v1210
        %1222 = vmatpush.msra.mxu0 %v1207
        %1223 = vmatpush.msra.mxu0 %v1204
        %1224 = vmatpush.msra.mxu0 %v1201
        %1225 = vmatpush.msra.mxu0 %v1198
        %1226 = vmatpush.msra.mxu0 %v1195
        %1227 = vmatpush.msra.mxu0 %v1192
        %1228 = vmatpush.msra.mxu0 %v1189
        %1229 = vmatpush.msra.mxu0 %v1186
        %1230 = vmatpush.msra.mxu0 %v1183
        %1231 = vmatpush.msra.mxu0 %v1180
        %1232 = vmatpush.msra.mxu0 %v1177
        %1233 = vmatpush.msra.mxu0 %v1174
        %1234 = vmatpush.msra.mxu0 %v1171
        %1235 = vmatmul.f32.gmra.mxu0 %v1167
        %v1236 = vpop.f32.mrf.mxu0
        %v1237 = vadd.f32 0.0, %v1236
        %1238 = vmatmul.f32.gmra.mxu0 %v1168
        %v1239 = vpop.f32.mrf.mxu0
        %v1240 = vadd.f32 0.0, %v1239
        %1241 = vmatmul.f32.gmra.mxu0 %v1169
        %v1242 = vpop.f32.mrf.mxu0
        %v1243 = vadd.f32 0.0, %v1242
        %1244 = vmatmul.f32.gmra.mxu0 %v1170
        %v1245 = vpop.f32.mrf.mxu0
        %v1246 = vadd.f32 0.0, %v1245
        %1247 = vdwg.mxu0
        %1248 = vmatpush.msra.mxu0 %v1217
        %1249 = vmatpush.msra.mxu0 %v1214
        %1250 = vmatpush.msra.mxu0 %v1211
        %1251 = vmatpush.msra.mxu0 %v1208
        %1252 = vmatpush.msra.mxu0 %v1205
        %1253 = vmatpush.msra.mxu0 %v1202
        %1254 = vmatpush.msra.mxu0 %v1199
        %1255 = vmatpush.msra.mxu0 %v1196
        %1256 = vmatpush.msra.mxu0 %v1193
        %1257 = vmatpush.msra.mxu0 %v1190
        %1258 = vmatpush.msra.mxu0 %v1187
        %1259 = vmatpush.msra.mxu0 %v1184
        %1260 = vmatpush.msra.mxu0 %v1181
        %1261 = vmatpush.msra.mxu0 %v1178
        %1262 = vmatpush.msra.mxu0 %v1175
        %1263 = vmatpush.msra.mxu0 %v1172
        %1264 = vmatmul.f32.gmra.mxu0 %v1167
        %v1265 = vpop.f32.mrf.mxu0
        %v1266 = vadd.f32 0.0, %v1265
        %1267 = vmatmul.f32.gmra.mxu0 %v1168
        %v1268 = vpop.f32.mrf.mxu0
        %v1269 = vadd.f32 0.0, %v1268
        %1270 = vmatmul.f32.gmra.mxu0 %v1169
        %v1271 = vpop.f32.mrf.mxu0
        %v1272 = vadd.f32 0.0, %v1271
        %1273 = vmatmul.f32.gmra.mxu0 %v1170
        %v1274 = vpop.f32.mrf.mxu0
        %v1275 = vadd.f32 0.0, %v1274
        %1276 = vdwg.mxu0
        %1277 = vmatpush.msra.mxu0 %v1218
        %1278 = vmatpush.msra.mxu0 %v1215
        %1279 = vmatpush.msra.mxu0 %v1212
        %1280 = vmatpush.msra.mxu0 %v1209
        %1281 = vmatpush.msra.mxu0 %v1206
        %1282 = vmatpush.msra.mxu0 %v1203
        %1283 = vmatpush.msra.mxu0 %v1200
        %1284 = vmatpush.msra.mxu0 %v1197
        %1285 = vmatpush.msra.mxu0 %v1194
        %1286 = vmatpush.msra.mxu0 %v1191
        %1287 = vmatpush.msra.mxu0 %v1188
        %1288 = vmatpush.msra.mxu0 %v1185
        %1289 = vmatpush.msra.mxu0 %v1182
        %1290 = vmatpush.msra.mxu0 %v1179
        %1291 = vmatpush.msra.mxu0 %v1176
        %1292 = vmatpush.msra.mxu0 %v1173
        %1293 = vmatmul.f32.gmra.mxu0 %v1167
        %v1294 = vpop.f32.mrf.mxu0
        %v1295 = vadd.f32 0.0, %v1294
        %1296 = vmatmul.f32.gmra.mxu0 %v1168
        %v1297 = vpop.f32.mrf.mxu0
        %v1298 = vadd.f32 0.0, %v1297
        %1299 = vmatmul.f32.gmra.mxu0 %v1169
        %v1300 = vpop.f32.mrf.mxu0
        %v1301 = vadd.f32 0.0, %v1300
        %1302 = vmatmul.f32.gmra.mxu0 %v1170
        %v1303 = vpop.f32.mrf.mxu0
        %v1304 = vadd.f32 0.0, %v1303
        %1305 = vdwg.mxu0
        %v1306 = vld [vmem:[#allocation6] sm:$0xff]
        %v1307 = vld [vmem:[#allocation6 + $0x8] sm:$0xff]
        %v1308 = vld [vmem:[#allocation6 + $0x10] sm:$0xff]
        %v1309 = vld [vmem:[#allocation6 + $0x18] sm:$0xff]
        %v1310 = vld [vmem:[#allocation6 + $0x20] sm:$0xff]
        %v1311 = vld [vmem:[#allocation6 + $0x28] sm:$0xff]
        %v1312 = vld [vmem:[#allocation6 + $0x30] sm:$0xff]
        %v1313 = vld [vmem:[#allocation6 + $0x38] sm:$0xff]
        %v1314 = vld [vmem:[#allocation6 + $0x40] sm:$0xff]
        %v1315 = vld [vmem:[#allocation6 + $0x48] sm:$0xff]
        %v1316 = vld [vmem:[#allocation6 + $0x50] sm:$0xff]
        %v1317 = vld [vmem:[#allocation6 + $0x58] sm:$0xff]
        %v1318 = vld [vmem:[#allocation6 + $0x60] sm:$0xff]
        %v1319 = vld [vmem:[#allocation6 + $0x68] sm:$0xff]
        %v1320 = vld [vmem:[#allocation6 + $0x70] sm:$0xff]
        %v1321 = vld [vmem:[#allocation6 + $0x78] sm:$0xff]
        %v1322 = vld [vmem:[#allocation6 + $0x80] sm:$0xff]
        %v1323 = vld [vmem:[#allocation6 + $0x88] sm:$0xff]
        %v1324 = vld [vmem:[#allocation6 + $0x90] sm:$0xff]
        %v1325 = vld [vmem:[#allocation6 + $0x98] sm:$0xff]
        %v1326 = vld [vmem:[#allocation6 + $0xa0] sm:$0xff]
        %v1327 = vld [vmem:[#allocation6 + $0xa8] sm:$0xff]
        %v1328 = vld [vmem:[#allocation6 + $0xb0] sm:$0xff]
        %v1329 = vld [vmem:[#allocation6 + $0xb8] sm:$0xff]
        %v1330 = vld [vmem:[%s2] sm:$0xff]
        %v1331 = vld [vmem:[%s2 + $0x8] sm:$0xff]
        %v1332 = vld [vmem:[%s2 + $0x10] sm:$0xff]
        %v1333 = vld [vmem:[%s2 + $0x18] sm:$0xff]
        %v1334 = vld [vmem:[%s2 + $0x20] sm:$0xff]
        %v1335 = vld [vmem:[%s2 + $0x28] sm:$0xff]
        %v1336 = vld [vmem:[%s2 + $0x30] sm:$0xff]
        %v1337 = vld [vmem:[%s2 + $0x38] sm:$0xff]
        %v1338 = vld [vmem:[%s2 + $0x40] sm:$0xff]
        %v1339 = vld [vmem:[%s2 + $0x48] sm:$0xff]
        %v1340 = vld [vmem:[%s2 + $0x50] sm:$0xff]
        %v1341 = vld [vmem:[%s2 + $0x58] sm:$0xff]
        %v1342 = vld [vmem:[%s2 + $0x60] sm:$0xff]
        %v1343 = vld [vmem:[%s2 + $0x68] sm:$0xff]
        %v1344 = vld [vmem:[%s2 + $0x70] sm:$0xff]
        %v1345 = vld [vmem:[%s2 + $0x78] sm:$0xff]
        %v1346 = vld [vmem:[%s2 + $0x80] sm:$0xff]
        %v1347 = vld [vmem:[%s2 + $0x88] sm:$0xff]
        %v1348 = vld [vmem:[%s2 + $0x90] sm:$0xff]
        %v1349 = vld [vmem:[%s2 + $0x98] sm:$0xff]
        %v1350 = vld [vmem:[%s2 + $0xa0] sm:$0xff]
        %v1351 = vld [vmem:[%s2 + $0xa8] sm:$0xff]
        %v1352 = vld [vmem:[%s2 + $0xb0] sm:$0xff]
        %v1353 = vld [vmem:[%s2 + $0xb8] sm:$0xff]
        %vm1354 = vcmask 261120
        %v1356 = vsel %vm1354, %v1330, 0
        %v1359 = vsel %vm1354, %v1331, 0
        %v1362 = vsel %vm1354, %v1332, 0
        %v1365 = vsel %vm1354, %v1333, 0
        %v1368 = vsel %vm1354, %v1334, 0
        %v1371 = vsel %vm1354, %v1335, 0
        %v1374 = vsel %vm1354, %v1336, 0
        %v1377 = vsel %vm1354, %v1337, 0
        %v1380 = vsel %vm1354, %v1338, 0
        %v1383 = vsel %vm1354, %v1339, 0
        %v1386 = vsel %vm1354, %v1340, 0
        %v1389 = vsel %vm1354, %v1341, 0
        %v1392 = vsel %vm1354, %v1342, 0
        %v1395 = vsel %vm1354, %v1343, 0
        %v1398 = vsel %vm1354, %v1344, 0
        %v1401 = vsel %vm1354, %v1345, 0
        %v1404 = vsel %vm1354, %v1346, 0
        %v1407 = vsel %vm1354, %v1347, 0
        %v1410 = vsel %vm1354, %v1348, 0
        %v1413 = vsel %vm1354, %v1349, 0
        %v1416 = vsel %vm1354, %v1350, 0
        %v1419 = vsel %vm1354, %v1351, 0
        %v1422 = vsel %vm1354, %v1352, 0
        %v1425 = vsel %vm1354, %v1353, 0
        %1427 = vmatpush.msra.mxu0 0.0
        %1428 = vmatpush.msra.mxu0 0.0
        %1429 = vmatpush.msra.mxu0 0.0
        %1430 = vmatpush.msra.mxu0 0.0
        %1431 = vmatpush.msra.mxu0 0.0
        %1432 = vmatpush.msra.mxu0 0.0
        %1433 = vmatpush.msra.mxu0 0.0
        %1434 = vmatpush.msra.mxu0 0.0
        %1435 = vmatpush.msra.mxu0 0.0
        %1436 = vmatpush.msra.mxu0 0.0
        %1437 = vmatpush.msra.mxu0 0.0
        %1438 = vmatpush.msra.mxu0 0.0
        %1439 = vmatpush.msra.mxu0 %v1275
        %1440 = vmatpush.msra.mxu0 %v1272
        %1441 = vmatpush.msra.mxu0 %v1269
        %1442 = vmatpush.msra.mxu0 %v1266
        %1443 = vmatmul.f32.gmra.mxu0 %v1356
        %v1444 = vpop.f32.mrf.mxu0
        %v1445 = vadd.f32 0.0, %v1444
        %1446 = vmatmul.f32.gmra.mxu0 %v1359
        %v1447 = vpop.f32.mrf.mxu0
        %v1448 = vadd.f32 0.0, %v1447
        %1449 = vmatmul.f32.gmra.mxu0 %v1362
        %v1450 = vpop.f32.mrf.mxu0
        %v1451 = vadd.f32 0.0, %v1450
        %1452 = vmatmul.f32.gmra.mxu0 %v1365
        %v1453 = vpop.f32.mrf.mxu0
        %v1454 = vadd.f32 0.0, %v1453
        %1455 = vmatmul.f32.gmra.mxu0 %v1368
        %v1456 = vpop.f32.mrf.mxu0
        %v1457 = vadd.f32 0.0, %v1456
        %1458 = vmatmul.f32.gmra.mxu0 %v1371
        %v1459 = vpop.f32.mrf.mxu0
        %v1460 = vadd.f32 0.0, %v1459
        %1461 = vmatmul.f32.gmra.mxu0 %v1374
        %v1462 = vpop.f32.mrf.mxu0
        %v1463 = vadd.f32 0.0, %v1462
        %1464 = vmatmul.f32.gmra.mxu0 %v1377
        %v1465 = vpop.f32.mrf.mxu0
        %v1466 = vadd.f32 0.0, %v1465
        %1467 = vmatmul.f32.gmra.mxu0 %v1380
        %v1468 = vpop.f32.mrf.mxu0
        %v1469 = vadd.f32 0.0, %v1468
        %1470 = vmatmul.f32.gmra.mxu0 %v1383
        %v1471 = vpop.f32.mrf.mxu0
        %v1472 = vadd.f32 0.0, %v1471
        %1473 = vmatmul.f32.gmra.mxu0 %v1386
        %v1474 = vpop.f32.mrf.mxu0
        %v1475 = vadd.f32 0.0, %v1474
        %1476 = vmatmul.f32.gmra.mxu0 %v1389
        %v1477 = vpop.f32.mrf.mxu0
        %v1478 = vadd.f32 0.0, %v1477
        %1479 = vmatmul.f32.gmra.mxu0 %v1392
        %v1480 = vpop.f32.mrf.mxu0
        %v1481 = vadd.f32 0.0, %v1480
        %1482 = vmatmul.f32.gmra.mxu0 %v1395
        %v1483 = vpop.f32.mrf.mxu0
        %v1484 = vadd.f32 0.0, %v1483
        %1485 = vmatmul.f32.gmra.mxu0 %v1398
        %v1486 = vpop.f32.mrf.mxu0
        %v1487 = vadd.f32 0.0, %v1486
        %1488 = vmatmul.f32.gmra.mxu0 %v1401
        %v1489 = vpop.f32.mrf.mxu0
        %v1490 = vadd.f32 0.0, %v1489
        %1491 = vmatmul.f32.gmra.mxu0 %v1404
        %v1492 = vpop.f32.mrf.mxu0
        %v1493 = vadd.f32 0.0, %v1492
        %1494 = vmatmul.f32.gmra.mxu0 %v1407
        %v1495 = vpop.f32.mrf.mxu0
        %v1496 = vadd.f32 0.0, %v1495
        %1497 = vmatmul.f32.gmra.mxu0 %v1410
        %v1498 = vpop.f32.mrf.mxu0
        %v1499 = vadd.f32 0.0, %v1498
        %1500 = vmatmul.f32.gmra.mxu0 %v1413
        %v1501 = vpop.f32.mrf.mxu0
        %v1502 = vadd.f32 0.0, %v1501
        %1503 = vmatmul.f32.gmra.mxu0 %v1416
        %v1504 = vpop.f32.mrf.mxu0
        %v1505 = vadd.f32 0.0, %v1504
        %1506 = vmatmul.f32.gmra.mxu0 %v1419
        %v1507 = vpop.f32.mrf.mxu0
        %v1508 = vadd.f32 0.0, %v1507
        %1509 = vmatmul.f32.gmra.mxu0 %v1422
        %v1510 = vpop.f32.mrf.mxu0
        %v1511 = vadd.f32 0.0, %v1510
        %1512 = vmatmul.f32.gmra.mxu0 %v1425
        %v1513 = vpop.f32.mrf.mxu0
        %v1514 = vadd.f32 0.0, %v1513
        %1515 = vdwg.mxu0
        %v1516 = vmul.f32 %v1445, %v1306
        %v1517 = vmul.f32 %v1448, %v1307
        %v1518 = vmul.f32 %v1451, %v1308
        %v1519 = vmul.f32 %v1454, %v1309
        %v1520 = vmul.f32 %v1457, %v1310
        %v1521 = vmul.f32 %v1460, %v1311
        %v1522 = vmul.f32 %v1463, %v1312
        %v1523 = vmul.f32 %v1466, %v1313
        %v1524 = vmul.f32 %v1469, %v1314
        %v1525 = vmul.f32 %v1472, %v1315
        %v1526 = vmul.f32 %v1475, %v1316
        %v1527 = vmul.f32 %v1478, %v1317
        %v1528 = vmul.f32 %v1481, %v1318
        %v1529 = vmul.f32 %v1484, %v1319
        %v1530 = vmul.f32 %v1487, %v1320
        %v1531 = vmul.f32 %v1490, %v1321
        %v1532 = vmul.f32 %v1493, %v1322
        %v1533 = vmul.f32 %v1496, %v1323
        %v1534 = vmul.f32 %v1499, %v1324
        %v1535 = vmul.f32 %v1502, %v1325
        %v1536 = vmul.f32 %v1505, %v1326
        %v1537 = vmul.f32 %v1508, %v1327
        %v1538 = vmul.f32 %v1511, %v1328
        %v1539 = vmul.f32 %v1514, %v1329
        %1540 = vmatpush.msra.mxu0 0.0
        %1541 = vmatpush.msra.mxu0 0.0
        %1542 = vmatpush.msra.mxu0 0.0
        %1543 = vmatpush.msra.mxu0 0.0
        %1544 = vmatpush.msra.mxu0 0.0
        %1545 = vmatpush.msra.mxu0 0.0
        %1546 = vmatpush.msra.mxu0 0.0
        %1547 = vmatpush.msra.mxu0 0.0
        %1548 = vmatpush.msra.mxu0 0.0
        %1549 = vmatpush.msra.mxu0 0.0
        %1550 = vmatpush.msra.mxu0 0.0
        %1551 = vmatpush.msra.mxu0 0.0
        %1552 = vmatpush.msra.mxu0 %v1304
        %1553 = vmatpush.msra.mxu0 %v1301
        %1554 = vmatpush.msra.mxu0 %v1298
        %1555 = vmatpush.msra.mxu0 %v1295
        %1556 = vmatmul.f32.gmra.mxu0 %v1356
        %v1557 = vpop.f32.mrf.mxu0
        %v1558 = vadd.f32 0.0, %v1557
        %1559 = vmatmul.f32.gmra.mxu0 %v1359
        %v1560 = vpop.f32.mrf.mxu0
        %v1561 = vadd.f32 0.0, %v1560
        %1562 = vmatmul.f32.gmra.mxu0 %v1362
        %v1563 = vpop.f32.mrf.mxu0
        %v1564 = vadd.f32 0.0, %v1563
        %1565 = vmatmul.f32.gmra.mxu0 %v1365
        %v1566 = vpop.f32.mrf.mxu0
        %v1567 = vadd.f32 0.0, %v1566
        %1568 = vmatmul.f32.gmra.mxu0 %v1368
        %v1569 = vpop.f32.mrf.mxu0
        %v1570 = vadd.f32 0.0, %v1569
        %1571 = vmatmul.f32.gmra.mxu0 %v1371
        %v1572 = vpop.f32.mrf.mxu0
        %v1573 = vadd.f32 0.0, %v1572
        %1574 = vmatmul.f32.gmra.mxu0 %v1374
        %v1575 = vpop.f32.mrf.mxu0
        %v1576 = vadd.f32 0.0, %v1575
        %1577 = vmatmul.f32.gmra.mxu0 %v1377
        %v1578 = vpop.f32.mrf.mxu0
        %v1579 = vadd.f32 0.0, %v1578
        %1580 = vmatmul.f32.gmra.mxu0 %v1380
        %v1581 = vpop.f32.mrf.mxu0
        %v1582 = vadd.f32 0.0, %v1581
        %1583 = vmatmul.f32.gmra.mxu0 %v1383
        %v1584 = vpop.f32.mrf.mxu0
        %v1585 = vadd.f32 0.0, %v1584
        %1586 = vmatmul.f32.gmra.mxu0 %v1386
        %v1587 = vpop.f32.mrf.mxu0
        %v1588 = vadd.f32 0.0, %v1587
        %1589 = vmatmul.f32.gmra.mxu0 %v1389
        %v1590 = vpop.f32.mrf.mxu0
        %v1591 = vadd.f32 0.0, %v1590
        %1592 = vmatmul.f32.gmra.mxu0 %v1392
        %v1593 = vpop.f32.mrf.mxu0
        %v1594 = vadd.f32 0.0, %v1593
        %1595 = vmatmul.f32.gmra.mxu0 %v1395
        %v1596 = vpop.f32.mrf.mxu0
        %v1597 = vadd.f32 0.0, %v1596
        %1598 = vmatmul.f32.gmra.mxu0 %v1398
        %v1599 = vpop.f32.mrf.mxu0
        %v1600 = vadd.f32 0.0, %v1599
        %1601 = vmatmul.f32.gmra.mxu0 %v1401
        %v1602 = vpop.f32.mrf.mxu0
        %v1603 = vadd.f32 0.0, %v1602
        %1604 = vmatmul.f32.gmra.mxu0 %v1404
        %v1605 = vpop.f32.mrf.mxu0
        %v1606 = vadd.f32 0.0, %v1605
        %1607 = vmatmul.f32.gmra.mxu0 %v1407
        %v1608 = vpop.f32.mrf.mxu0
        %v1609 = vadd.f32 0.0, %v1608
        %1610 = vmatmul.f32.gmra.mxu0 %v1410
        %v1611 = vpop.f32.mrf.mxu0
        %v1612 = vadd.f32 0.0, %v1611
        %1613 = vmatmul.f32.gmra.mxu0 %v1413
        %v1614 = vpop.f32.mrf.mxu0
        %v1615 = vadd.f32 0.0, %v1614
        %1616 = vmatmul.f32.gmra.mxu0 %v1416
        %v1617 = vpop.f32.mrf.mxu0
        %v1618 = vadd.f32 0.0, %v1617
        %1619 = vmatmul.f32.gmra.mxu0 %v1419
        %v1620 = vpop.f32.mrf.mxu0
        %v1621 = vadd.f32 0.0, %v1620
        %1622 = vmatmul.f32.gmra.mxu0 %v1422
        %v1623 = vpop.f32.mrf.mxu0
        %v1624 = vadd.f32 0.0, %v1623
        %1625 = vmatmul.f32.gmra.mxu0 %v1425
        %v1626 = vpop.f32.mrf.mxu0
        %v1627 = vadd.f32 0.0, %v1626
        %1628 = vdwg.mxu0
        %v1629 = vmul.f32 %v1558, %v1306
        %v1630 = vmul.f32 %v1561, %v1307
        %v1631 = vmul.f32 %v1564, %v1308
        %v1632 = vmul.f32 %v1567, %v1309
        %v1633 = vmul.f32 %v1570, %v1310
        %v1634 = vmul.f32 %v1573, %v1311
        %v1635 = vmul.f32 %v1576, %v1312
        %v1636 = vmul.f32 %v1579, %v1313
        %v1637 = vmul.f32 %v1582, %v1314
        %v1638 = vmul.f32 %v1585, %v1315
        %v1639 = vmul.f32 %v1588, %v1316
        %v1640 = vmul.f32 %v1591, %v1317
        %v1641 = vmul.f32 %v1594, %v1318
        %v1642 = vmul.f32 %v1597, %v1319
        %v1643 = vmul.f32 %v1600, %v1320
        %v1644 = vmul.f32 %v1603, %v1321
        %v1645 = vmul.f32 %v1606, %v1322
        %v1646 = vmul.f32 %v1609, %v1323
        %v1647 = vmul.f32 %v1612, %v1324
        %v1648 = vmul.f32 %v1615, %v1325
        %v1649 = vmul.f32 %v1618, %v1326
        %v1650 = vmul.f32 %v1621, %v1327
        %v1651 = vmul.f32 %v1624, %v1328
        %v1652 = vmul.f32 %v1627, %v1329
        %1653 = vmatpush.xpose.msra.mxu0 %v1531
        %1654 = vmatpush.xpose.msra.mxu0 %v1530
        %1655 = vmatpush.xpose.msra.mxu0 %v1529
        %1656 = vmatpush.xpose.msra.mxu0 %v1528
        %1657 = vmatpush.xpose.msra.mxu0 %v1527
        %1658 = vmatpush.xpose.msra.mxu0 %v1526
        %1659 = vmatpush.xpose.msra.mxu0 %v1525
        %1660 = vmatpush.xpose.msra.mxu0 %v1524
        %1661 = vmatpush.xpose.msra.mxu0 %v1523
        %1662 = vmatpush.xpose.msra.mxu0 %v1522
        %1663 = vmatpush.xpose.msra.mxu0 %v1521
        %1664 = vmatpush.xpose.msra.mxu0 %v1520
        %1665 = vmatpush.xpose.msra.mxu0 %v1519
        %1666 = vmatpush.xpose.msra.mxu0 %v1518
        %1667 = vmatpush.xpose.msra.mxu0 %v1517
        %1668 = vmatpush.xpose.msra.mxu0 %v1516
        %1669 = vmatmul.f32.gmra.mxu0 %v1237
        %v1670 = vpop.f32.mrf.mxu0
        %v1671 = vadd.f32 0.0, %v1670
        %1672 = vmatmul.f32.gmra.mxu0 %v1240
        %v1673 = vpop.f32.mrf.mxu0
        %v1674 = vadd.f32 0.0, %v1673
        %1675 = vmatmul.f32.gmra.mxu0 %v1243
        %v1676 = vpop.f32.mrf.mxu0
        %v1677 = vadd.f32 0.0, %v1676
        %1678 = vmatmul.f32.gmra.mxu0 %v1246
        %v1679 = vpop.f32.mrf.mxu0
        %v1680 = vadd.f32 0.0, %v1679
        %1681 = vdwg.mxu0
        %1682 = vmatpush.xpose.msra.mxu0 0.0
        %1683 = vmatpush.xpose.msra.mxu0 0.0
        %1684 = vmatpush.xpose.msra.mxu0 0.0
        %1685 = vmatpush.xpose.msra.mxu0 0.0
        %1686 = vmatpush.xpose.msra.mxu0 0.0
        %1687 = vmatpush.xpose.msra.mxu0 0.0
        %1688 = vmatpush.xpose.msra.mxu0 0.0
        %1689 = vmatpush.xpose.msra.mxu0 0.0
        %1690 = vmatpush.xpose.msra.mxu0 %v1539
        %1691 = vmatpush.xpose.msra.mxu0 %v1538
        %1692 = vmatpush.xpose.msra.mxu0 %v1537
        %1693 = vmatpush.xpose.msra.mxu0 %v1536
        %1694 = vmatpush.xpose.msra.mxu0 %v1535
        %1695 = vmatpush.xpose.msra.mxu0 %v1534
        %1696 = vmatpush.xpose.msra.mxu0 %v1533
        %1697 = vmatpush.xpose.msra.mxu0 %v1532
        %1698 = vmatmul.f32.gmra.mxu0 %v1237
        %v1699 = vpop.f32.mrf.mxu0
        %v1700 = vadd.f32 0.0, %v1699
        %1701 = vmatmul.f32.gmra.mxu0 %v1240
        %v1702 = vpop.f32.mrf.mxu0
        %v1703 = vadd.f32 0.0, %v1702
        %1704 = vmatmul.f32.gmra.mxu0 %v1243
        %v1705 = vpop.f32.mrf.mxu0
        %v1706 = vadd.f32 0.0, %v1705
        %1707 = vmatmul.f32.gmra.mxu0 %v1246
        %v1708 = vpop.f32.mrf.mxu0
        %v1709 = vadd.f32 0.0, %v1708
        %1710 = vdwg.mxu0
        %v1711 = vmul.f32 %v1671, 0.35355338
        %v1712 = vmul.f32 %v1700, 0.35355338
        %v1713 = vmul.f32 %v1674, 0.35355338
        %v1714 = vmul.f32 %v1703, 0.35355338
        %v1715 = vmul.f32 %v1677, 0.35355338
        %v1716 = vmul.f32 %v1706, 0.35355338
        %v1717 = vmul.f32 %v1680, 0.35355338
        %v1718 = vmul.f32 %v1709, 0.35355338
        %v1719 = vld [vmem:[#allocation9] sm:$0xff]
        %v1720 = vld [vmem:[#allocation9 + $0x8] sm:$0xff]
        %v1721 = vld [vmem:[#allocation9 + $0x10] sm:$0xff]
        %v1722 = vld [vmem:[#allocation9 + $0x18] sm:$0xff]
        %v1723 = vld [vmem:[#allocation9 + $0x20] sm:$0xff]
        %v1724 = vld [vmem:[#allocation9 + $0x28] sm:$0xff]
        %v1725 = vld [vmem:[#allocation9 + $0x30] sm:$0xff]
        %v1726 = vld [vmem:[#allocation9 + $0x38] sm:$0xff]
        %vm1727 = vcmp.gt.f32.partialorder %v1719, 0.0
        %vm1728 = vcmp.gt.f32.partialorder %v1720, 0.0
        %vm1729 = vcmp.gt.f32.partialorder %v1721, 0.0
        %vm1730 = vcmp.gt.f32.partialorder %v1722, 0.0
        %vm1731 = vcmp.gt.f32.partialorder %v1723, 0.0
        %vm1732 = vcmp.gt.f32.partialorder %v1724, 0.0
        %vm1733 = vcmp.gt.f32.partialorder %v1725, 0.0
        %vm1734 = vcmp.gt.f32.partialorder %v1726, 0.0
        %v1735 = vsel %vm1727, %v1711, -1e+30
        %v1736 = vsel %vm1728, %v1712, -1e+30
        %v1737 = vsel %vm1729, %v1713, -1e+30
        %v1738 = vsel %vm1730, %v1714, -1e+30
        %v1739 = vsel %vm1731, %v1715, -1e+30
        %v1740 = vsel %vm1732, %v1716, -1e+30
        %v1741 = vsel %vm1733, %v1717, -1e+30
        %v1742 = vsel %vm1734, %v1718, -1e+30
        %vm1743 = vcmask 523264
        %v1744 = vsel %vm1743, %v1736, -inf
        %v1745 = vmax.f32 %v1735, %v1744
        %1746 = vmax.xlane.f32.xlu0 %v1745
        %v1747 = vpop.xlane.xlu0 %1746
        %v1748 = vsel %vm1743, %v1738, -inf
        %v1749 = vmax.f32 %v1737, %v1748
        %1750 = vmax.xlane.f32.xlu0 %v1749
        %v1751 = vpop.xlane.xlu0 %1750
        %v1752 = vsel %vm1743, %v1740, -inf
        %v1753 = vmax.f32 %v1739, %v1752
        %1754 = vmax.xlane.f32.xlu0 %v1753
        %v1755 = vpop.xlane.xlu0 %1754
        %v1756 = vsel %vm1743, %v1742, -inf
        %v1757 = vmax.f32 %v1741, %v1756
        %1758 = vmax.xlane.f32.xlu0 %v1757
        %v1759 = vpop.xlane.xlu0 %1758
        %v1760 = vsub.f32 %v1735, %v1747
        %v1761 = vsub.f32 %v1736, %v1747
        %v1762 = vsub.f32 %v1737, %v1751
        %v1763 = vsub.f32 %v1738, %v1751
        %v1764 = vsub.f32 %v1739, %v1755
        %v1765 = vsub.f32 %v1740, %v1755
        %v1766 = vsub.f32 %v1741, %v1759
        %v1767 = vsub.f32 %v1742, %v1759
        %v1768 = vmul.f32 %v1760, 1.442695
        %v1769 = vpow.pop %v1768
        %v1770 = vmul.f32 %v1761, 1.442695
        %v1771 = vpow.pop %v1770
        %v1772 = vmul.f32 %v1762, 1.442695
        %v1773 = vpow.pop %v1772
        %v1774 = vmul.f32 %v1763, 1.442695
        %v1775 = vpow.pop %v1774
        %v1776 = vmul.f32 %v1764, 1.442695
        %v1777 = vpow.pop %v1776
        %v1778 = vmul.f32 %v1765, 1.442695
        %v1779 = vpow.pop %v1778
        %v1780 = vmul.f32 %v1766, 1.442695
        %v1781 = vpow.pop %v1780
        %v1782 = vmul.f32 %v1767, 1.442695
        %v1783 = vpow.pop %v1782
        %v1784 = vld [vmem:[#allocation8] sm:$0xff]
        %v1785 = vld [vmem:[#allocation8 + $0x8] sm:$0xff]
        %v1786 = vld [vmem:[#allocation8 + $0x10] sm:$0xff]
        %v1787 = vld [vmem:[#allocation8 + $0x18] sm:$0xff]
        %v1788 = vld [vmem:[#allocation8 + $0x20] sm:$0xff]
        %v1789 = vld [vmem:[#allocation8 + $0x28] sm:$0xff]
        %v1790 = vld [vmem:[#allocation8 + $0x30] sm:$0xff]
        %v1791 = vld [vmem:[#allocation8 + $0x38] sm:$0xff]
        %v1792 = vld [vmem:[#allocation8 + $0x40] sm:$0xff]
        %v1793 = vld [vmem:[#allocation8 + $0x48] sm:$0xff]
        %v1794 = vld [vmem:[#allocation8 + $0x50] sm:$0xff]
        %v1795 = vld [vmem:[#allocation8 + $0x58] sm:$0xff]
        %v1796 = vld [vmem:[#allocation8 + $0x60] sm:$0xff]
        %v1797 = vld [vmem:[#allocation8 + $0x68] sm:$0xff]
        %v1798 = vld [vmem:[#allocation8 + $0x70] sm:$0xff]
        %v1799 = vld [vmem:[#allocation8 + $0x78] sm:$0xff]
        %v1800 = vld [vmem:[#allocation8 + $0x80] sm:$0xff]
        %v1801 = vld [vmem:[#allocation8 + $0x88] sm:$0xff]
        %v1802 = vld [vmem:[#allocation8 + $0x90] sm:$0xff]
        %v1803 = vld [vmem:[#allocation8 + $0x98] sm:$0xff]
        %v1804 = vld [vmem:[#allocation8 + $0xa0] sm:$0xff]
        %v1805 = vld [vmem:[#allocation8 + $0xa8] sm:$0xff]
        %v1806 = vld [vmem:[#allocation8 + $0xb0] sm:$0xff]
        %v1807 = vld [vmem:[#allocation8 + $0xb8] sm:$0xff]
        %v1808 = vld [vmem:[#allocation8 + $0xc0] sm:$0xff]
        %v1809 = vld [vmem:[#allocation8 + $0xc8] sm:$0xff]
        %v1810 = vld [vmem:[#allocation8 + $0xd0] sm:$0xff]
        %v1811 = vld [vmem:[#allocation8 + $0xd8] sm:$0xff]
        %v1812 = vld [vmem:[#allocation8 + $0xe0] sm:$0xff]
        %v1813 = vld [vmem:[#allocation8 + $0xe8] sm:$0xff]
        %v1814 = vld [vmem:[#allocation8 + $0xf0] sm:$0xff]
        %v1815 = vld [vmem:[#allocation8 + $0xf8] sm:$0xff]
        %v1816 = vld [vmem:[#allocation8 + $0x100] sm:$0xff]
        %v1817 = vld [vmem:[#allocation8 + $0x108] sm:$0xff]
        %v1818 = vld [vmem:[#allocation8 + $0x110] sm:$0xff]
        %v1819 = vld [vmem:[#allocation8 + $0x118] sm:$0xff]
        %v1820 = vld [vmem:[#allocation8 + $0x120] sm:$0xff]
        %v1821 = vld [vmem:[#allocation8 + $0x128] sm:$0xff]
        %v1822 = vld [vmem:[#allocation8 + $0x130] sm:$0xff]
        %v1823 = vld [vmem:[#allocation8 + $0x138] sm:$0xff]
        %v1824 = vld [vmem:[#allocation8 + $0x140] sm:$0xff]
        %v1825 = vld [vmem:[#allocation8 + $0x148] sm:$0xff]
        %v1826 = vld [vmem:[#allocation8 + $0x150] sm:$0xff]
        %v1827 = vld [vmem:[#allocation8 + $0x158] sm:$0xff]
        %v1828 = vld [vmem:[#allocation8 + $0x160] sm:$0xff]
        %v1829 = vld [vmem:[#allocation8 + $0x168] sm:$0xff]
        %v1830 = vld [vmem:[#allocation8 + $0x170] sm:$0xff]
        %v1831 = vld [vmem:[#allocation8 + $0x178] sm:$0xff]
        %v1833 = vsel %vm1743, %v1771, 0
        %v1836 = vsel %vm1743, %v1775, 0
        %v1839 = vsel %vm1743, %v1779, 0
        %v1842 = vsel %vm1743, %v1783, 0
        %1844 = vmatpush.msra.mxu0 %v1814
        %1845 = vmatpush.msra.mxu0 %v1812
        %1846 = vmatpush.msra.mxu0 %v1810
        %1847 = vmatpush.msra.mxu0 %v1808
        %1848 = vmatpush.msra.mxu0 %v1806
        %1849 = vmatpush.msra.mxu0 %v1804
        %1850 = vmatpush.msra.mxu0 %v1802
        %1851 = vmatpush.msra.mxu0 %v1800
        %1852 = vmatpush.msra.mxu0 %v1798
        %1853 = vmatpush.msra.mxu0 %v1796
        %1854 = vmatpush.msra.mxu0 %v1794
        %1855 = vmatpush.msra.mxu0 %v1792
        %1856 = vmatpush.msra.mxu0 %v1790
        %1857 = vmatpush.msra.mxu0 %v1788
        %1858 = vmatpush.msra.mxu0 %v1786
        %1859 = vmatpush.msra.mxu0 %v1784
        %1860 = vmatmul.f32.gmra.mxu0 %v1769
        %v1861 = vpop.f32.mrf.mxu0
        %v1862 = vadd.f32 0.0, %v1861
        %1863 = vmatmul.f32.gmra.mxu0 %v1773
        %v1864 = vpop.f32.mrf.mxu0
        %v1865 = vadd.f32 0.0, %v1864
        %1866 = vmatmul.f32.gmra.mxu0 %v1777
        %v1867 = vpop.f32.mrf.mxu0
        %v1868 = vadd.f32 0.0, %v1867
        %1869 = vmatmul.f32.gmra.mxu0 %v1781
        %v1870 = vpop.f32.mrf.mxu0
        %v1871 = vadd.f32 0.0, %v1870
        %1872 = vdwg.mxu0
        %1873 = vmatpush.msra.mxu0 0.0
        %1874 = vmatpush.msra.mxu0 0.0
        %1875 = vmatpush.msra.mxu0 0.0
        %1876 = vmatpush.msra.mxu0 0.0
        %1877 = vmatpush.msra.mxu0 0.0
        %1878 = vmatpush.msra.mxu0 0.0
        %1879 = vmatpush.msra.mxu0 0.0
        %1880 = vmatpush.msra.mxu0 0.0
        %1881 = vmatpush.msra.mxu0 %v1830
        %1882 = vmatpush.msra.mxu0 %v1828
        %1883 = vmatpush.msra.mxu0 %v1826
        %1884 = vmatpush.msra.mxu0 %v1824
        %1885 = vmatpush.msra.mxu0 %v1822
        %1886 = vmatpush.msra.mxu0 %v1820
        %1887 = vmatpush.msra.mxu0 %v1818
        %1888 = vmatpush.msra.mxu0 %v1816
        %1889 = vmatmul.f32.gmra.mxu0 %v1833
        %v1890 = vpop.f32.mrf.mxu0
        %v1891 = vadd.f32 %v1862, %v1890
        %1892 = vmatmul.f32.gmra.mxu0 %v1836
        %v1893 = vpop.f32.mrf.mxu0
        %v1894 = vadd.f32 %v1865, %v1893
        %1895 = vmatmul.f32.gmra.mxu0 %v1839
        %v1896 = vpop.f32.mrf.mxu0
        %v1897 = vadd.f32 %v1868, %v1896
        %1898 = vmatmul.f32.gmra.mxu0 %v1842
        %v1899 = vpop.f32.mrf.mxu0
        %v1900 = vadd.f32 %v1871, %v1899
        %1901 = vdwg.mxu0
        %1902 = vmatpush.msra.mxu0 %v1815
        %1903 = vmatpush.msra.mxu0 %v1813
        %1904 = vmatpush.msra.mxu0 %v1811
        %1905 = vmatpush.msra.mxu0 %v1809
        %1906 = vmatpush.msra.mxu0 %v1807
        %1907 = vmatpush.msra.mxu0 %v1805
        %1908 = vmatpush.msra.mxu0 %v1803
        %1909 = vmatpush.msra.mxu0 %v1801
        %1910 = vmatpush.msra.mxu0 %v1799
        %1911 = vmatpush.msra.mxu0 %v1797
        %1912 = vmatpush.msra.mxu0 %v1795
        %1913 = vmatpush.msra.mxu0 %v1793
        %1914 = vmatpush.msra.mxu0 %v1791
        %1915 = vmatpush.msra.mxu0 %v1789
        %1916 = vmatpush.msra.mxu0 %v1787
        %1917 = vmatpush.msra.mxu0 %v1785
        %1918 = vmatmul.f32.gmra.mxu0 %v1769
        %v1919 = vpop.f32.mrf.mxu0
        %v1920 = vadd.f32 0.0, %v1919
        %1921 = vmatmul.f32.gmra.mxu0 %v1773
        %v1922 = vpop.f32.mrf.mxu0
        %v1923 = vadd.f32 0.0, %v1922
        %1924 = vmatmul.f32.gmra.mxu0 %v1777
        %v1925 = vpop.f32.mrf.mxu0
        %v1926 = vadd.f32 0.0, %v1925
        %1927 = vmatmul.f32.gmra.mxu0 %v1781
        %v1928 = vpop.f32.mrf.mxu0
        %v1929 = vadd.f32 0.0, %v1928
        %1930 = vdwg.mxu0
        %1931 = vmatpush.msra.mxu0 0.0
        %1932 = vmatpush.msra.mxu0 0.0
        %1933 = vmatpush.msra.mxu0 0.0
        %1934 = vmatpush.msra.mxu0 0.0
        %1935 = vmatpush.msra.mxu0 0.0
        %1936 = vmatpush.msra.mxu0 0.0
        %1937 = vmatpush.msra.mxu0 0.0
        %1938 = vmatpush.msra.mxu0 0.0
        %1939 = vmatpush.msra.mxu0 %v1831
        %1940 = vmatpush.msra.mxu0 %v1829
        %1941 = vmatpush.msra.mxu0 %v1827
        %1942 = vmatpush.msra.mxu0 %v1825
        %1943 = vmatpush.msra.mxu0 %v1823
        %1944 = vmatpush.msra.mxu0 %v1821
        %1945 = vmatpush.msra.mxu0 %v1819
        %1946 = vmatpush.msra.mxu0 %v1817
        %1947 = vmatmul.f32.gmra.mxu0 %v1833
        %v1948 = vpop.f32.mrf.mxu0
        %v1949 = vadd.f32 %v1920, %v1948
        %1950 = vmatmul.f32.gmra.mxu0 %v1836
        %v1951 = vpop.f32.mrf.mxu0
        %v1952 = vadd.f32 %v1923, %v1951
        %1953 = vmatmul.f32.gmra.mxu0 %v1839
        %v1954 = vpop.f32.mrf.mxu0
        %v1955 = vadd.f32 %v1926, %v1954
        %1956 = vmatmul.f32.gmra.mxu0 %v1842
        %v1957 = vpop.f32.mrf.mxu0
        %v1958 = vadd.f32 %v1929, %v1957
        %1959 = vdwg.mxu0
        %vm1960 = vcmp.gt.f32.partialorder %v1891, 0.0
        %vm1961 = vcmp.gt.f32.partialorder %v1949, 0.0
        %vm1962 = vcmp.gt.f32.partialorder %v1894, 0.0
        %vm1963 = vcmp.gt.f32.partialorder %v1952, 0.0
        %vm1964 = vcmp.gt.f32.partialorder %v1897, 0.0
        %vm1965 = vcmp.gt.f32.partialorder %v1955, 0.0
        %vm1966 = vcmp.gt.f32.partialorder %v1900, 0.0
        %vm1967 = vcmp.gt.f32.partialorder %v1958, 0.0
        %v1968 = vsel %vm1960, %v1891, 1.0
        %v1969 = vsel %vm1961, %v1949, 1.0
        %v1970 = vsel %vm1962, %v1894, 1.0
        %v1971 = vsel %vm1963, %v1952, 1.0
        %v1972 = vsel %vm1964, %v1897, 1.0
        %v1973 = vsel %vm1965, %v1955, 1.0
        %v1974 = vsel %vm1966, %v1900, 1.0
        %v1975 = vsel %vm1967, %v1958, 1.0
        %v1976 = vrcp.pop %v1968
        %v1977 = vmul.f32 %v1968, %v1976
        %v1978 = vsub.f32 1.0, %v1977
        %v1979 = vmul.f32 %v1976, %v1978
        %v1980 = vadd.f32 %v1976, %v1979
        %vm1981 = vweird.f32 %v1968
        %vm1982 = vweird.f32 %v1976
        %vm1983 = vmor %vm1981, %vm1982
        %v1984 = vsel %vm1983, %v1976, %v1980
        %v1985 = vand.u32 2147483647, %v1968
        %vm1986 = vcmp.eq.f32.partialorder %v1985, 8.507059e+37
        %v1987 = vand.u32 %v1968, 2147483648
        %v1988 = vor.u32 1.1754944e-38, %v1987
        %v1989 = vsel %vm1986, %v1988, %v1984
        %v1990 = vmul.f32 %v1769, %v1989
        %v1991 = vrcp.pop %v1969
        %v1992 = vmul.f32 %v1969, %v1991
        %v1993 = vsub.f32 1.0, %v1992
        %v1994 = vmul.f32 %v1991, %v1993
        %v1995 = vadd.f32 %v1991, %v1994
        %vm1996 = vweird.f32 %v1969
        %vm1997 = vweird.f32 %v1991
        %vm1998 = vmor %vm1996, %vm1997
        %v1999 = vsel %vm1998, %v1991, %v1995
        %v2000 = vand.u32 2147483647, %v1969
        %vm2001 = vcmp.eq.f32.partialorder %v2000, 8.507059e+37
        %v2002 = vand.u32 %v1969, 2147483648
        %v2003 = vor.u32 1.1754944e-38, %v2002
        %v2004 = vsel %vm2001, %v2003, %v1999
        %v2005 = vmul.f32 %v1771, %v2004
        %v2006 = vrcp.pop %v1970
        %v2007 = vmul.f32 %v1970, %v2006
        %v2008 = vsub.f32 1.0, %v2007
        %v2009 = vmul.f32 %v2006, %v2008
        %v2010 = vadd.f32 %v2006, %v2009
        %vm2011 = vweird.f32 %v1970
        %vm2012 = vweird.f32 %v2006
        %vm2013 = vmor %vm2011, %vm2012
        %v2014 = vsel %vm2013, %v2006, %v2010
        %v2015 = vand.u32 2147483647, %v1970
        %vm2016 = vcmp.eq.f32.partialorder %v2015, 8.507059e+37
        %v2017 = vand.u32 %v1970, 2147483648
        %v2018 = vor.u32 1.1754944e-38, %v2017
        %v2019 = vsel %vm2016, %v2018, %v2014
        %v2020 = vmul.f32 %v1773, %v2019
        %v2021 = vrcp.pop %v1971
        %v2022 = vmul.f32 %v1971, %v2021
        %v2023 = vsub.f32 1.0, %v2022
        %v2024 = vmul.f32 %v2021, %v2023
        %v2025 = vadd.f32 %v2021, %v2024
        %vm2026 = vweird.f32 %v1971
        %vm2027 = vweird.f32 %v2021
        %vm2028 = vmor %vm2026, %vm2027
        %v2029 = vsel %vm2028, %v2021, %v2025
        %v2030 = vand.u32 2147483647, %v1971
        %vm2031 = vcmp.eq.f32.partialorder %v2030, 8.507059e+37
        %v2032 = vand.u32 %v1971, 2147483648
        %v2033 = vor.u32 1.1754944e-38, %v2032
        %v2034 = vsel %vm2031, %v2033, %v2029
        %v2035 = vmul.f32 %v1775, %v2034
        %v2036 = vrcp.pop %v1972
        %v2037 = vmul.f32 %v1972, %v2036
        %v2038 = vsub.f32 1.0, %v2037
        %v2039 = vmul.f32 %v2036, %v2038
        %v2040 = vadd.f32 %v2036, %v2039
        %vm2041 = vweird.f32 %v1972
        %vm2042 = vweird.f32 %v2036
        %vm2043 = vmor %vm2041, %vm2042
        %v2044 = vsel %vm2043, %v2036, %v2040
        %v2045 = vand.u32 2147483647, %v1972
        %vm2046 = vcmp.eq.f32.partialorder %v2045, 8.507059e+37
        %v2047 = vand.u32 %v1972, 2147483648
        %v2048 = vor.u32 1.1754944e-38, %v2047
        %v2049 = vsel %vm2046, %v2048, %v2044
        %v2050 = vmul.f32 %v1777, %v2049
        %v2051 = vrcp.pop %v1973
        %v2052 = vmul.f32 %v1973, %v2051
        %v2053 = vsub.f32 1.0, %v2052
        %v2054 = vmul.f32 %v2051, %v2053
        %v2055 = vadd.f32 %v2051, %v2054
        %vm2056 = vweird.f32 %v1973
        %vm2057 = vweird.f32 %v2051
        %vm2058 = vmor %vm2056, %vm2057
        %v2059 = vsel %vm2058, %v2051, %v2055
        %v2060 = vand.u32 2147483647, %v1973
        %vm2061 = vcmp.eq.f32.partialorder %v2060, 8.507059e+37
        %v2062 = vand.u32 %v1973, 2147483648
        %v2063 = vor.u32 1.1754944e-38, %v2062
        %v2064 = vsel %vm2061, %v2063, %v2059
        %v2065 = vmul.f32 %v1779, %v2064
        %v2066 = vrcp.pop %v1974
        %v2067 = vmul.f32 %v1974, %v2066
        %v2068 = vsub.f32 1.0, %v2067
        %v2069 = vmul.f32 %v2066, %v2068
        %v2070 = vadd.f32 %v2066, %v2069
        %vm2071 = vweird.f32 %v1974
        %vm2072 = vweird.f32 %v2066
        %vm2073 = vmor %vm2071, %vm2072
        %v2074 = vsel %vm2073, %v2066, %v2070
        %v2075 = vand.u32 2147483647, %v1974
        %vm2076 = vcmp.eq.f32.partialorder %v2075, 8.507059e+37
        %v2077 = vand.u32 %v1974, 2147483648
        %v2078 = vor.u32 1.1754944e-38, %v2077
        %v2079 = vsel %vm2076, %v2078, %v2074
        %v2080 = vmul.f32 %v1781, %v2079
        %v2081 = vrcp.pop %v1975
        %v2082 = vmul.f32 %v1975, %v2081
        %v2083 = vsub.f32 1.0, %v2082
        %v2084 = vmul.f32 %v2081, %v2083
        %v2085 = vadd.f32 %v2081, %v2084
        %vm2086 = vweird.f32 %v1975
        %vm2087 = vweird.f32 %v2081
        %vm2088 = vmor %vm2086, %vm2087
        %v2089 = vsel %vm2088, %v2081, %v2085
        %v2090 = vand.u32 2147483647, %v1975
        %vm2091 = vcmp.eq.f32.partialorder %v2090, 8.507059e+37
        %v2092 = vand.u32 %v1975, 2147483648
        %v2093 = vor.u32 1.1754944e-38, %v2092
        %v2094 = vsel %vm2091, %v2093, %v2089
        %v2095 = vmul.f32 %v1783, %v2094
        %v2097 = vsel %vm1743, %v2005, 0
        %v2100 = vsel %vm1743, %v2035, 0
        %v2103 = vsel %vm1743, %v2065, 0
        %v2106 = vsel %vm1743, %v2095, 0
        %2108 = vmatpush.msra.mxu0 %v1644
        %2109 = vmatpush.msra.mxu0 %v1643
        %2110 = vmatpush.msra.mxu0 %v1642
        %2111 = vmatpush.msra.mxu0 %v1641
        %2112 = vmatpush.msra.mxu0 %v1640
        %2113 = vmatpush.msra.mxu0 %v1639
        %2114 = vmatpush.msra.mxu0 %v1638
        %2115 = vmatpush.msra.mxu0 %v1637
        %2116 = vmatpush.msra.mxu0 %v1636
        %2117 = vmatpush.msra.mxu0 %v1635
        %2118 = vmatpush.msra.mxu0 %v1634
        %2119 = vmatpush.msra.mxu0 %v1633
        %2120 = vmatpush.msra.mxu0 %v1632
        %2121 = vmatpush.msra.mxu0 %v1631
        %2122 = vmatpush.msra.mxu0 %v1630
        %2123 = vmatpush.msra.mxu0 %v1629
        %2124 = vmatmul.f32.gmra.mxu0 %v1990
        %v2125 = vpop.f32.mrf.mxu0
        %v2126 = vadd.f32 0.0, %v2125
        %2127 = vmatmul.f32.gmra.mxu0 %v2020
        %v2128 = vpop.f32.mrf.mxu0
        %v2129 = vadd.f32 0.0, %v2128
        %2130 = vmatmul.f32.gmra.mxu0 %v2050
        %v2131 = vpop.f32.mrf.mxu0
        %v2132 = vadd.f32 0.0, %v2131
        %2133 = vmatmul.f32.gmra.mxu0 %v2080
        %v2134 = vpop.f32.mrf.mxu0
        %v2135 = vadd.f32 0.0, %v2134
        %2136 = vdwg.mxu0
        %2137 = vmatpush.msra.mxu0 0.0
        %2138 = vmatpush.msra.mxu0 0.0
        %2139 = vmatpush.msra.mxu0 0.0
        %2140 = vmatpush.msra.mxu0 0.0
        %2141 = vmatpush.msra.mxu0 0.0
        %2142 = vmatpush.msra.mxu0 0.0
        %2143 = vmatpush.msra.mxu0 0.0
        %2144 = vmatpush.msra.mxu0 0.0
        %2145 = vmatpush.msra.mxu0 %v1652
        %2146 = vmatpush.msra.mxu0 %v1651
        %2147 = vmatpush.msra.mxu0 %v1650
        %2148 = vmatpush.msra.mxu0 %v1649
        %2149 = vmatpush.msra.mxu0 %v1648
        %2150 = vmatpush.msra.mxu0 %v1647
        %2151 = vmatpush.msra.mxu0 %v1646
        %2152 = vmatpush.msra.mxu0 %v1645
        %2153 = vmatmul.f32.gmra.mxu0 %v2097
        %v2154 = vpop.f32.mrf.mxu0
        %v2155 = vadd.f32 %v2126, %v2154
        %2156 = vmatmul.f32.gmra.mxu0 %v2100
        %v2157 = vpop.f32.mrf.mxu0
        %v2158 = vadd.f32 %v2129, %v2157
        %2159 = vmatmul.f32.gmra.mxu0 %v2103
        %v2160 = vpop.f32.mrf.mxu0
        %v2161 = vadd.f32 %v2132, %v2160
        %2162 = vmatmul.f32.gmra.mxu0 %v2106
        %v2163 = vpop.f32.mrf.mxu0
        %v2164 = vadd.f32 %v2135, %v2163
        %2165 = vdwg.mxu0
        %v2166 = vld [vmem:[%s680] sm:$0xff]
        %v2167 = vld [vmem:[%s680 + $0x8] sm:$0xff]
        %v2168 = vld [vmem:[%s680 + $0x10] sm:$0xff]
        %v2169 = vld [vmem:[%s680 + $0x18] sm:$0xff]
        %v2170 = vld [vmem:[%s680 + $0x20] sm:$0xff]
        %v2171 = vld [vmem:[%s680 + $0x28] sm:$0xff]
        %v2172 = vld [vmem:[%s680 + $0x30] sm:$0xff]
        %v2173 = vld [vmem:[%s680 + $0x38] sm:$0xff]
        %v2174 = vld [vmem:[%s680 + $0x40] sm:$0xff]
        %v2175 = vld [vmem:[%s680 + $0x48] sm:$0xff]
        %v2176 = vld [vmem:[%s680 + $0x50] sm:$0xff]
        %v2177 = vld [vmem:[%s680 + $0x58] sm:$0xff]
        %v2178 = vld [vmem:[%s680 + $0x60] sm:$0xff]
        %v2179 = vld [vmem:[%s680 + $0x68] sm:$0xff]
        %v2180 = vld [vmem:[%s680 + $0x70] sm:$0xff]
        %v2181 = vld [vmem:[%s680 + $0x78] sm:$0xff]
        %2182 = vmatpush.msra.mxu0 %v2181
        %2183 = vmatpush.msra.mxu0 %v2180
        %2184 = vmatpush.msra.mxu0 %v2179
        %2185 = vmatpush.msra.mxu0 %v2178
        %2186 = vmatpush.msra.mxu0 %v2177
        %2187 = vmatpush.msra.mxu0 %v2176
        %2188 = vmatpush.msra.mxu0 %v2175
        %2189 = vmatpush.msra.mxu0 %v2174
        %2190 = vmatpush.msra.mxu0 %v2173
        %2191 = vmatpush.msra.mxu0 %v2172
        %2192 = vmatpush.msra.mxu0 %v2171
        %2193 = vmatpush.msra.mxu0 %v2170
        %2194 = vmatpush.msra.mxu0 %v2169
        %2195 = vmatpush.msra.mxu0 %v2168
        %2196 = vmatpush.msra.mxu0 %v2167
        %2197 = vmatpush.msra.mxu0 %v2166
        %2198 = vmatmul.f32.gmra.mxu0 %v2155
        %v2199 = vpop.f32.mrf.mxu0
        %v2200 = vadd.f32 0.0, %v2199
        %2201 = vmatmul.f32.gmra.mxu0 %v2158
        %v2202 = vpop.f32.mrf.mxu0
        %v2203 = vadd.f32 0.0, %v2202
        %2204 = vmatmul.f32.gmra.mxu0 %v2161
        %v2205 = vpop.f32.mrf.mxu0
        %v2206 = vadd.f32 0.0, %v2205
        %2207 = vmatmul.f32.gmra.mxu0 %v2164
        %v2208 = vpop.f32.mrf.mxu0
        %v2209 = vadd.f32 0.0, %v2208
        %2210 = vdwg.mxu0
        %v2211 = vadd.f32 %v1067, %v2200
        %v2212 = vadd.f32 %v1068, %v2203
        %v2213 = vadd.f32 %v1069, %v2206
        %v2214 = vadd.f32 %v1070, %v2209
        %v2215 = vperm.slane %v1065, 2
        %v2216 = vadd.f32 %v2211, %v2215
        %v2217 = vadd.f32 %v2212, %v2215
        %v2218 = vadd.f32 %v2213, %v2215
        %v2219 = vadd.f32 %v2214, %v2215
        %v2220 = vsel %vm1072, %v2216, 0.0
        %v2221 = vsel %vm1072, %v2217, 0.0
        %v2222 = vsel %vm1072, %v2218, 0.0
        %v2223 = vsel %vm1072, %v2219, 0.0
        %2224 = vadd.xlane.f32.xlu0 %v2220
        %v2225 = vpop.xlane.xlu0 %2224
        %2226 = vadd.xlane.f32.xlu0 %v2221
        %v2227 = vpop.xlane.xlu0 %2226
        %2228 = vadd.xlane.f32.xlu0 %v2222
        %v2229 = vpop.xlane.xlu0 %2228
        %2230 = vadd.xlane.f32.xlu0 %v2223
        %v2231 = vpop.xlane.xlu0 %2230
        %v2232 = vmul.f32 %v2225, 0.020833334
        %v2233 = vmul.f32 %v2227, 0.020833334
        %v2234 = vmul.f32 %v2229, 0.020833334
        %v2235 = vmul.f32 %v2231, 0.020833334
        %v2236 = vsub.f32 %v2216, %v2232
        %v2237 = vsub.f32 %v2217, %v2233
        %v2238 = vsub.f32 %v2218, %v2234
        %v2239 = vsub.f32 %v2219, %v2235
        %v2240 = vsel %vm1072, %v2236, 0.0
        %v2241 = vsel %vm1072, %v2237, 0.0
        %v2242 = vsel %vm1072, %v2238, 0.0
        %v2243 = vsel %vm1072, %v2239, 0.0
        %v2244 = vmul.f32 %v2240, %v2240
        %v2245 = vmul.f32 %v2241, %v2241
        %v2246 = vmul.f32 %v2242, %v2242
        %v2247 = vmul.f32 %v2243, %v2243
        %2248 = vadd.xlane.f32.xlu0 %v2244
        %v2249 = vpop.xlane.xlu0 %2248
        %2250 = vadd.xlane.f32.xlu0 %v2245
        %v2251 = vpop.xlane.xlu0 %2250
        %2252 = vadd.xlane.f32.xlu0 %v2246
        %v2253 = vpop.xlane.xlu0 %2252
        %2254 = vadd.xlane.f32.xlu0 %v2247
        %v2255 = vpop.xlane.xlu0 %2254
        %v2256 = vmul.f32 %v2249, 0.020833334
        %v2257 = vmul.f32 %v2251, 0.020833334
        %v2258 = vmul.f32 %v2253, 0.020833334
        %v2259 = vmul.f32 %v2255, 0.020833334
        %v2260 = vadd.f32 %v2256, 1e-05
        %v2261 = vadd.f32 %v2257, 1e-05
        %v2262 = vadd.f32 %v2258, 1e-05
        %v2263 = vadd.f32 %v2259, 1e-05
        %v2264 = vrsqrt.pop %v2260
        %v2265 = vmul.f32 %v2264, %v2260
        %v2266 = vmul.f32 %v2265, %v2264
        %v2267 = vmul.f32 0.5, %v2266
        %v2268 = vsub.f32 1.5, %v2267
        %v2269 = vmul.f32 %v2264, %v2268
        %vm2270 = vweird.f32 %v2260
        %vm2271 = vweird.f32 %v2264
        %vm2272 = vmor %vm2270, %vm2271
        %v2273 = vsel %vm2272, %v2264, %v2269
        %v2274 = vrsqrt.pop %v2261
        %v2275 = vmul.f32 %v2274, %v2261
        %v2276 = vmul.f32 %v2275, %v2274
        %v2277 = vmul.f32 0.5, %v2276
        %v2278 = vsub.f32 1.5, %v2277
        %v2279 = vmul.f32 %v2274, %v2278
        %vm2280 = vweird.f32 %v2261
        %vm2281 = vweird.f32 %v2274
        %vm2282 = vmor %vm2280, %vm2281
        %v2283 = vsel %vm2282, %v2274, %v2279
        %v2284 = vrsqrt.pop %v2262
        %v2285 = vmul.f32 %v2284, %v2262
        %v2286 = vmul.f32 %v2285, %v2284
        %v2287 = vmul.f32 0.5, %v2286
        %v2288 = vsub.f32 1.5, %v2287
        %v2289 = vmul.f32 %v2284, %v2288
        %vm2290 = vweird.f32 %v2262
        %vm2291 = vweird.f32 %v2284
        %vm2292 = vmor %vm2290, %vm2291
        %v2293 = vsel %vm2292, %v2284, %v2289
        %v2294 = vrsqrt.pop %v2263
        %v2295 = vmul.f32 %v2294, %v2263
        %v2296 = vmul.f32 %v2295, %v2294
        %v2297 = vmul.f32 0.5, %v2296
        %v2298 = vsub.f32 1.5, %v2297
        %v2299 = vmul.f32 %v2294, %v2298
        %vm2300 = vweird.f32 %v2263
        %vm2301 = vweird.f32 %v2294
        %vm2302 = vmor %vm2300, %vm2301
        %v2303 = vsel %vm2302, %v2294, %v2299
        %v2304 = vmul.f32 %v2240, %v2273
        %v2305 = vmul.f32 %v2241, %v2283
        %v2306 = vmul.f32 %v2242, %v2293
        %v2307 = vmul.f32 %v2243, %v2303
        %v2308 = vperm.slane %v1065, 3
        %v2309 = vmul.f32 %v2304, %v2308
        %v2310 = vmul.f32 %v2305, %v2308
        %v2311 = vmul.f32 %v2306, %v2308
        %v2312 = vmul.f32 %v2307, %v2308
        %v2313 = vperm.slane %v1065, 4
        %v2314 = vadd.f32 %v2309, %v2313
        %v2315 = vadd.f32 %v2310, %v2313
        %v2316 = vadd.f32 %v2311, %v2313
        %v2317 = vadd.f32 %v2312, %v2313
        %v2318 = vld [vmem:[%s597] sm:$0xff]
        %v2319 = vld [vmem:[%s597 + $0x8] sm:$0xff]
        %v2320 = vld [vmem:[%s597 + $0x10] sm:$0xff]
        %v2321 = vld [vmem:[%s597 + $0x18] sm:$0xff]
        %v2322 = vld [vmem:[%s597 + $0x20] sm:$0xff]
        %v2323 = vld [vmem:[%s597 + $0x28] sm:$0xff]
        %v2324 = vld [vmem:[%s597 + $0x30] sm:$0xff]
        %v2325 = vld [vmem:[%s597 + $0x38] sm:$0xff]
        %v2326 = vld [vmem:[%s597 + $0x40] sm:$0xff]
        %v2327 = vld [vmem:[%s597 + $0x48] sm:$0xff]
        %v2328 = vld [vmem:[%s597 + $0x50] sm:$0xff]
        %v2329 = vld [vmem:[%s597 + $0x58] sm:$0xff]
        %v2330 = vld [vmem:[%s597 + $0x60] sm:$0xff]
        %v2331 = vld [vmem:[%s597 + $0x68] sm:$0xff]
        %v2332 = vld [vmem:[%s597 + $0x70] sm:$0xff]
        %v2333 = vld [vmem:[%s597 + $0x78] sm:$0xff]
        %v2334 = vld [vmem:[%s597 + $0x80] sm:$0xff]
        %v2335 = vld [vmem:[%s597 + $0x88] sm:$0xff]
        %v2336 = vld [vmem:[%s597 + $0x90] sm:$0xff]
        %v2337 = vld [vmem:[%s597 + $0x98] sm:$0xff]
        %v2338 = vld [vmem:[%s597 + $0xa0] sm:$0xff]
        %v2339 = vld [vmem:[%s597 + $0xa8] sm:$0xff]
        %v2340 = vld [vmem:[%s597 + $0xb0] sm:$0xff]
        %v2341 = vld [vmem:[%s597 + $0xb8] sm:$0xff]
        %v2342 = vld [vmem:[%s597 + $0xc0] sm:$0xff]
        %v2343 = vld [vmem:[%s597 + $0xc8] sm:$0xff]
        %v2344 = vld [vmem:[%s597 + $0xd0] sm:$0xff]
        %v2345 = vld [vmem:[%s597 + $0xd8] sm:$0xff]
        %v2346 = vld [vmem:[%s597 + $0xe0] sm:$0xff]
        %v2347 = vld [vmem:[%s597 + $0xe8] sm:$0xff]
        %v2348 = vld [vmem:[%s597 + $0xf0] sm:$0xff]
        %v2349 = vld [vmem:[%s597 + $0xf8] sm:$0xff]
        %v2350 = vperm.slane %v1065, 6
        %v2351 = vperm.slane %v1066, 6
        %2352 = vmatpush.msra.mxu0 %v2348
        %2353 = vmatpush.msra.mxu0 %v2346
        %2354 = vmatpush.msra.mxu0 %v2344
        %2355 = vmatpush.msra.mxu0 %v2342
        %2356 = vmatpush.msra.mxu0 %v2340
        %2357 = vmatpush.msra.mxu0 %v2338
        %2358 = vmatpush.msra.mxu0 %v2336
        %2359 = vmatpush.msra.mxu0 %v2334
        %2360 = vmatpush.msra.mxu0 %v2332
        %2361 = vmatpush.msra.mxu0 %v2330
        %2362 = vmatpush.msra.mxu0 %v2328
        %2363 = vmatpush.msra.mxu0 %v2326
        %2364 = vmatpush.msra.mxu0 %v2324
        %2365 = vmatpush.msra.mxu0 %v2322
        %2366 = vmatpush.msra.mxu0 %v2320
        %2367 = vmatpush.msra.mxu0 %v2318
        %2368 = vmatmul.f32.gmra.mxu0 %v2314
        %v2369 = vpop.f32.mrf.mxu0
        %v2370 = vadd.f32 %v2350, %v2369
        %2371 = vmatmul.f32.gmra.mxu0 %v2315
        %v2372 = vpop.f32.mrf.mxu0
        %v2373 = vadd.f32 %v2350, %v2372
        %2374 = vmatmul.f32.gmra.mxu0 %v2316
        %v2375 = vpop.f32.mrf.mxu0
        %v2376 = vadd.f32 %v2350, %v2375
        %2377 = vmatmul.f32.gmra.mxu0 %v2317
        %v2378 = vpop.f32.mrf.mxu0
        %v2379 = vadd.f32 %v2350, %v2378
        %2380 = vdwg.mxu0
        %2381 = vmatpush.msra.mxu0 %v2349
        %2382 = vmatpush.msra.mxu0 %v2347
        %2383 = vmatpush.msra.mxu0 %v2345
        %2384 = vmatpush.msra.mxu0 %v2343
        %2385 = vmatpush.msra.mxu0 %v2341
        %2386 = vmatpush.msra.mxu0 %v2339
        %2387 = vmatpush.msra.mxu0 %v2337
        %2388 = vmatpush.msra.mxu0 %v2335
        %2389 = vmatpush.msra.mxu0 %v2333
        %2390 = vmatpush.msra.mxu0 %v2331
        %2391 = vmatpush.msra.mxu0 %v2329
        %2392 = vmatpush.msra.mxu0 %v2327
        %2393 = vmatpush.msra.mxu0 %v2325
        %2394 = vmatpush.msra.mxu0 %v2323
        %2395 = vmatpush.msra.mxu0 %v2321
        %2396 = vmatpush.msra.mxu0 %v2319
        %2397 = vmatmul.f32.gmra.mxu0 %v2314
        %v2398 = vpop.f32.mrf.mxu0
        %v2399 = vadd.f32 %v2351, %v2398
        %2400 = vmatmul.f32.gmra.mxu0 %v2315
        %v2401 = vpop.f32.mrf.mxu0
        %v2402 = vadd.f32 %v2351, %v2401
        %2403 = vmatmul.f32.gmra.mxu0 %v2316
        %v2404 = vpop.f32.mrf.mxu0
        %v2405 = vadd.f32 %v2351, %v2404
        %2406 = vmatmul.f32.gmra.mxu0 %v2317
        %v2407 = vpop.f32.mrf.mxu0
        %v2408 = vadd.f32 %v2351, %v2407
        %2409 = vdwg.mxu0
        %v2410 = vmul.f32 %v2370, 0.5
        %v2411 = vmul.f32 %v2399, 0.5
        %v2412 = vmul.f32 %v2373, 0.5
        %v2413 = vmul.f32 %v2402, 0.5
        %v2414 = vmul.f32 %v2376, 0.5
        %v2415 = vmul.f32 %v2405, 0.5
        %v2416 = vmul.f32 %v2379, 0.5
        %v2417 = vmul.f32 %v2408, 0.5
        %v2418 = vmul.f32 %v2370, 0.70710677
        %v2419 = vmul.f32 %v2399, 0.70710677
        %v2420 = vmul.f32 %v2373, 0.70710677
        %v2421 = vmul.f32 %v2402, 0.70710677
        %v2422 = vmul.f32 %v2376, 0.70710677
        %v2423 = vmul.f32 %v2405, 0.70710677
        %v2424 = vmul.f32 %v2379, 0.70710677
        %v2425 = vmul.f32 %v2408, 0.70710677
        %v2426 = vmul.f32 %v2418, %v2418
        %v2427 = vmin.f32 16.0, %v2426
        %v2428 = vmul.f32 %v2427, 2.1237322e-06
        %v2429 = vadd.f32 %v2428, 0.00028619796
        %v2430 = vmul.f32 %v2427, %v2429
        %v2431 = vadd.f32 %v2430, 0.0036580483
        %v2432 = vmul.f32 %v2427, %v2431
        %v2433 = vadd.f32 %v2432, 0.05243302
        %v2434 = vmul.f32 %v2427, %v2433
        %v2435 = vadd.f32 %v2434, 0.18741608
        %v2436 = vmul.f32 %v2427, %v2435
        %v2437 = vadd.f32 %v2436, 1.1283791
        %v2438 = vmul.f32 %v2418, %v2437
        %v2439 = vmul.f32 %v2427, 3.8918573e-05
        %v2440 = vadd.f32 %v2439, 0.001143296
        %v2441 = vmul.f32 %v2427, %v2440
        %v2442 = vadd.f32 %v2441, 0.014752088
        %v2443 = vmul.f32 %v2427, %v2442
        %v2444 = vadd.f32 %v2443, 0.112945676
        %v2445 = vmul.f32 %v2427, %v2444
        %v2446 = vadd.f32 %v2445, 0.4994258
        %v2447 = vmul.f32 %v2427, %v2446
        %v2448 = vadd.f32 %v2447, 1.0
        %v2449 = vrcp.pop %v2448
        %v2450 = vmul.f32 %v2448, %v2449
        %v2451 = vsub.f32 1.0, %v2450
        %v2452 = vmul.f32 %v2449, %v2451
        %v2453 = vadd.f32 %v2449, %v2452
        %vm2454 = vweird.f32 %v2448
        %vm2455 = vweird.f32 %v2449
        %vm2456 = vmor %vm2454, %vm2455
        %v2457 = vsel %vm2456, %v2449, %v2453
        %v2458 = vand.u32 2147483647, %v2448
        %vm2459 = vcmp.eq.f32.partialorder %v2458, 8.507059e+37
        %v2460 = vand.u32 %v2448, 2147483648
        %v2461 = vor.u32 1.1754944e-38, %v2460
        %v2462 = vsel %vm2459, %v2461, %v2457
        %v2463 = vmul.f32 %v2438, %v2462
        %v2464 = vmin.f32 %v2463, 1.0
        %v2465 = vmax.f32 %v2464, -1.0
        %v2466 = vmul.f32 %v2419, %v2419
        %v2467 = vmin.f32 16.0, %v2466
        %v2468 = vmul.f32 %v2467, 2.1237322e-06
        %v2469 = vadd.f32 %v2468, 0.00028619796
        %v2470 = vmul.f32 %v2467, %v2469
        %v2471 = vadd.f32 %v2470, 0.0036580483
        %v2472 = vmul.f32 %v2467, %v2471
        %v2473 = vadd.f32 %v2472, 0.05243302
        %v2474 = vmul.f32 %v2467, %v2473
        %v2475 = vadd.f32 %v2474, 0.18741608
        %v2476 = vmul.f32 %v2467, %v2475
        %v2477 = vadd.f32 %v2476, 1.1283791
        %v2478 = vmul.f32 %v2419, %v2477
        %v2479 = vmul.f32 %v2467, 3.8918573e-05
        %v2480 = vadd.f32 %v2479, 0.001143296
        %v2481 = vmul.f32 %v2467, %v2480
        %v2482 = vadd.f32 %v2481, 0.014752088
        %v2483 = vmul.f32 %v2467, %v2482
        %v2484 = vadd.f32 %v2483, 0.112945676
        %v2485 = vmul.f32 %v2467, %v2484
        %v2486 = vadd.f32 %v2485, 0.4994258
        %v2487 = vmul.f32 %v2467, %v2486
        %v2488 = vadd.f32 %v2487, 1.0
        %v2489 = vrcp.pop %v2488
        %v2490 = vmul.f32 %v2488, %v2489
        %v2491 = vsub.f32 1.0, %v2490
        %v2492 = vmul.f32 %v2489, %v2491
        %v2493 = vadd.f32 %v2489, %v2492
        %vm2494 = vweird.f32 %v2488
        %vm2495 = vweird.f32 %v2489
        %vm2496 = vmor %vm2494, %vm2495
        %v2497 = vsel %vm2496, %v2489, %v2493
        %v2498 = vand.u32 2147483647, %v2488
        %vm2499 = vcmp.eq.f32.partialorder %v2498, 8.507059e+37
        %v2500 = vand.u32 %v2488, 2147483648
        %v2501 = vor.u32 1.1754944e-38, %v2500
        %v2502 = vsel %vm2499, %v2501, %v2497
        %v2503 = vmul.f32 %v2478, %v2502
        %v2504 = vmin.f32 %v2503, 1.0
        %v2505 = vmax.f32 %v2504, -1.0
        %v2506 = vmul.f32 %v2420, %v2420
        %v2507 = vmin.f32 16.0, %v2506
        %v2508 = vmul.f32 %v2507, 2.1237322e-06
        %v2509 = vadd.f32 %v2508, 0.00028619796
        %v2510 = vmul.f32 %v2507, %v2509
        %v2511 = vadd.f32 %v2510, 0.0036580483
        %v2512 = vmul.f32 %v2507, %v2511
        %v2513 = vadd.f32 %v2512, 0.05243302
        %v2514 = vmul.f32 %v2507, %v2513
        %v2515 = vadd.f32 %v2514, 0.18741608
        %v2516 = vmul.f32 %v2507, %v2515
        %v2517 = vadd.f32 %v2516, 1.1283791
        %v2518 = vmul.f32 %v2420, %v2517
        %v2519 = vmul.f32 %v2507, 3.8918573e-05
        %v2520 = vadd.f32 %v2519, 0.001143296
        %v2521 = vmul.f32 %v2507, %v2520
        %v2522 = vadd.f32 %v2521, 0.014752088
        %v2523 = vmul.f32 %v2507, %v2522
        %v2524 = vadd.f32 %v2523, 0.112945676
        %v2525 = vmul.f32 %v2507, %v2524
        %v2526 = vadd.f32 %v2525, 0.4994258
        %v2527 = vmul.f32 %v2507, %v2526
        %v2528 = vadd.f32 %v2527, 1.0
        %v2529 = vrcp.pop %v2528
        %v2530 = vmul.f32 %v2528, %v2529
        %v2531 = vsub.f32 1.0, %v2530
        %v2532 = vmul.f32 %v2529, %v2531
        %v2533 = vadd.f32 %v2529, %v2532
        %vm2534 = vweird.f32 %v2528
        %vm2535 = vweird.f32 %v2529
        %vm2536 = vmor %vm2534, %vm2535
        %v2537 = vsel %vm2536, %v2529, %v2533
        %v2538 = vand.u32 2147483647, %v2528
        %vm2539 = vcmp.eq.f32.partialorder %v2538, 8.507059e+37
        %v2540 = vand.u32 %v2528, 2147483648
        %v2541 = vor.u32 1.1754944e-38, %v2540
        %v2542 = vsel %vm2539, %v2541, %v2537
        %v2543 = vmul.f32 %v2518, %v2542
        %v2544 = vmin.f32 %v2543, 1.0
        %v2545 = vmax.f32 %v2544, -1.0
        %v2546 = vmul.f32 %v2421, %v2421
        %v2547 = vmin.f32 16.0, %v2546
        %v2548 = vmul.f32 %v2547, 2.1237322e-06
        %v2549 = vadd.f32 %v2548, 0.00028619796
        %v2550 = vmul.f32 %v2547, %v2549
        %v2551 = vadd.f32 %v2550, 0.0036580483
        %v2552 = vmul.f32 %v2547, %v2551
        %v2553 = vadd.f32 %v2552, 0.05243302
        %v2554 = vmul.f32 %v2547, %v2553
        %v2555 = vadd.f32 %v2554, 0.18741608
        %v2556 = vmul.f32 %v2547, %v2555
        %v2557 = vadd.f32 %v2556, 1.1283791
        %v2558 = vmul.f32 %v2421, %v2557
        %v2559 = vmul.f32 %v2547, 3.8918573e-05
        %v2560 = vadd.f32 %v2559, 0.001143296
        %v2561 = vmul.f32 %v2547, %v2560
        %v2562 = vadd.f32 %v2561, 0.014752088
        %v2563 = vmul.f32 %v2547, %v2562
        %v2564 = vadd.f32 %v2563, 0.112945676
        %v2565 = vmul.f32 %v2547, %v2564
        %v2566 = vadd.f32 %v2565, 0.4994258
        %v2567 = vmul.f32 %v2547, %v2566
        %v2568 = vadd.f32 %v2567, 1.0
        %v2569 = vrcp.pop %v2568
        %v2570 = vmul.f32 %v2568, %v2569
        %v2571 = vsub.f32 1.0, %v2570
        %v2572 = vmul.f32 %v2569, %v2571
        %v2573 = vadd.f32 %v2569, %v2572
        %vm2574 = vweird.f32 %v2568
        %vm2575 = vweird.f32 %v2569
        %vm2576 = vmor %vm2574, %vm2575
        %v2577 = vsel %vm2576, %v2569, %v2573
        %v2578 = vand.u32 2147483647, %v2568
        %vm2579 = vcmp.eq.f32.partialorder %v2578, 8.507059e+37
        %v2580 = vand.u32 %v2568, 2147483648
        %v2581 = vor.u32 1.1754944e-38, %v2580
        %v2582 = vsel %vm2579, %v2581, %v2577
        %v2583 = vmul.f32 %v2558, %v2582
        %v2584 = vmin.f32 %v2583, 1.0
        %v2585 = vmax.f32 %v2584, -1.0
        %v2586 = vmul.f32 %v2422, %v2422
        %v2587 = vmin.f32 16.0, %v2586
        %v2588 = vmul.f32 %v2587, 2.1237322e-06
        %v2589 = vadd.f32 %v2588, 0.00028619796
        %v2590 = vmul.f32 %v2587, %v2589
        %v2591 = vadd.f32 %v2590, 0.0036580483
        %v2592 = vmul.f32 %v2587, %v2591
        %v2593 = vadd.f32 %v2592, 0.05243302
        %v2594 = vmul.f32 %v2587, %v2593
        %v2595 = vadd.f32 %v2594, 0.18741608
        %v2596 = vmul.f32 %v2587, %v2595
        %v2597 = vadd.f32 %v2596, 1.1283791
        %v2598 = vmul.f32 %v2422, %v2597
        %v2599 = vmul.f32 %v2587, 3.8918573e-05
        %v2600 = vadd.f32 %v2599, 0.001143296
        %v2601 = vmul.f32 %v2587, %v2600
        %v2602 = vadd.f32 %v2601, 0.014752088
        %v2603 = vmul.f32 %v2587, %v2602
        %v2604 = vadd.f32 %v2603, 0.112945676
        %v2605 = vmul.f32 %v2587, %v2604
        %v2606 = vadd.f32 %v2605, 0.4994258
        %v2607 = vmul.f32 %v2587, %v2606
        %v2608 = vadd.f32 %v2607, 1.0
        %v2609 = vrcp.pop %v2608
        %v2610 = vmul.f32 %v2608, %v2609
        %v2611 = vsub.f32 1.0, %v2610
        %v2612 = vmul.f32 %v2609, %v2611
        %v2613 = vadd.f32 %v2609, %v2612
        %vm2614 = vweird.f32 %v2608
        %vm2615 = vweird.f32 %v2609
        %vm2616 = vmor %vm2614, %vm2615
        %v2617 = vsel %vm2616, %v2609, %v2613
        %v2618 = vand.u32 2147483647, %v2608
        %vm2619 = vcmp.eq.f32.partialorder %v2618, 8.507059e+37
        %v2620 = vand.u32 %v2608, 2147483648
        %v2621 = vor.u32 1.1754944e-38, %v2620
        %v2622 = vsel %vm2619, %v2621, %v2617
        %v2623 = vmul.f32 %v2598, %v2622
        %v2624 = vmin.f32 %v2623, 1.0
        %v2625 = vmax.f32 %v2624, -1.0
        %v2626 = vmul.f32 %v2423, %v2423
        %v2627 = vmin.f32 16.0, %v2626
        %v2628 = vmul.f32 %v2627, 2.1237322e-06
        %v2629 = vadd.f32 %v2628, 0.00028619796
        %v2630 = vmul.f32 %v2627, %v2629
        %v2631 = vadd.f32 %v2630, 0.0036580483
        %v2632 = vmul.f32 %v2627, %v2631
        %v2633 = vadd.f32 %v2632, 0.05243302
        %v2634 = vmul.f32 %v2627, %v2633
        %v2635 = vadd.f32 %v2634, 0.18741608
        %v2636 = vmul.f32 %v2627, %v2635
        %v2637 = vadd.f32 %v2636, 1.1283791
        %v2638 = vmul.f32 %v2423, %v2637
        %v2639 = vmul.f32 %v2627, 3.8918573e-05
        %v2640 = vadd.f32 %v2639, 0.001143296
        %v2641 = vmul.f32 %v2627, %v2640
        %v2642 = vadd.f32 %v2641, 0.014752088
        %v2643 = vmul.f32 %v2627, %v2642
        %v2644 = vadd.f32 %v2643, 0.112945676
        %v2645 = vmul.f32 %v2627, %v2644
        %v2646 = vadd.f32 %v2645, 0.4994258
        %v2647 = vmul.f32 %v2627, %v2646
        %v2648 = vadd.f32 %v2647, 1.0
        %v2649 = vrcp.pop %v2648
        %v2650 = vmul.f32 %v2648, %v2649
        %v2651 = vsub.f32 1.0, %v2650
        %v2652 = vmul.f32 %v2649, %v2651
        %v2653 = vadd.f32 %v2649, %v2652
        %vm2654 = vweird.f32 %v2648
        %vm2655 = vweird.f32 %v2649
        %vm2656 = vmor %vm2654, %vm2655
        %v2657 = vsel %vm2656, %v2649, %v2653
        %v2658 = vand.u32 2147483647, %v2648
        %vm2659 = vcmp.eq.f32.partialorder %v2658, 8.507059e+37
        %v2660 = vand.u32 %v2648, 2147483648
        %v2661 = vor.u32 1.1754944e-38, %v2660
        %v2662 = vsel %vm2659, %v2661, %v2657
        %v2663 = vmul.f32 %v2638, %v2662
        %v2664 = vmin.f32 %v2663, 1.0
        %v2665 = vmax.f32 %v2664, -1.0
        %v2666 = vmul.f32 %v2424, %v2424
        %v2667 = vmin.f32 16.0, %v2666
        %v2668 = vmul.f32 %v2667, 2.1237322e-06
        %v2669 = vadd.f32 %v2668, 0.00028619796
        %v2670 = vmul.f32 %v2667, %v2669
        %v2671 = vadd.f32 %v2670, 0.0036580483
        %v2672 = vmul.f32 %v2667, %v2671
        %v2673 = vadd.f32 %v2672, 0.05243302
        %v2674 = vmul.f32 %v2667, %v2673
        %v2675 = vadd.f32 %v2674, 0.18741608
        %v2676 = vmul.f32 %v2667, %v2675
        %v2677 = vadd.f32 %v2676, 1.1283791
        %v2678 = vmul.f32 %v2424, %v2677
        %v2679 = vmul.f32 %v2667, 3.8918573e-05
        %v2680 = vadd.f32 %v2679, 0.001143296
        %v2681 = vmul.f32 %v2667, %v2680
        %v2682 = vadd.f32 %v2681, 0.014752088
        %v2683 = vmul.f32 %v2667, %v2682
        %v2684 = vadd.f32 %v2683, 0.112945676
        %v2685 = vmul.f32 %v2667, %v2684
        %v2686 = vadd.f32 %v2685, 0.4994258
        %v2687 = vmul.f32 %v2667, %v2686
        %v2688 = vadd.f32 %v2687, 1.0
        %v2689 = vrcp.pop %v2688
        %v2690 = vmul.f32 %v2688, %v2689
        %v2691 = vsub.f32 1.0, %v2690
        %v2692 = vmul.f32 %v2689, %v2691
        %v2693 = vadd.f32 %v2689, %v2692
        %vm2694 = vweird.f32 %v2688
        %vm2695 = vweird.f32 %v2689
        %vm2696 = vmor %vm2694, %vm2695
        %v2697 = vsel %vm2696, %v2689, %v2693
        %v2698 = vand.u32 2147483647, %v2688
        %vm2699 = vcmp.eq.f32.partialorder %v2698, 8.507059e+37
        %v2700 = vand.u32 %v2688, 2147483648
        %v2701 = vor.u32 1.1754944e-38, %v2700
        %v2702 = vsel %vm2699, %v2701, %v2697
        %v2703 = vmul.f32 %v2678, %v2702
        %v2704 = vmin.f32 %v2703, 1.0
        %v2705 = vmax.f32 %v2704, -1.0
        %v2706 = vmul.f32 %v2425, %v2425
        %v2707 = vmin.f32 16.0, %v2706
        %v2708 = vmul.f32 %v2707, 2.1237322e-06
        %v2709 = vadd.f32 %v2708, 0.00028619796
        %v2710 = vmul.f32 %v2707, %v2709
        %v2711 = vadd.f32 %v2710, 0.0036580483
        %v2712 = vmul.f32 %v2707, %v2711
        %v2713 = vadd.f32 %v2712, 0.05243302
        %v2714 = vmul.f32 %v2707, %v2713
        %v2715 = vadd.f32 %v2714, 0.18741608
        %v2716 = vmul.f32 %v2707, %v2715
        %v2717 = vadd.f32 %v2716, 1.1283791
        %v2718 = vmul.f32 %v2425, %v2717
        %v2719 = vmul.f32 %v2707, 3.8918573e-05
        %v2720 = vadd.f32 %v2719, 0.001143296
        %v2721 = vmul.f32 %v2707, %v2720
        %v2722 = vadd.f32 %v2721, 0.014752088
        %v2723 = vmul.f32 %v2707, %v2722
        %v2724 = vadd.f32 %v2723, 0.112945676
        %v2725 = vmul.f32 %v2707, %v2724
        %v2726 = vadd.f32 %v2725, 0.4994258
        %v2727 = vmul.f32 %v2707, %v2726
        %v2728 = vadd.f32 %v2727, 1.0
        %v2729 = vrcp.pop %v2728
        %v2730 = vmul.f32 %v2728, %v2729
        %v2731 = vsub.f32 1.0, %v2730
        %v2732 = vmul.f32 %v2729, %v2731
        %v2733 = vadd.f32 %v2729, %v2732
        %vm2734 = vweird.f32 %v2728
        %vm2735 = vweird.f32 %v2729
        %vm2736 = vmor %vm2734, %vm2735
        %v2737 = vsel %vm2736, %v2729, %v2733
        %v2738 = vand.u32 2147483647, %v2728
        %vm2739 = vcmp.eq.f32.partialorder %v2738, 8.507059e+37
        %v2740 = vand.u32 %v2728, 2147483648
        %v2741 = vor.u32 1.1754944e-38, %v2740
        %v2742 = vsel %vm2739, %v2741, %v2737
        %v2743 = vmul.f32 %v2718, %v2742
        %v2744 = vmin.f32 %v2743, 1.0
        %v2745 = vmax.f32 %v2744, -1.0
        %v2746 = vadd.f32 %v2465, 1.0
        %v2747 = vadd.f32 %v2505, 1.0
        %v2748 = vadd.f32 %v2545, 1.0
        %v2749 = vadd.f32 %v2585, 1.0
        %v2750 = vadd.f32 %v2625, 1.0
        %v2751 = vadd.f32 %v2665, 1.0
        %v2752 = vadd.f32 %v2705, 1.0
        %v2753 = vadd.f32 %v2745, 1.0
        %v2754 = vmul.f32 %v2410, %v2746
        %v2755 = vmul.f32 %v2411, %v2747
        %v2756 = vmul.f32 %v2412, %v2748
        %v2757 = vmul.f32 %v2413, %v2749
        %v2758 = vmul.f32 %v2414, %v2750
        %v2759 = vmul.f32 %v2415, %v2751
        %v2760 = vmul.f32 %v2416, %v2752
        %v2761 = vmul.f32 %v2417, %v2753
        %v2762 = vld [vmem:[%s607] sm:$0xff]
        %v2763 = vld [vmem:[%s607 + $0x8] sm:$0xff]
        %v2764 = vld [vmem:[%s607 + $0x10] sm:$0xff]
        %v2765 = vld [vmem:[%s607 + $0x18] sm:$0xff]
        %v2766 = vld [vmem:[%s607 + $0x20] sm:$0xff]
        %v2767 = vld [vmem:[%s607 + $0x28] sm:$0xff]
        %v2768 = vld [vmem:[%s607 + $0x30] sm:$0xff]
        %v2769 = vld [vmem:[%s607 + $0x38] sm:$0xff]
        %v2770 = vld [vmem:[%s607 + $0x40] sm:$0xff]
        %v2771 = vld [vmem:[%s607 + $0x48] sm:$0xff]
        %v2772 = vld [vmem:[%s607 + $0x50] sm:$0xff]
        %v2773 = vld [vmem:[%s607 + $0x58] sm:$0xff]
        %v2774 = vld [vmem:[%s607 + $0x60] sm:$0xff]
        %v2775 = vld [vmem:[%s607 + $0x68] sm:$0xff]
        %v2776 = vld [vmem:[%s607 + $0x70] sm:$0xff]
        %v2777 = vld [vmem:[%s607 + $0x78] sm:$0xff]
        %v2778 = vld [vmem:[%s607 + $0x80] sm:$0xff]
        %v2779 = vld [vmem:[%s607 + $0x88] sm:$0xff]
        %v2780 = vld [vmem:[%s607 + $0x90] sm:$0xff]
        %v2781 = vld [vmem:[%s607 + $0x98] sm:$0xff]
        %v2782 = vld [vmem:[%s607 + $0xa0] sm:$0xff]
        %v2783 = vld [vmem:[%s607 + $0xa8] sm:$0xff]
        %v2784 = vld [vmem:[%s607 + $0xb0] sm:$0xff]
        %v2785 = vld [vmem:[%s607 + $0xb8] sm:$0xff]
        %v2786 = vld [vmem:[%s607 + $0xc0] sm:$0xff]
        %v2787 = vld [vmem:[%s607 + $0xc8] sm:$0xff]
        %v2788 = vld [vmem:[%s607 + $0xd0] sm:$0xff]
        %v2789 = vld [vmem:[%s607 + $0xd8] sm:$0xff]
        %v2790 = vld [vmem:[%s607 + $0xe0] sm:$0xff]
        %v2791 = vld [vmem:[%s607 + $0xe8] sm:$0xff]
        %v2792 = vld [vmem:[%s607 + $0xf0] sm:$0xff]
        %v2793 = vld [vmem:[%s607 + $0xf8] sm:$0xff]
        %v2794 = vperm.slane %v1065, 5
        %2795 = vmatpush.msra.mxu0 %v2777
        %2796 = vmatpush.msra.mxu0 %v2776
        %2797 = vmatpush.msra.mxu0 %v2775
        %2798 = vmatpush.msra.mxu0 %v2774
        %2799 = vmatpush.msra.mxu0 %v2773
        %2800 = vmatpush.msra.mxu0 %v2772
        %2801 = vmatpush.msra.mxu0 %v2771
        %2802 = vmatpush.msra.mxu0 %v2770
        %2803 = vmatpush.msra.mxu0 %v2769
        %2804 = vmatpush.msra.mxu0 %v2768
        %2805 = vmatpush.msra.mxu0 %v2767
        %2806 = vmatpush.msra.mxu0 %v2766
        %2807 = vmatpush.msra.mxu0 %v2765
        %2808 = vmatpush.msra.mxu0 %v2764
        %2809 = vmatpush.msra.mxu0 %v2763
        %2810 = vmatpush.msra.mxu0 %v2762
        %2811 = vmatmul.f32.gmra.mxu0 %v2754
        %v2812 = vpop.f32.mrf.mxu0
        %v2813 = vadd.f32 %v2794, %v2812
        %2814 = vmatmul.f32.gmra.mxu0 %v2756
        %v2815 = vpop.f32.mrf.mxu0
        %v2816 = vadd.f32 %v2794, %v2815
        %2817 = vmatmul.f32.gmra.mxu0 %v2758
        %v2818 = vpop.f32.mrf.mxu0
        %v2819 = vadd.f32 %v2794, %v2818
        %2820 = vmatmul.f32.gmra.mxu0 %v2760
        %v2821 = vpop.f32.mrf.mxu0
        %v2822 = vadd.f32 %v2794, %v2821
        %2823 = vdwg.mxu0
        %2824 = vmatpush.msra.mxu0 %v2793
        %2825 = vmatpush.msra.mxu0 %v2792
        %2826 = vmatpush.msra.mxu0 %v2791
        %2827 = vmatpush.msra.mxu0 %v2790
        %2828 = vmatpush.msra.mxu0 %v2789
        %2829 = vmatpush.msra.mxu0 %v2788
        %2830 = vmatpush.msra.mxu0 %v2787
        %2831 = vmatpush.msra.mxu0 %v2786
        %2832 = vmatpush.msra.mxu0 %v2785
        %2833 = vmatpush.msra.mxu0 %v2784
        %2834 = vmatpush.msra.mxu0 %v2783
        %2835 = vmatpush.msra.mxu0 %v2782
        %2836 = vmatpush.msra.mxu0 %v2781
        %2837 = vmatpush.msra.mxu0 %v2780
        %2838 = vmatpush.msra.mxu0 %v2779
        %2839 = vmatpush.msra.mxu0 %v2778
        %2840 = vmatmul.f32.gmra.mxu0 %v2755
        %v2841 = vpop.f32.mrf.mxu0
        %v2842 = vadd.f32 %v2813, %v2841
        %2843 = vmatmul.f32.gmra.mxu0 %v2757
        %v2844 = vpop.f32.mrf.mxu0
        %v2845 = vadd.f32 %v2816, %v2844
        %2846 = vmatmul.f32.gmra.mxu0 %v2759
        %v2847 = vpop.f32.mrf.mxu0
        %v2848 = vadd.f32 %v2819, %v2847
        %2849 = vmatmul.f32.gmra.mxu0 %v2761
        %v2850 = vpop.f32.mrf.mxu0
        %v2851 = vadd.f32 %v2822, %v2850
        %2852 = vdwg.mxu0
        %v2853 = vadd.f32 %v2216, %v2842
        %v2854 = vadd.f32 %v2217, %v2845
        %v2855 = vadd.f32 %v2218, %v2848
        %v2856 = vadd.f32 %v2219, %v2851
        %2857 = vst [vmem:[#allocation2] sm:$0xff] %v2853
        %2858 = vst [vmem:[#allocation2 + $0x8] sm:$0xff] %v2854
        %2859 = vst [vmem:[#allocation2 + $0x10] sm:$0xff] %v2855
        %2860 = vst [vmem:[#allocation2 + $0x18] sm:$0xff] %v2856
        %p2861 = scmp.eq.s32.totalorder %s29, 1
        // Predicated region
        $region117: #{tpu_custom_call.1} parent=71 // pred_check
          %p2862 = pneg %p2861
        $region118: #{tpu_custom_call.1} parent=71 // pred_check_branch
          %2864 = sbr.rel (%p2862) target = $region120
        $region119: #{tpu_custom_call.1} parent=71 // pred_region
          %v2865 = vsel %vm1072, %v2853, 0.0
          %v2866 = vsel %vm1072, %v2854, 0.0
          %v2867 = vsel %vm1072, %v2855, 0.0
          %v2868 = vsel %vm1072, %v2856, 0.0
          %2869 = vadd.xlane.f32.xlu0 %v2865
          %v2870 = vpop.xlane.xlu0 %2869
          %2871 = vadd.xlane.f32.xlu0 %v2866
          %v2872 = vpop.xlane.xlu0 %2871
          %2873 = vadd.xlane.f32.xlu0 %v2867
          %v2874 = vpop.xlane.xlu0 %2873
          %2875 = vadd.xlane.f32.xlu0 %v2868
          %v2876 = vpop.xlane.xlu0 %2875
          %v2877 = vmul.f32 %v2870, 0.020833334
          %v2878 = vmul.f32 %v2872, 0.020833334
          %v2879 = vmul.f32 %v2874, 0.020833334
          %v2880 = vmul.f32 %v2876, 0.020833334
          %v2881 = vsub.f32 %v2853, %v2877
          %v2882 = vsub.f32 %v2854, %v2878
          %v2883 = vsub.f32 %v2855, %v2879
          %v2884 = vsub.f32 %v2856, %v2880
          %v2885 = vsel %vm1072, %v2881, 0.0
          %v2886 = vsel %vm1072, %v2882, 0.0
          %v2887 = vsel %vm1072, %v2883, 0.0
          %v2888 = vsel %vm1072, %v2884, 0.0
          %v2889 = vmul.f32 %v2885, %v2885
          %v2890 = vmul.f32 %v2886, %v2886
          %v2891 = vmul.f32 %v2887, %v2887
          %v2892 = vmul.f32 %v2888, %v2888
          %2893 = vadd.xlane.f32.xlu0 %v2889
          %v2894 = vpop.xlane.xlu0 %2893
          %2895 = vadd.xlane.f32.xlu0 %v2890
          %v2896 = vpop.xlane.xlu0 %2895
          %2897 = vadd.xlane.f32.xlu0 %v2891
          %v2898 = vpop.xlane.xlu0 %2897
          %2899 = vadd.xlane.f32.xlu0 %v2892
          %v2900 = vpop.xlane.xlu0 %2899
          %v2901 = vmul.f32 %v2894, 0.020833334
          %v2902 = vmul.f32 %v2896, 0.020833334
          %v2903 = vmul.f32 %v2898, 0.020833334
          %v2904 = vmul.f32 %v2900, 0.020833334
          %v2905 = vadd.f32 %v2901, 1e-05
          %v2906 = vadd.f32 %v2902, 1e-05
          %v2907 = vadd.f32 %v2903, 1e-05
          %v2908 = vadd.f32 %v2904, 1e-05
          %v2909 = vrsqrt.pop %v2905
          %v2910 = vmul.f32 %v2909, %v2905
          %v2911 = vmul.f32 %v2910, %v2909
          %v2912 = vmul.f32 0.5, %v2911
          %v2913 = vsub.f32 1.5, %v2912
          %v2914 = vmul.f32 %v2909, %v2913
          %vm2915 = vweird.f32 %v2905
          %vm2916 = vweird.f32 %v2909
          %vm2917 = vmor %vm2915, %vm2916
          %v2918 = vsel %vm2917, %v2909, %v2914
          %v2919 = vrsqrt.pop %v2906
          %v2920 = vmul.f32 %v2919, %v2906
          %v2921 = vmul.f32 %v2920, %v2919
          %v2922 = vmul.f32 0.5, %v2921
          %v2923 = vsub.f32 1.5, %v2922
          %v2924 = vmul.f32 %v2919, %v2923
          %vm2925 = vweird.f32 %v2906
          %vm2926 = vweird.f32 %v2919
          %vm2927 = vmor %vm2925, %vm2926
          %v2928 = vsel %vm2927, %v2919, %v2924
          %v2929 = vrsqrt.pop %v2907
          %v2930 = vmul.f32 %v2929, %v2907
          %v2931 = vmul.f32 %v2930, %v2929
          %v2932 = vmul.f32 0.5, %v2931
          %v2933 = vsub.f32 1.5, %v2932
          %v2934 = vmul.f32 %v2929, %v2933
          %vm2935 = vweird.f32 %v2907
          %vm2936 = vweird.f32 %v2929
          %vm2937 = vmor %vm2935, %vm2936
          %v2938 = vsel %vm2937, %v2929, %v2934
          %v2939 = vrsqrt.pop %v2908
          %v2940 = vmul.f32 %v2939, %v2908
          %v2941 = vmul.f32 %v2940, %v2939
          %v2942 = vmul.f32 0.5, %v2941
          %v2943 = vsub.f32 1.5, %v2942
          %v2944 = vmul.f32 %v2939, %v2943
          %vm2945 = vweird.f32 %v2908
          %vm2946 = vweird.f32 %v2939
          %vm2947 = vmor %vm2945, %vm2946
          %v2948 = vsel %vm2947, %v2939, %v2944
          %v2949 = vmul.f32 %v2885, %v2918
          %v2950 = vmul.f32 %v2886, %v2928
          %v2951 = vmul.f32 %v2887, %v2938
          %v2952 = vmul.f32 %v2888, %v2948
          %v2953 = vperm.slane %v684, 4
          %v2954 = vmul.f32 %v2949, %v2953
          %v2955 = vmul.f32 %v2950, %v2953
          %v2956 = vmul.f32 %v2951, %v2953
          %v2957 = vmul.f32 %v2952, %v2953
          %v2958 = vperm.slane %v684, 5
          %v2959 = vadd.f32 %v2954, %v2958
          %v2960 = vadd.f32 %v2955, %v2958
          %v2961 = vadd.f32 %v2956, %v2958
          %v2962 = vadd.f32 %v2957, %v2958
          %2963 = vst [vmem:[#allocation18] sm:$0xff] %v2959
          %2964 = vst [vmem:[#allocation18 + $0x8] sm:$0xff] %v2960
          %2965 = vst [vmem:[#allocation18 + $0x10] sm:$0xff] %v2961
          %2966 = vst [vmem:[#allocation18 + $0x18] sm:$0xff] %v2962
        $region120: #{tpu_custom_call.1} parent=71 // pred_fallthru
          _
        // Predicated region
        $region121: #{tpu_custom_call.1} parent=71 // pred_check
          %p2967 = pneg %p340
        $region122: #{tpu_custom_call.1} parent=71 // pred_check_branch
          %2969 = sbr.rel (%p2967) target = $region124
        $region123: #{tpu_custom_call.1} parent=71 // pred_region
          %2971 = vsyncadd [#allocation5], 0
          %s2972 = sshll.u32 [#allocation18], 4
          %s2973 = int_to_ptr.vmem [resolvable:$true] %s2972
          %s2974 = sshll.u32 %s13, 4
          %s2975 = int_to_ptr.hbm [resolvable:$true] %s2974
          %2980 = dma.vmem_to_hbm [thread:$0]  %s2973, 512, %s2975, [#allocation5], 128, 128, 8
        $region124: #{tpu_custom_call.1} parent=71 // pred_fallthru
          _
        // Predicated region
        $region125: #{tpu_custom_call.1} parent=71 // pred_check
          %p2981 = pneg %p340
        $region126: #{tpu_custom_call.1} parent=71 // pred_check_branch
          %2983 = sbr.rel (%p2981) target = $region128
        $region127: #{tpu_custom_call.1} parent=71 // pred_region
          %2985 = dma.done [#allocation5], 512
        $region128: #{tpu_custom_call.1} parent=71 // pred_fallthru
          _
      $region72: #{tpu_custom_call.1} parent=5 // pred_fallthru
        _
      %p2986 = scmp.le.s32.totalorder 2, %s24
      // Predicated region
      $region129: #{tpu_custom_call.1} parent=5 // pred_check
        %p2987 = pneg %p2986
      $region130: #{tpu_custom_call.1} parent=5 // pred_check_branch
        %2989 = sbr.rel (%p2987) target = $region132
      $region131: #{tpu_custom_call.1} parent=5 // pred_region
        %s2990 = ssub.s32 %s24, 2
      $region132: #{tpu_custom_call.1} parent=5 // pred_fallthru
        _
    $region6: #{tpu_custom_call.1} parent=1 // loop_footer
      %s28 = sadd.s32 1, %s24
    $region7: #{tpu_custom_call.1} parent=1 // loop_footer_branch
      %23 = sbr.rel target = $region3
    $region8: #{tpu_custom_call.1} parent=1 // loop_exit
      _
    %2991 = vsyncpa [#allocation4], 1
    %s2992 = scalar_lea.sflag [#allocation4], 1
    %2993 = vsyncpa %s2992, 1
    %2994 = vsyncpa [#allocation7], 1
    %2995 = vsyncpa [#allocation10], 1
    %2996 = vsyncpa [#allocation13], 1
    %2997 = vsyncpa [#allocation5], 1
    %s2998 = scalar_lea.sflag [#allocation5], 1
    %2999 = vsyncpa %s2998, 1

</llo_original>
